<compile_context>
chip_gen: v7x
topology: tpu7x:2x2x1
jax: 0.10.0
libtpu: 0.0.40
codegen_flags: <defaults>
</compile_context>

<pallas_src>
import jax
import jax.numpy as jnp
from jax import lax
from jax.experimental import pallas as pl
from jax.experimental.pallas import tpu as pltpu


# ----------------------------- Pallas kernel -------------------------------------------
def _autoenc_kernel(x_ref,
                    wih_e1, whh_e1, b_e1,
                    wih_e2, whh_e2, b_e2,
                    wih_d1, whh_d1, b_d1,
                    wih_d2, whh_d2, b_d2,
                    w_out, b_out,
                    out_ref):
    T = out_ref.shape[0]

    def cell(gx, h, c, whh):
        # gx already contains x_t @ W_ih + (b_ih + b_hh)   (hoisted out of the loop).
        # Recurrent matmul in bf16 (single MXU pass), accumulate + gate math in f32.
        H = whh.shape[1] // 4
        gates = gx + jnp.dot(h.astype(jnp.bfloat16), whh,
                             preferred_element_type=jnp.float32)      # (1, 4H) f32
        sig = jax.nn.sigmoid(gates)              # one EUP dispatch over the full 4H width
        i = sig[:, 0:H]
        f = sig[:, H:2 * H]
        o = sig[:, 3 * H:4 * H]
        g = jnp.tanh(gates[:, 2 * H:3 * H])      # second EUP dispatch
        c_new = f * c + i * g
        h_new = o * jnp.tanh(c_new)              # third EUP dispatch
        return h_new, c_new

    # ---- Encoder LSTM 1 (n_features=1 -> 2E): input projection + bias hoisted. ----
    He1 = whh_e1.shape[0]
    W_e1 = whh_e1[...]                                     # bf16 (He1, 4He1), loaded once
    gx_e1 = x_ref[...] * wih_e1[...] + b_e1[...]           # (T,1)*(1,4He1)+(1,4He1) -> (T,4He1)
    h = jnp.zeros((1, He1), jnp.float32)
    c = h
    hs = []
    for t in range(T):                                     # fully unrolled, static slices
        h, c = cell(gx_e1[t:t + 1, :], h, c, W_e1)
        hs.append(h)
    seq_e1 = jnp.concatenate(hs, axis=0)                   # (T, 2E) register-resident

    # ---- Encoder LSTM 2 (2E -> E): one batched (T,2E)@(2E,4E) input projection. ----
    E = whh_e2.shape[0]
    W_e2 = whh_e2[...]                                     # bf16 (E, 4E)
    gx_e2 = (jnp.dot(seq_e1, wih_e2[...], preferred_element_type=jnp.float32)
             + b_e2[...])                                  # (T, 4E) f32
    h = jnp.zeros((1, E), jnp.float32)
    c = h
    for t in range(T):
        h, c = cell(gx_e2[t:t + 1, :], h, c, W_e2)
    latent = h                                             # (1, E) final hidden = embedding

    # ---- Decoder LSTM 1 (E -> E): latent repeated -> gx is a single constant row. ----
    W_d1 = whh_d1[...]                                     # bf16 (E, 4E)
    gx_d1 = (jnp.dot(latent, wih_d1[...], preferred_element_type=jnp.float32)
             + b_d1[...])                                  # (1, 4E)
    h = jnp.zeros((1, E), jnp.float32)
    c = h
    hs = []
    for t in range(T):
        h, c = cell(gx_d1, h, c, W_d1)
        hs.append(h)
    seq_d1 = jnp.concatenate(hs, axis=0)                   # (T, E) register-resident

    # ---- Decoder LSTM 2 (E -> 2E): one batched (T,E)@(E,4*2E) input projection. ----
    Hd = whh_d2.shape[0]
    W_d2 = whh_d2[...]                                     # bf16 (Hd, 4Hd)
    gx_d2 = (jnp.dot(seq_d1, wih_d2[...], preferred_element_type=jnp.float32)
             + b_d2[...])                                  # (T, 4Hd)
    h = jnp.zeros((1, Hd), jnp.float32)
    c = h
    hs = []
    for t in range(T):
        h, c = cell(gx_d2[t:t + 1, :], h, c, W_d2)
        hs.append(h)
    seq_d2 = jnp.concatenate(hs, axis=0)                   # (T, Hd) register-resident

    # ---- Output Linear(2E -> 1): VPU multiply + cross-lane reduce (no N=1 MXU matmul). ----
    out_ref[...] = (jnp.sum(seq_d2 * w_out[...], axis=-1, keepdims=True)
                    + b_out[...])                          # (T,1)


# ----------------------------- Wrapper --------------------------------------------------
def recurrent_autoencoder(x, params):
    T, n_feat = x.shape
    assert n_feat == 1, "PyTorch forward only makes sense for n_features == 1"

    bf16 = jnp.bfloat16
    flat = [
        # whh_* in bf16 (recurrent matmul operand); everything else stays f32.
        params["wih_e1"], params["whh_e1"].astype(bf16), params["b_e1"][None, :],
        params["wih_e2"], params["whh_e2"].astype(bf16), params["b_e2"][None, :],
        params["wih_d1"], params["whh_d1"].astype(bf16), params["b_d1"][None, :],
        params["wih_d2"], params["whh_d2"].astype(bf16), params["b_d2"][None, :],
        params["w_out"],                   # (1, Hd) row, used as broadcast multiplier
        params["b_out"][None, :],          # (1, 1)
    ]
    x2 = x.astype(jnp.float32)             # (T, 1)

    vspec = pl.BlockSpec(memory_space=pltpu.MemorySpace.VMEM)
    out = pl.pallas_call(
        _autoenc_kernel,
        out_shape=jax.ShapeDtypeStruct((T, n_feat), jnp.float32),
        in_specs=[vspec] * (1 + len(flat)),
        out_specs=vspec,
    )(x2, *flat)
    return out


# ----------------------------- Parameters (deterministic, synthetic) --------------------
def init_params(key, n_features, embedding_dim):
    E = embedding_dim
    He1 = 2 * E
    Hd = 2 * E
    ks = jax.random.split(key, 14)

    def u(k, shape, fan):
        s = float(fan) ** -0.5
        return jax.random.uniform(k, shape, jnp.float32, -s, s)

    return {
        # Encoder rnn1: LSTM(n_features -> 2E)
        "wih_e1": u(ks[0], (n_features, 4 * He1), He1),
        "whh_e1": u(ks[1], (He1, 4 * He1), He1),
        "b_e1":   u(ks[2], (4 * He1,), He1),        # folded b_ih + b_hh
        # Encoder rnn2: LSTM(2E -> E)
        "wih_e2": u(ks[3], (He1, 4 * E), E),
        "whh_e2": u(ks[4], (E, 4 * E), E),
        "b_e2":   u(ks[5], (4 * E,), E),
        # Decoder rnn1: LSTM(E -> E)
        "wih_d1": u(ks[6], (E, 4 * E), E),
        "whh_d1": u(ks[7], (E, 4 * E), E),
        "b_d1":   u(ks[8], (4 * E,), E),
        # Decoder rnn2: LSTM(E -> 2E)
        "wih_d2": u(ks[9], (E, 4 * Hd), Hd),
        "whh_d2": u(ks[10], (Hd, 4 * Hd), Hd),
        "b_d2":   u(ks[11], (4 * Hd,), Hd),
        # Output layer: Linear(2E -> n_features)
        "w_out":  u(ks[12], (n_features, Hd), Hd),
        "b_out":  u(ks[13], (n_features,), Hd),
    }


# ----------------------------- Pure-JAX reference ---------------------------------------
def _lstm_ref(x_seq, wih, whh, b):
    H = whh.shape[0]

    def step(carry, x_t):
        h, c = carry
        gates = x_t @ wih + h @ whh + b
        i = jax.nn.sigmoid(gates[0:H])
        f = jax.nn.sigmoid(gates[H:2 * H])
        g = jnp.tanh(gates[2 * H:3 * H])
        o = jax.nn.sigmoid(gates[3 * H:4 * H])
        c = f * c + i * g
        h = o * jnp.tanh(c)
        return (h, c), h

    z = jnp.zeros((H,), jnp.float32)
    (h, _), hs = lax.scan(step, (z, z), x_seq)
    return hs, h


def ref_forward(x, p):
    T = x.shape[0]
    hs1, _ = _lstm_ref(x, p["wih_e1"], p["whh_e1"], p["b_e1"])
    _, latent = _lstm_ref(hs1, p["wih_e2"], p["whh_e2"], p["b_e2"])
    dec_in = jnp.tile(latent[None, :], (T, 1))            # x.repeat(seq_len, n_features)
    hs_d1, _ = _lstm_ref(dec_in, p["wih_d1"], p["whh_d1"], p["b_d1"])
    hs_d2, _ = _lstm_ref(hs_d1, p["wih_d2"], p["whh_d2"], p["b_d2"])
    return hs_d2 @ p["w_out"].T + p["b_out"][None, :]


# ----------------------------- Main ------------------------------------------------------
if __name__ == "__main__":
    seq_len = 8
    n_features = 1        # forward pass requires n_features == 1
    embedding_dim = 32

    key = jax.random.PRNGKey(0)
    k_x, k_p = jax.random.split(key)
    x = jax.random.normal(k_x, (seq_len, n_features), dtype=jnp.float32)
    params = init_params(k_p, n_features, embedding_dim)

    y = recurrent_autoencoder(x, params)
    y = jax.block_until_ready(y)

    y_ref = jax.block_until_ready(ref_forward(x, params))
    assert y.shape == (seq_len, n_features)
    # Tolerance loosened vs. the pure-f32 reference: the recurrent h@whh matmuls now use
    # bf16 operands (f32 accumulation), and the rounding compounds through 4 stacked LSTMs.
    assert jnp.allclose(y, y_ref, atol=3e-2, rtol=3e-2), (y, y_ref)

    print("KERNEL_OK")
</pallas_src>

<mosaic_0001>
module attributes {stable_mosaic.version = 11 : i64} {
  func.func @_autoenc_kernel(%arg0: memref<8x1xf32, #tpu.memory_space<vmem>>, %arg1: memref<1x256xf32, #tpu.memory_space<vmem>>, %arg2: memref<64x256xbf16, #tpu.memory_space<vmem>>, %arg3: memref<1x256xf32, #tpu.memory_space<vmem>>, %arg4: memref<64x128xf32, #tpu.memory_space<vmem>>, %arg5: memref<32x128xbf16, #tpu.memory_space<vmem>>, %arg6: memref<1x128xf32, #tpu.memory_space<vmem>>, %arg7: memref<32x128xf32, #tpu.memory_space<vmem>>, %arg8: memref<32x128xbf16, #tpu.memory_space<vmem>>, %arg9: memref<1x128xf32, #tpu.memory_space<vmem>>, %arg10: memref<32x256xf32, #tpu.memory_space<vmem>>, %arg11: memref<64x256xbf16, #tpu.memory_space<vmem>>, %arg12: memref<1x256xf32, #tpu.memory_space<vmem>>, %arg13: memref<1x64xf32, #tpu.memory_space<vmem>>, %arg14: memref<1x1xf32, #tpu.memory_space<vmem>>, %arg15: memref<8x1xf32, #tpu.memory_space<vmem>>) attributes {dimension_semantics = [], scalar_prefetch = 0 : i64, scratch_operands = 0 : i64, tpu.core_type = #tpu.core_type<tc>} {
    %c0 = arith.constant 0 : index
    %c0_0 = arith.constant 0 : index
    %0 = vector.load %arg2[%c0, %c0_0] : memref<64x256xbf16, #tpu.memory_space<vmem>>, vector<64x256xbf16>
    %c0_1 = arith.constant 0 : index
    %c0_2 = arith.constant 0 : index
    %1 = vector.load %arg0[%c0_1, %c0_2] : memref<8x1xf32, #tpu.memory_space<vmem>>, vector<8x1xf32>
    %c0_3 = arith.constant 0 : index
    %c0_4 = arith.constant 0 : index
    %2 = vector.load %arg1[%c0_3, %c0_4] : memref<1x256xf32, #tpu.memory_space<vmem>>, vector<1x256xf32>
    %3 = vector.broadcast %1 : vector<8x1xf32> to vector<8x256xf32>
    %4 = vector.broadcast %2 : vector<1x256xf32> to vector<8x256xf32>
    %5 = arith.mulf %3, %4 : vector<8x256xf32>
    %c0_5 = arith.constant 0 : index
    %c0_6 = arith.constant 0 : index
    %6 = vector.load %arg3[%c0_5, %c0_6] : memref<1x256xf32, #tpu.memory_space<vmem>>, vector<1x256xf32>
    %7 = vector.broadcast %6 : vector<1x256xf32> to vector<8x256xf32>
    %8 = arith.addf %5, %7 : vector<8x256xf32>
    %cst = arith.constant 0.000000e+00 : f32
    %9 = vector.broadcast %cst : f32 to vector<1x64xf32>
    %10 = vector.extract_strided_slice %8 {offsets = [0, 0], sizes = [1, 256], strides = [1, 1]} : vector<8x256xf32> to vector<1x256xf32>
    %11 = arith.truncf %9 : vector<1x64xf32> to vector<1x64xbf16>
    %cst_7 = arith.constant dense<0.000000e+00> : vector<1x256xf32>
    %12 = tpu.matmul %11, %0, %cst_7 {dimension_numbers = #tpu.dot_dimension_numbers<[1], [0], [0], [1], [0, 0, 1, 1], [], []>} : vector<1x64xbf16>, vector<64x256xbf16>, vector<1x256xf32> -> vector<1x256xf32>
    %13 = arith.addf %10, %12 : vector<1x256xf32>
    %14 = arith.negf %13 : vector<1x256xf32>
    %15 = math.exp %14 : vector<1x256xf32>
    %cst_8 = arith.constant 1.000000e+00 : f32
    %16 = vector.broadcast %cst_8 : f32 to vector<1x256xf32>
    %17 = arith.addf %16, %15 : vector<1x256xf32>
    %18 = arith.divf %16, %17 : vector<1x256xf32>
    %19 = vector.extract_strided_slice %18 {offsets = [0, 0], sizes = [1, 64], strides = [1, 1]} : vector<1x256xf32> to vector<1x64xf32>
    %20 = vector.extract_strided_slice %18 {offsets = [0, 64], sizes = [1, 64], strides = [1, 1]} : vector<1x256xf32> to vector<1x64xf32>
    %21 = vector.extract_strided_slice %18 {offsets = [0, 192], sizes = [1, 64], strides = [1, 1]} : vector<1x256xf32> to vector<1x64xf32>
    %22 = vector.extract_strided_slice %13 {offsets = [0, 128], sizes = [1, 64], strides = [1, 1]} : vector<1x256xf32> to vector<1x64xf32>
    %23 = math.tanh %22 : vector<1x64xf32>
    %24 = arith.mulf %20, %9 : vector<1x64xf32>
    %25 = arith.mulf %19, %23 : vector<1x64xf32>
    %26 = arith.addf %24, %25 : vector<1x64xf32>
    %27 = math.tanh %26 : vector<1x64xf32>
    %28 = arith.mulf %21, %27 : vector<1x64xf32>
    %29 = vector.extract_strided_slice %8 {offsets = [1, 0], sizes = [1, 256], strides = [1, 1]} : vector<8x256xf32> to vector<1x256xf32>
    %30 = arith.truncf %28 : vector<1x64xf32> to vector<1x64xbf16>
    %cst_9 = arith.constant dense<0.000000e+00> : vector<1x256xf32>
    %31 = tpu.matmul %30, %0, %cst_9 {dimension_numbers = #tpu.dot_dimension_numbers<[1], [0], [0], [1], [0, 0, 1, 1], [], []>} : vector<1x64xbf16>, vector<64x256xbf16>, vector<1x256xf32> -> vector<1x256xf32>
    %32 = arith.addf %29, %31 : vector<1x256xf32>
    %33 = arith.negf %32 : vector<1x256xf32>
    %34 = math.exp %33 : vector<1x256xf32>
    %cst_10 = arith.constant 1.000000e+00 : f32
    %35 = vector.broadcast %cst_10 : f32 to vector<1x256xf32>
    %36 = arith.addf %35, %34 : vector<1x256xf32>
    %37 = arith.divf %35, %36 : vector<1x256xf32>
    %38 = vector.extract_strided_slice %37 {offsets = [0, 0], sizes = [1, 64], strides = [1, 1]} : vector<1x256xf32> to vector<1x64xf32>
    %39 = vector.extract_strided_slice %37 {offsets = [0, 64], sizes = [1, 64], strides = [1, 1]} : vector<1x256xf32> to vector<1x64xf32>
    %40 = vector.extract_strided_slice %37 {offsets = [0, 192], sizes = [1, 64], strides = [1, 1]} : vector<1x256xf32> to vector<1x64xf32>
    %41 = vector.extract_strided_slice %32 {offsets = [0, 128], sizes = [1, 64], strides = [1, 1]} : vector<1x256xf32> to vector<1x64xf32>
    %42 = math.tanh %41 : vector<1x64xf32>
    %43 = arith.mulf %39, %26 : vector<1x64xf32>
    %44 = arith.mulf %38, %42 : vector<1x64xf32>
    %45 = arith.addf %43, %44 : vector<1x64xf32>
    %46 = math.tanh %45 : vector<1x64xf32>
    %47 = arith.mulf %40, %46 : vector<1x64xf32>
    %48 = vector.extract_strided_slice %8 {offsets = [2, 0], sizes = [1, 256], strides = [1, 1]} : vector<8x256xf32> to vector<1x256xf32>
    %49 = arith.truncf %47 : vector<1x64xf32> to vector<1x64xbf16>
    %cst_11 = arith.constant dense<0.000000e+00> : vector<1x256xf32>
    %50 = tpu.matmul %49, %0, %cst_11 {dimension_numbers = #tpu.dot_dimension_numbers<[1], [0], [0], [1], [0, 0, 1, 1], [], []>} : vector<1x64xbf16>, vector<64x256xbf16>, vector<1x256xf32> -> vector<1x256xf32>
    %51 = arith.addf %48, %50 : vector<1x256xf32>
    %52 = arith.negf %51 : vector<1x256xf32>
    %53 = math.exp %52 : vector<1x256xf32>
    %cst_12 = arith.constant 1.000000e+00 : f32
    %54 = vector.broadcast %cst_12 : f32 to vector<1x256xf32>
    %55 = arith.addf %54, %53 : vector<1x256xf32>
    %56 = arith.divf %54, %55 : vector<1x256xf32>
    %57 = vector.extract_strided_slice %56 {offsets = [0, 0], sizes = [1, 64], strides = [1, 1]} : vector<1x256xf32> to vector<1x64xf32>
    %58 = vector.extract_strided_slice %56 {offsets = [0, 64], sizes = [1, 64], strides = [1, 1]} : vector<1x256xf32> to vector<1x64xf32>
    %59 = vector.extract_strided_slice %56 {offsets = [0, 192], sizes = [1, 64], strides = [1, 1]} : vector<1x256xf32> to vector<1x64xf32>
    %60 = vector.extract_strided_slice %51 {offsets = [0, 128], sizes = [1, 64], strides = [1, 1]} : vector<1x256xf32> to vector<1x64xf32>
    %61 = math.tanh %60 : vector<1x64xf32>
    %62 = arith.mulf %58, %45 : vector<1x64xf32>
    %63 = arith.mulf %57, %61 : vector<1x64xf32>
    %64 = arith.addf %62, %63 : vector<1x64xf32>
    %65 = math.tanh %64 : vector<1x64xf32>
    %66 = arith.mulf %59, %65 : vector<1x64xf32>
    %67 = vector.extract_strided_slice %8 {offsets = [3, 0], sizes = [1, 256], strides = [1, 1]} : vector<8x256xf32> to vector<1x256xf32>
    %68 = arith.truncf %66 : vector<1x64xf32> to vector<1x64xbf16>
    %cst_13 = arith.constant dense<0.000000e+00> : vector<1x256xf32>
    %69 = tpu.matmul %68, %0, %cst_13 {dimension_numbers = #tpu.dot_dimension_numbers<[1], [0], [0], [1], [0, 0, 1, 1], [], []>} : vector<1x64xbf16>, vector<64x256xbf16>, vector<1x256xf32> -> vector<1x256xf32>
    %70 = arith.addf %67, %69 : vector<1x256xf32>
    %71 = arith.negf %70 : vector<1x256xf32>
    %72 = math.exp %71 : vector<1x256xf32>
    %cst_14 = arith.constant 1.000000e+00 : f32
    %73 = vector.broadcast %cst_14 : f32 to vector<1x256xf32>
    %74 = arith.addf %73, %72 : vector<1x256xf32>
    %75 = arith.divf %73, %74 : vector<1x256xf32>
    %76 = vector.extract_strided_slice %75 {offsets = [0, 0], sizes = [1, 64], strides = [1, 1]} : vector<1x256xf32> to vector<1x64xf32>
    %77 = vector.extract_strided_slice %75 {offsets = [0, 64], sizes = [1, 64], strides = [1, 1]} : vector<1x256xf32> to vector<1x64xf32>
    %78 = vector.extract_strided_slice %75 {offsets = [0, 192], sizes = [1, 64], strides = [1, 1]} : vector<1x256xf32> to vector<1x64xf32>
    %79 = vector.extract_strided_slice %70 {offsets = [0, 128], sizes = [1, 64], strides = [1, 1]} : vector<1x256xf32> to vector<1x64xf32>
    %80 = math.tanh %79 : vector<1x64xf32>
    %81 = arith.mulf %77, %64 : vector<1x64xf32>
    %82 = arith.mulf %76, %80 : vector<1x64xf32>
    %83 = arith.addf %81, %82 : vector<1x64xf32>
    %84 = math.tanh %83 : vector<1x64xf32>
    %85 = arith.mulf %78, %84 : vector<1x64xf32>
    %86 = vector.extract_strided_slice %8 {offsets = [4, 0], sizes = [1, 256], strides = [1, 1]} : vector<8x256xf32> to vector<1x256xf32>
    %87 = arith.truncf %85 : vector<1x64xf32> to vector<1x64xbf16>
    %cst_15 = arith.constant dense<0.000000e+00> : vector<1x256xf32>
    %88 = tpu.matmul %87, %0, %cst_15 {dimension_numbers = #tpu.dot_dimension_numbers<[1], [0], [0], [1], [0, 0, 1, 1], [], []>} : vector<1x64xbf16>, vector<64x256xbf16>, vector<1x256xf32> -> vector<1x256xf32>
    %89 = arith.addf %86, %88 : vector<1x256xf32>
    %90 = arith.negf %89 : vector<1x256xf32>
    %91 = math.exp %90 : vector<1x256xf32>
    %cst_16 = arith.constant 1.000000e+00 : f32
    %92 = vector.broadcast %cst_16 : f32 to vector<1x256xf32>
    %93 = arith.addf %92, %91 : vector<1x256xf32>
    %94 = arith.divf %92, %93 : vector<1x256xf32>
    %95 = vector.extract_strided_slice %94 {offsets = [0, 0], sizes = [1, 64], strides = [1, 1]} : vector<1x256xf32> to vector<1x64xf32>
    %96 = vector.extract_strided_slice %94 {offsets = [0, 64], sizes = [1, 64], strides = [1, 1]} : vector<1x256xf32> to vector<1x64xf32>
    %97 = vector.extract_strided_slice %94 {offsets = [0, 192], sizes = [1, 64], strides = [1, 1]} : vector<1x256xf32> to vector<1x64xf32>
    %98 = vector.extract_strided_slice %89 {offsets = [0, 128], sizes = [1, 64], strides = [1, 1]} : vector<1x256xf32> to vector<1x64xf32>
    %99 = math.tanh %98 : vector<1x64xf32>
    %100 = arith.mulf %96, %83 : vector<1x64xf32>
    %101 = arith.mulf %95, %99 : vector<1x64xf32>
    %102 = arith.addf %100, %101 : vector<1x64xf32>
    %103 = math.tanh %102 : vector<1x64xf32>
    %104 = arith.mulf %97, %103 : vector<1x64xf32>
    %105 = vector.extract_strided_slice %8 {offsets = [5, 0], sizes = [1, 256], strides = [1, 1]} : vector<8x256xf32> to vector<1x256xf32>
    %106 = arith.truncf %104 : vector<1x64xf32> to vector<1x64xbf16>
    %cst_17 = arith.constant dense<0.000000e+00> : vector<1x256xf32>
    %107 = tpu.matmul %106, %0, %cst_17 {dimension_numbers = #tpu.dot_dimension_numbers<[1], [0], [0], [1], [0, 0, 1, 1], [], []>} : vector<1x64xbf16>, vector<64x256xbf16>, vector<1x256xf32> -> vector<1x256xf32>
    %108 = arith.addf %105, %107 : vector<1x256xf32>
    %109 = arith.negf %108 : vector<1x256xf32>
    %110 = math.exp %109 : vector<1x256xf32>
    %cst_18 = arith.constant 1.000000e+00 : f32
    %111 = vector.broadcast %cst_18 : f32 to vector<1x256xf32>
    %112 = arith.addf %111, %110 : vector<1x256xf32>
    %113 = arith.divf %111, %112 : vector<1x256xf32>
    %114 = vector.extract_strided_slice %113 {offsets = [0, 0], sizes = [1, 64], strides = [1, 1]} : vector<1x256xf32> to vector<1x64xf32>
    %115 = vector.extract_strided_slice %113 {offsets = [0, 64], sizes = [1, 64], strides = [1, 1]} : vector<1x256xf32> to vector<1x64xf32>
    %116 = vector.extract_strided_slice %113 {offsets = [0, 192], sizes = [1, 64], strides = [1, 1]} : vector<1x256xf32> to vector<1x64xf32>
    %117 = vector.extract_strided_slice %108 {offsets = [0, 128], sizes = [1, 64], strides = [1, 1]} : vector<1x256xf32> to vector<1x64xf32>
    %118 = math.tanh %117 : vector<1x64xf32>
    %119 = arith.mulf %115, %102 : vector<1x64xf32>
    %120 = arith.mulf %114, %118 : vector<1x64xf32>
    %121 = arith.addf %119, %120 : vector<1x64xf32>
    %122 = math.tanh %121 : vector<1x64xf32>
    %123 = arith.mulf %116, %122 : vector<1x64xf32>
    %124 = vector.extract_strided_slice %8 {offsets = [6, 0], sizes = [1, 256], strides = [1, 1]} : vector<8x256xf32> to vector<1x256xf32>
    %125 = arith.truncf %123 : vector<1x64xf32> to vector<1x64xbf16>
    %cst_19 = arith.constant dense<0.000000e+00> : vector<1x256xf32>
    %126 = tpu.matmul %125, %0, %cst_19 {dimension_numbers = #tpu.dot_dimension_numbers<[1], [0], [0], [1], [0, 0, 1, 1], [], []>} : vector<1x64xbf16>, vector<64x256xbf16>, vector<1x256xf32> -> vector<1x256xf32>
    %127 = arith.addf %124, %126 : vector<1x256xf32>
    %128 = arith.negf %127 : vector<1x256xf32>
    %129 = math.exp %128 : vector<1x256xf32>
    %cst_20 = arith.constant 1.000000e+00 : f32
    %130 = vector.broadcast %cst_20 : f32 to vector<1x256xf32>
    %131 = arith.addf %130, %129 : vector<1x256xf32>
    %132 = arith.divf %130, %131 : vector<1x256xf32>
    %133 = vector.extract_strided_slice %132 {offsets = [0, 0], sizes = [1, 64], strides = [1, 1]} : vector<1x256xf32> to vector<1x64xf32>
    %134 = vector.extract_strided_slice %132 {offsets = [0, 64], sizes = [1, 64], strides = [1, 1]} : vector<1x256xf32> to vector<1x64xf32>
    %135 = vector.extract_strided_slice %132 {offsets = [0, 192], sizes = [1, 64], strides = [1, 1]} : vector<1x256xf32> to vector<1x64xf32>
    %136 = vector.extract_strided_slice %127 {offsets = [0, 128], sizes = [1, 64], strides = [1, 1]} : vector<1x256xf32> to vector<1x64xf32>
    %137 = math.tanh %136 : vector<1x64xf32>
    %138 = arith.mulf %134, %121 : vector<1x64xf32>
    %139 = arith.mulf %133, %137 : vector<1x64xf32>
    %140 = arith.addf %138, %139 : vector<1x64xf32>
    %141 = math.tanh %140 : vector<1x64xf32>
    %142 = arith.mulf %135, %141 : vector<1x64xf32>
    %143 = vector.extract_strided_slice %8 {offsets = [7, 0], sizes = [1, 256], strides = [1, 1]} : vector<8x256xf32> to vector<1x256xf32>
    %144 = arith.truncf %142 : vector<1x64xf32> to vector<1x64xbf16>
    %cst_21 = arith.constant dense<0.000000e+00> : vector<1x256xf32>
    %145 = tpu.matmul %144, %0, %cst_21 {dimension_numbers = #tpu.dot_dimension_numbers<[1], [0], [0], [1], [0, 0, 1, 1], [], []>} : vector<1x64xbf16>, vector<64x256xbf16>, vector<1x256xf32> -> vector<1x256xf32>
    %146 = arith.addf %143, %145 : vector<1x256xf32>
    %147 = arith.negf %146 : vector<1x256xf32>
    %148 = math.exp %147 : vector<1x256xf32>
    %cst_22 = arith.constant 1.000000e+00 : f32
    %149 = vector.broadcast %cst_22 : f32 to vector<1x256xf32>
    %150 = arith.addf %149, %148 : vector<1x256xf32>
    %151 = arith.divf %149, %150 : vector<1x256xf32>
    %152 = vector.extract_strided_slice %151 {offsets = [0, 0], sizes = [1, 64], strides = [1, 1]} : vector<1x256xf32> to vector<1x64xf32>
    %153 = vector.extract_strided_slice %151 {offsets = [0, 64], sizes = [1, 64], strides = [1, 1]} : vector<1x256xf32> to vector<1x64xf32>
    %154 = vector.extract_strided_slice %151 {offsets = [0, 192], sizes = [1, 64], strides = [1, 1]} : vector<1x256xf32> to vector<1x64xf32>
    %155 = vector.extract_strided_slice %146 {offsets = [0, 128], sizes = [1, 64], strides = [1, 1]} : vector<1x256xf32> to vector<1x64xf32>
    %156 = math.tanh %155 : vector<1x64xf32>
    %157 = arith.mulf %153, %140 : vector<1x64xf32>
    %158 = arith.mulf %152, %156 : vector<1x64xf32>
    %159 = arith.addf %157, %158 : vector<1x64xf32>
    %160 = math.tanh %159 : vector<1x64xf32>
    %161 = arith.mulf %154, %160 : vector<1x64xf32>
    %162 = tpu.concatenate %28, %47, %66, %85, %104, %123, %142, %161 in 0 : vector<1x64xf32>, vector<1x64xf32>, vector<1x64xf32>, vector<1x64xf32>, vector<1x64xf32>, vector<1x64xf32>, vector<1x64xf32>, vector<1x64xf32> -> vector<8x64xf32>
    %c0_23 = arith.constant 0 : index
    %c0_24 = arith.constant 0 : index
    %163 = vector.load %arg5[%c0_23, %c0_24] : memref<32x128xbf16, #tpu.memory_space<vmem>>, vector<32x128xbf16>
    %c0_25 = arith.constant 0 : index
    %c0_26 = arith.constant 0 : index
    %164 = vector.load %arg4[%c0_25, %c0_26] : memref<64x128xf32, #tpu.memory_space<vmem>>, vector<64x128xf32>
    %cst_27 = arith.constant dense<0.000000e+00> : vector<8x128xf32>
    %165 = tpu.matmul %162, %164, %cst_27 {dimension_numbers = #tpu.dot_dimension_numbers<[1], [0], [0], [1], [0, 0, 1, 1], [], []>} : vector<8x64xf32>, vector<64x128xf32>, vector<8x128xf32> -> vector<8x128xf32>
    %c0_28 = arith.constant 0 : index
    %c0_29 = arith.constant 0 : index
    %166 = vector.load %arg6[%c0_28, %c0_29] : memref<1x128xf32, #tpu.memory_space<vmem>>, vector<1x128xf32>
    %167 = vector.broadcast %166 : vector<1x128xf32> to vector<8x128xf32>
    %168 = arith.addf %165, %167 : vector<8x128xf32>
    %cst_30 = arith.constant 0.000000e+00 : f32
    %169 = vector.broadcast %cst_30 : f32 to vector<1x32xf32>
    %170 = vector.extract_strided_slice %168 {offsets = [0, 0], sizes = [1, 128], strides = [1, 1]} : vector<8x128xf32> to vector<1x128xf32>
    %171 = arith.truncf %169 : vector<1x32xf32> to vector<1x32xbf16>
    %cst_31 = arith.constant dense<0.000000e+00> : vector<1x128xf32>
    %172 = tpu.matmul %171, %163, %cst_31 {dimension_numbers = #tpu.dot_dimension_numbers<[1], [0], [0], [1], [0, 0, 1, 1], [], []>} : vector<1x32xbf16>, vector<32x128xbf16>, vector<1x128xf32> -> vector<1x128xf32>
    %173 = arith.addf %170, %172 : vector<1x128xf32>
    %174 = arith.negf %173 : vector<1x128xf32>
    %175 = math.exp %174 : vector<1x128xf32>
    %cst_32 = arith.constant 1.000000e+00 : f32
    %176 = vector.broadcast %cst_32 : f32 to vector<1x128xf32>
    %177 = arith.addf %176, %175 : vector<1x128xf32>
    %178 = arith.divf %176, %177 : vector<1x128xf32>
    %179 = vector.extract_strided_slice %178 {offsets = [0, 0], sizes = [1, 32], strides = [1, 1]} : vector<1x128xf32> to vector<1x32xf32>
    %180 = vector.extract_strided_slice %178 {offsets = [0, 32], sizes = [1, 32], strides = [1, 1]} : vector<1x128xf32> to vector<1x32xf32>
    %181 = vector.extract_strided_slice %178 {offsets = [0, 96], sizes = [1, 32], strides = [1, 1]} : vector<1x128xf32> to vector<1x32xf32>
    %182 = vector.extract_strided_slice %173 {offsets = [0, 64], sizes = [1, 32], strides = [1, 1]} : vector<1x128xf32> to vector<1x32xf32>
    %183 = math.tanh %182 : vector<1x32xf32>
    %184 = arith.mulf %180, %169 : vector<1x32xf32>
    %185 = arith.mulf %179, %183 : vector<1x32xf32>
    %186 = arith.addf %184, %185 : vector<1x32xf32>
    %187 = math.tanh %186 : vector<1x32xf32>
    %188 = arith.mulf %181, %187 : vector<1x32xf32>
    %189 = vector.extract_strided_slice %168 {offsets = [1, 0], sizes = [1, 128], strides = [1, 1]} : vector<8x128xf32> to vector<1x128xf32>
    %190 = arith.truncf %188 : vector<1x32xf32> to vector<1x32xbf16>
    %cst_33 = arith.constant dense<0.000000e+00> : vector<1x128xf32>
    %191 = tpu.matmul %190, %163, %cst_33 {dimension_numbers = #tpu.dot_dimension_numbers<[1], [0], [0], [1], [0, 0, 1, 1], [], []>} : vector<1x32xbf16>, vector<32x128xbf16>, vector<1x128xf32> -> vector<1x128xf32>
    %192 = arith.addf %189, %191 : vector<1x128xf32>
    %193 = arith.negf %192 : vector<1x128xf32>
    %194 = math.exp %193 : vector<1x128xf32>
    %cst_34 = arith.constant 1.000000e+00 : f32
    %195 = vector.broadcast %cst_34 : f32 to vector<1x128xf32>
    %196 = arith.addf %195, %194 : vector<1x128xf32>
    %197 = arith.divf %195, %196 : vector<1x128xf32>
    %198 = vector.extract_strided_slice %197 {offsets = [0, 0], sizes = [1, 32], strides = [1, 1]} : vector<1x128xf32> to vector<1x32xf32>
    %199 = vector.extract_strided_slice %197 {offsets = [0, 32], sizes = [1, 32], strides = [1, 1]} : vector<1x128xf32> to vector<1x32xf32>
    %200 = vector.extract_strided_slice %197 {offsets = [0, 96], sizes = [1, 32], strides = [1, 1]} : vector<1x128xf32> to vector<1x32xf32>
    %201 = vector.extract_strided_slice %192 {offsets = [0, 64], sizes = [1, 32], strides = [1, 1]} : vector<1x128xf32> to vector<1x32xf32>
    %202 = math.tanh %201 : vector<1x32xf32>
    %203 = arith.mulf %199, %186 : vector<1x32xf32>
    %204 = arith.mulf %198, %202 : vector<1x32xf32>
    %205 = arith.addf %203, %204 : vector<1x32xf32>
    %206 = math.tanh %205 : vector<1x32xf32>
    %207 = arith.mulf %200, %206 : vector<1x32xf32>
    %208 = vector.extract_strided_slice %168 {offsets = [2, 0], sizes = [1, 128], strides = [1, 1]} : vector<8x128xf32> to vector<1x128xf32>
    %209 = arith.truncf %207 : vector<1x32xf32> to vector<1x32xbf16>
    %cst_35 = arith.constant dense<0.000000e+00> : vector<1x128xf32>
    %210 = tpu.matmul %209, %163, %cst_35 {dimension_numbers = #tpu.dot_dimension_numbers<[1], [0], [0], [1], [0, 0, 1, 1], [], []>} : vector<1x32xbf16>, vector<32x128xbf16>, vector<1x128xf32> -> vector<1x128xf32>
    %211 = arith.addf %208, %210 : vector<1x128xf32>
    %212 = arith.negf %211 : vector<1x128xf32>
    %213 = math.exp %212 : vector<1x128xf32>
    %cst_36 = arith.constant 1.000000e+00 : f32
    %214 = vector.broadcast %cst_36 : f32 to vector<1x128xf32>
    %215 = arith.addf %214, %213 : vector<1x128xf32>
    %216 = arith.divf %214, %215 : vector<1x128xf32>
    %217 = vector.extract_strided_slice %216 {offsets = [0, 0], sizes = [1, 32], strides = [1, 1]} : vector<1x128xf32> to vector<1x32xf32>
    %218 = vector.extract_strided_slice %216 {offsets = [0, 32], sizes = [1, 32], strides = [1, 1]} : vector<1x128xf32> to vector<1x32xf32>
    %219 = vector.extract_strided_slice %216 {offsets = [0, 96], sizes = [1, 32], strides = [1, 1]} : vector<1x128xf32> to vector<1x32xf32>
    %220 = vector.extract_strided_slice %211 {offsets = [0, 64], sizes = [1, 32], strides = [1, 1]} : vector<1x128xf32> to vector<1x32xf32>
    %221 = math.tanh %220 : vector<1x32xf32>
    %222 = arith.mulf %218, %205 : vector<1x32xf32>
    %223 = arith.mulf %217, %221 : vector<1x32xf32>
    %224 = arith.addf %222, %223 : vector<1x32xf32>
    %225 = math.tanh %224 : vector<1x32xf32>
    %226 = arith.mulf %219, %225 : vector<1x32xf32>
    %227 = vector.extract_strided_slice %168 {offsets = [3, 0], sizes = [1, 128], strides = [1, 1]} : vector<8x128xf32> to vector<1x128xf32>
    %228 = arith.truncf %226 : vector<1x32xf32> to vector<1x32xbf16>
    %cst_37 = arith.constant dense<0.000000e+00> : vector<1x128xf32>
    %229 = tpu.matmul %228, %163, %cst_37 {dimension_numbers = #tpu.dot_dimension_numbers<[1], [0], [0], [1], [0, 0, 1, 1], [], []>} : vector<1x32xbf16>, vector<32x128xbf16>, vector<1x128xf32> -> vector<1x128xf32>
    %230 = arith.addf %227, %229 : vector<1x128xf32>
    %231 = arith.negf %230 : vector<1x128xf32>
    %232 = math.exp %231 : vector<1x128xf32>
    %cst_38 = arith.constant 1.000000e+00 : f32
    %233 = vector.broadcast %cst_38 : f32 to vector<1x128xf32>
    %234 = arith.addf %233, %232 : vector<1x128xf32>
    %235 = arith.divf %233, %234 : vector<1x128xf32>
    %236 = vector.extract_strided_slice %235 {offsets = [0, 0], sizes = [1, 32], strides = [1, 1]} : vector<1x128xf32> to vector<1x32xf32>
    %237 = vector.extract_strided_slice %235 {offsets = [0, 32], sizes = [1, 32], strides = [1, 1]} : vector<1x128xf32> to vector<1x32xf32>
    %238 = vector.extract_strided_slice %235 {offsets = [0, 96], sizes = [1, 32], strides = [1, 1]} : vector<1x128xf32> to vector<1x32xf32>
    %239 = vector.extract_strided_slice %230 {offsets = [0, 64], sizes = [1, 32], strides = [1, 1]} : vector<1x128xf32> to vector<1x32xf32>
    %240 = math.tanh %239 : vector<1x32xf32>
    %241 = arith.mulf %237, %224 : vector<1x32xf32>
    %242 = arith.mulf %236, %240 : vector<1x32xf32>
    %243 = arith.addf %241, %242 : vector<1x32xf32>
    %244 = math.tanh %243 : vector<1x32xf32>
    %245 = arith.mulf %238, %244 : vector<1x32xf32>
    %246 = vector.extract_strided_slice %168 {offsets = [4, 0], sizes = [1, 128], strides = [1, 1]} : vector<8x128xf32> to vector<1x128xf32>
    %247 = arith.truncf %245 : vector<1x32xf32> to vector<1x32xbf16>
    %cst_39 = arith.constant dense<0.000000e+00> : vector<1x128xf32>
    %248 = tpu.matmul %247, %163, %cst_39 {dimension_numbers = #tpu.dot_dimension_numbers<[1], [0], [0], [1], [0, 0, 1, 1], [], []>} : vector<1x32xbf16>, vector<32x128xbf16>, vector<1x128xf32> -> vector<1x128xf32>
    %249 = arith.addf %246, %248 : vector<1x128xf32>
    %250 = arith.negf %249 : vector<1x128xf32>
    %251 = math.exp %250 : vector<1x128xf32>
    %cst_40 = arith.constant 1.000000e+00 : f32
    %252 = vector.broadcast %cst_40 : f32 to vector<1x128xf32>
    %253 = arith.addf %252, %251 : vector<1x128xf32>
    %254 = arith.divf %252, %253 : vector<1x128xf32>
    %255 = vector.extract_strided_slice %254 {offsets = [0, 0], sizes = [1, 32], strides = [1, 1]} : vector<1x128xf32> to vector<1x32xf32>
    %256 = vector.extract_strided_slice %254 {offsets = [0, 32], sizes = [1, 32], strides = [1, 1]} : vector<1x128xf32> to vector<1x32xf32>
    %257 = vector.extract_strided_slice %254 {offsets = [0, 96], sizes = [1, 32], strides = [1, 1]} : vector<1x128xf32> to vector<1x32xf32>
    %258 = vector.extract_strided_slice %249 {offsets = [0, 64], sizes = [1, 32], strides = [1, 1]} : vector<1x128xf32> to vector<1x32xf32>
    %259 = math.tanh %258 : vector<1x32xf32>
    %260 = arith.mulf %256, %243 : vector<1x32xf32>
    %261 = arith.mulf %255, %259 : vector<1x32xf32>
    %262 = arith.addf %260, %261 : vector<1x32xf32>
    %263 = math.tanh %262 : vector<1x32xf32>
    %264 = arith.mulf %257, %263 : vector<1x32xf32>
    %265 = vector.extract_strided_slice %168 {offsets = [5, 0], sizes = [1, 128], strides = [1, 1]} : vector<8x128xf32> to vector<1x128xf32>
    %266 = arith.truncf %264 : vector<1x32xf32> to vector<1x32xbf16>
    %cst_41 = arith.constant dense<0.000000e+00> : vector<1x128xf32>
    %267 = tpu.matmul %266, %163, %cst_41 {dimension_numbers = #tpu.dot_dimension_numbers<[1], [0], [0], [1], [0, 0, 1, 1], [], []>} : vector<1x32xbf16>, vector<32x128xbf16>, vector<1x128xf32> -> vector<1x128xf32>
    %268 = arith.addf %265, %267 : vector<1x128xf32>
    %269 = arith.negf %268 : vector<1x128xf32>
    %270 = math.exp %269 : vector<1x128xf32>
    %cst_42 = arith.constant 1.000000e+00 : f32
    %271 = vector.broadcast %cst_42 : f32 to vector<1x128xf32>
    %272 = arith.addf %271, %270 : vector<1x128xf32>
    %273 = arith.divf %271, %272 : vector<1x128xf32>
    %274 = vector.extract_strided_slice %273 {offsets = [0, 0], sizes = [1, 32], strides = [1, 1]} : vector<1x128xf32> to vector<1x32xf32>
    %275 = vector.extract_strided_slice %273 {offsets = [0, 32], sizes = [1, 32], strides = [1, 1]} : vector<1x128xf32> to vector<1x32xf32>
    %276 = vector.extract_strided_slice %273 {offsets = [0, 96], sizes = [1, 32], strides = [1, 1]} : vector<1x128xf32> to vector<1x32xf32>
    %277 = vector.extract_strided_slice %268 {offsets = [0, 64], sizes = [1, 32], strides = [1, 1]} : vector<1x128xf32> to vector<1x32xf32>
    %278 = math.tanh %277 : vector<1x32xf32>
    %279 = arith.mulf %275, %262 : vector<1x32xf32>
    %280 = arith.mulf %274, %278 : vector<1x32xf32>
    %281 = arith.addf %279, %280 : vector<1x32xf32>
    %282 = math.tanh %281 : vector<1x32xf32>
    %283 = arith.mulf %276, %282 : vector<1x32xf32>
    %284 = vector.extract_strided_slice %168 {offsets = [6, 0], sizes = [1, 128], strides = [1, 1]} : vector<8x128xf32> to vector<1x128xf32>
    %285 = arith.truncf %283 : vector<1x32xf32> to vector<1x32xbf16>
    %cst_43 = arith.constant dense<0.000000e+00> : vector<1x128xf32>
    %286 = tpu.matmul %285, %163, %cst_43 {dimension_numbers = #tpu.dot_dimension_numbers<[1], [0], [0], [1], [0, 0, 1, 1], [], []>} : vector<1x32xbf16>, vector<32x128xbf16>, vector<1x128xf32> -> vector<1x128xf32>
    %287 = arith.addf %284, %286 : vector<1x128xf32>
    %288 = arith.negf %287 : vector<1x128xf32>
    %289 = math.exp %288 : vector<1x128xf32>
    %cst_44 = arith.constant 1.000000e+00 : f32
    %290 = vector.broadcast %cst_44 : f32 to vector<1x128xf32>
    %291 = arith.addf %290, %289 : vector<1x128xf32>
    %292 = arith.divf %290, %291 : vector<1x128xf32>
    %293 = vector.extract_strided_slice %292 {offsets = [0, 0], sizes = [1, 32], strides = [1, 1]} : vector<1x128xf32> to vector<1x32xf32>
    %294 = vector.extract_strided_slice %292 {offsets = [0, 32], sizes = [1, 32], strides = [1, 1]} : vector<1x128xf32> to vector<1x32xf32>
    %295 = vector.extract_strided_slice %292 {offsets = [0, 96], sizes = [1, 32], strides = [1, 1]} : vector<1x128xf32> to vector<1x32xf32>
    %296 = vector.extract_strided_slice %287 {offsets = [0, 64], sizes = [1, 32], strides = [1, 1]} : vector<1x128xf32> to vector<1x32xf32>
    %297 = math.tanh %296 : vector<1x32xf32>
    %298 = arith.mulf %294, %281 : vector<1x32xf32>
    %299 = arith.mulf %293, %297 : vector<1x32xf32>
    %300 = arith.addf %298, %299 : vector<1x32xf32>
    %301 = math.tanh %300 : vector<1x32xf32>
    %302 = arith.mulf %295, %301 : vector<1x32xf32>
    %303 = vector.extract_strided_slice %168 {offsets = [7, 0], sizes = [1, 128], strides = [1, 1]} : vector<8x128xf32> to vector<1x128xf32>
    %304 = arith.truncf %302 : vector<1x32xf32> to vector<1x32xbf16>
    %cst_45 = arith.constant dense<0.000000e+00> : vector<1x128xf32>
    %305 = tpu.matmul %304, %163, %cst_45 {dimension_numbers = #tpu.dot_dimension_numbers<[1], [0], [0], [1], [0, 0, 1, 1], [], []>} : vector<1x32xbf16>, vector<32x128xbf16>, vector<1x128xf32> -> vector<1x128xf32>
    %306 = arith.addf %303, %305 : vector<1x128xf32>
    %307 = arith.negf %306 : vector<1x128xf32>
    %308 = math.exp %307 : vector<1x128xf32>
    %cst_46 = arith.constant 1.000000e+00 : f32
    %309 = vector.broadcast %cst_46 : f32 to vector<1x128xf32>
    %310 = arith.addf %309, %308 : vector<1x128xf32>
    %311 = arith.divf %309, %310 : vector<1x128xf32>
    %312 = vector.extract_strided_slice %311 {offsets = [0, 0], sizes = [1, 32], strides = [1, 1]} : vector<1x128xf32> to vector<1x32xf32>
    %313 = vector.extract_strided_slice %311 {offsets = [0, 32], sizes = [1, 32], strides = [1, 1]} : vector<1x128xf32> to vector<1x32xf32>
    %314 = vector.extract_strided_slice %311 {offsets = [0, 96], sizes = [1, 32], strides = [1, 1]} : vector<1x128xf32> to vector<1x32xf32>
    %315 = vector.extract_strided_slice %306 {offsets = [0, 64], sizes = [1, 32], strides = [1, 1]} : vector<1x128xf32> to vector<1x32xf32>
    %316 = math.tanh %315 : vector<1x32xf32>
    %317 = arith.mulf %313, %300 : vector<1x32xf32>
    %318 = arith.mulf %312, %316 : vector<1x32xf32>
    %319 = arith.addf %317, %318 : vector<1x32xf32>
    %320 = math.tanh %319 : vector<1x32xf32>
    %321 = arith.mulf %314, %320 : vector<1x32xf32>
    %c0_47 = arith.constant 0 : index
    %c0_48 = arith.constant 0 : index
    %322 = vector.load %arg8[%c0_47, %c0_48] : memref<32x128xbf16, #tpu.memory_space<vmem>>, vector<32x128xbf16>
    %c0_49 = arith.constant 0 : index
    %c0_50 = arith.constant 0 : index
    %323 = vector.load %arg7[%c0_49, %c0_50] : memref<32x128xf32, #tpu.memory_space<vmem>>, vector<32x128xf32>
    %cst_51 = arith.constant dense<0.000000e+00> : vector<1x128xf32>
    %324 = tpu.matmul %321, %323, %cst_51 {dimension_numbers = #tpu.dot_dimension_numbers<[1], [0], [0], [1], [0, 0, 1, 1], [], []>} : vector<1x32xf32>, vector<32x128xf32>, vector<1x128xf32> -> vector<1x128xf32>
    %c0_52 = arith.constant 0 : index
    %c0_53 = arith.constant 0 : index
    %325 = vector.load %arg9[%c0_52, %c0_53] : memref<1x128xf32, #tpu.memory_space<vmem>>, vector<1x128xf32>
    %326 = arith.addf %324, %325 : vector<1x128xf32>
    %cst_54 = arith.constant 0.000000e+00 : f32
    %327 = vector.broadcast %cst_54 : f32 to vector<1x32xf32>
    %328 = arith.truncf %327 : vector<1x32xf32> to vector<1x32xbf16>
    %cst_55 = arith.constant dense<0.000000e+00> : vector<1x128xf32>
    %329 = tpu.matmul %328, %322, %cst_55 {dimension_numbers = #tpu.dot_dimension_numbers<[1], [0], [0], [1], [0, 0, 1, 1], [], []>} : vector<1x32xbf16>, vector<32x128xbf16>, vector<1x128xf32> -> vector<1x128xf32>
    %330 = arith.addf %326, %329 : vector<1x128xf32>
    %331 = arith.negf %330 : vector<1x128xf32>
    %332 = math.exp %331 : vector<1x128xf32>
    %cst_56 = arith.constant 1.000000e+00 : f32
    %333 = vector.broadcast %cst_56 : f32 to vector<1x128xf32>
    %334 = arith.addf %333, %332 : vector<1x128xf32>
    %335 = arith.divf %333, %334 : vector<1x128xf32>
    %336 = vector.extract_strided_slice %335 {offsets = [0, 0], sizes = [1, 32], strides = [1, 1]} : vector<1x128xf32> to vector<1x32xf32>
    %337 = vector.extract_strided_slice %335 {offsets = [0, 32], sizes = [1, 32], strides = [1, 1]} : vector<1x128xf32> to vector<1x32xf32>
    %338 = vector.extract_strided_slice %335 {offsets = [0, 96], sizes = [1, 32], strides = [1, 1]} : vector<1x128xf32> to vector<1x32xf32>
    %339 = vector.extract_strided_slice %330 {offsets = [0, 64], sizes = [1, 32], strides = [1, 1]} : vector<1x128xf32> to vector<1x32xf32>
    %340 = math.tanh %339 : vector<1x32xf32>
    %341 = arith.mulf %337, %327 : vector<1x32xf32>
    %342 = arith.mulf %336, %340 : vector<1x32xf32>
    %343 = arith.addf %341, %342 : vector<1x32xf32>
    %344 = math.tanh %343 : vector<1x32xf32>
    %345 = arith.mulf %338, %344 : vector<1x32xf32>
    %346 = arith.truncf %345 : vector<1x32xf32> to vector<1x32xbf16>
    %cst_57 = arith.constant dense<0.000000e+00> : vector<1x128xf32>
    %347 = tpu.matmul %346, %322, %cst_57 {dimension_numbers = #tpu.dot_dimension_numbers<[1], [0], [0], [1], [0, 0, 1, 1], [], []>} : vector<1x32xbf16>, vector<32x128xbf16>, vector<1x128xf32> -> vector<1x128xf32>
    %348 = arith.addf %326, %347 : vector<1x128xf32>
    %349 = arith.negf %348 : vector<1x128xf32>
    %350 = math.exp %349 : vector<1x128xf32>
    %cst_58 = arith.constant 1.000000e+00 : f32
    %351 = vector.broadcast %cst_58 : f32 to vector<1x128xf32>
    %352 = arith.addf %351, %350 : vector<1x128xf32>
    %353 = arith.divf %351, %352 : vector<1x128xf32>
    %354 = vector.extract_strided_slice %353 {offsets = [0, 0], sizes = [1, 32], strides = [1, 1]} : vector<1x128xf32> to vector<1x32xf32>
    %355 = vector.extract_strided_slice %353 {offsets = [0, 32], sizes = [1, 32], strides = [1, 1]} : vector<1x128xf32> to vector<1x32xf32>
    %356 = vector.extract_strided_slice %353 {offsets = [0, 96], sizes = [1, 32], strides = [1, 1]} : vector<1x128xf32> to vector<1x32xf32>
    %357 = vector.extract_strided_slice %348 {offsets = [0, 64], sizes = [1, 32], strides = [1, 1]} : vector<1x128xf32> to vector<1x32xf32>
    %358 = math.tanh %357 : vector<1x32xf32>
    %359 = arith.mulf %355, %343 : vector<1x32xf32>
    %360 = arith.mulf %354, %358 : vector<1x32xf32>
    %361 = arith.addf %359, %360 : vector<1x32xf32>
    %362 = math.tanh %361 : vector<1x32xf32>
    %363 = arith.mulf %356, %362 : vector<1x32xf32>
    %364 = arith.truncf %363 : vector<1x32xf32> to vector<1x32xbf16>
    %cst_59 = arith.constant dense<0.000000e+00> : vector<1x128xf32>
    %365 = tpu.matmul %364, %322, %cst_59 {dimension_numbers = #tpu.dot_dimension_numbers<[1], [0], [0], [1], [0, 0, 1, 1], [], []>} : vector<1x32xbf16>, vector<32x128xbf16>, vector<1x128xf32> -> vector<1x128xf32>
    %366 = arith.addf %326, %365 : vector<1x128xf32>
    %367 = arith.negf %366 : vector<1x128xf32>
    %368 = math.exp %367 : vector<1x128xf32>
    %cst_60 = arith.constant 1.000000e+00 : f32
    %369 = vector.broadcast %cst_60 : f32 to vector<1x128xf32>
    %370 = arith.addf %369, %368 : vector<1x128xf32>
    %371 = arith.divf %369, %370 : vector<1x128xf32>
    %372 = vector.extract_strided_slice %371 {offsets = [0, 0], sizes = [1, 32], strides = [1, 1]} : vector<1x128xf32> to vector<1x32xf32>
    %373 = vector.extract_strided_slice %371 {offsets = [0, 32], sizes = [1, 32], strides = [1, 1]} : vector<1x128xf32> to vector<1x32xf32>
    %374 = vector.extract_strided_slice %371 {offsets = [0, 96], sizes = [1, 32], strides = [1, 1]} : vector<1x128xf32> to vector<1x32xf32>
    %375 = vector.extract_strided_slice %366 {offsets = [0, 64], sizes = [1, 32], strides = [1, 1]} : vector<1x128xf32> to vector<1x32xf32>
    %376 = math.tanh %375 : vector<1x32xf32>
    %377 = arith.mulf %373, %361 : vector<1x32xf32>
    %378 = arith.mulf %372, %376 : vector<1x32xf32>
    %379 = arith.addf %377, %378 : vector<1x32xf32>
    %380 = math.tanh %379 : vector<1x32xf32>
    %381 = arith.mulf %374, %380 : vector<1x32xf32>
    %382 = arith.truncf %381 : vector<1x32xf32> to vector<1x32xbf16>
    %cst_61 = arith.constant dense<0.000000e+00> : vector<1x128xf32>
    %383 = tpu.matmul %382, %322, %cst_61 {dimension_numbers = #tpu.dot_dimension_numbers<[1], [0], [0], [1], [0, 0, 1, 1], [], []>} : vector<1x32xbf16>, vector<32x128xbf16>, vector<1x128xf32> -> vector<1x128xf32>
    %384 = arith.addf %326, %383 : vector<1x128xf32>
    %385 = arith.negf %384 : vector<1x128xf32>
    %386 = math.exp %385 : vector<1x128xf32>
    %cst_62 = arith.constant 1.000000e+00 : f32
    %387 = vector.broadcast %cst_62 : f32 to vector<1x128xf32>
    %388 = arith.addf %387, %386 : vector<1x128xf32>
    %389 = arith.divf %387, %388 : vector<1x128xf32>
    %390 = vector.extract_strided_slice %389 {offsets = [0, 0], sizes = [1, 32], strides = [1, 1]} : vector<1x128xf32> to vector<1x32xf32>
    %391 = vector.extract_strided_slice %389 {offsets = [0, 32], sizes = [1, 32], strides = [1, 1]} : vector<1x128xf32> to vector<1x32xf32>
    %392 = vector.extract_strided_slice %389 {offsets = [0, 96], sizes = [1, 32], strides = [1, 1]} : vector<1x128xf32> to vector<1x32xf32>
    %393 = vector.extract_strided_slice %384 {offsets = [0, 64], sizes = [1, 32], strides = [1, 1]} : vector<1x128xf32> to vector<1x32xf32>
    %394 = math.tanh %393 : vector<1x32xf32>
    %395 = arith.mulf %391, %379 : vector<1x32xf32>
    %396 = arith.mulf %390, %394 : vector<1x32xf32>
    %397 = arith.addf %395, %396 : vector<1x32xf32>
    %398 = math.tanh %397 : vector<1x32xf32>
    %399 = arith.mulf %392, %398 : vector<1x32xf32>
    %400 = arith.truncf %399 : vector<1x32xf32> to vector<1x32xbf16>
    %cst_63 = arith.constant dense<0.000000e+00> : vector<1x128xf32>
    %401 = tpu.matmul %400, %322, %cst_63 {dimension_numbers = #tpu.dot_dimension_numbers<[1], [0], [0], [1], [0, 0, 1, 1], [], []>} : vector<1x32xbf16>, vector<32x128xbf16>, vector<1x128xf32> -> vector<1x128xf32>
    %402 = arith.addf %326, %401 : vector<1x128xf32>
    %403 = arith.negf %402 : vector<1x128xf32>
    %404 = math.exp %403 : vector<1x128xf32>
    %cst_64 = arith.constant 1.000000e+00 : f32
    %405 = vector.broadcast %cst_64 : f32 to vector<1x128xf32>
    %406 = arith.addf %405, %404 : vector<1x128xf32>
    %407 = arith.divf %405, %406 : vector<1x128xf32>
    %408 = vector.extract_strided_slice %407 {offsets = [0, 0], sizes = [1, 32], strides = [1, 1]} : vector<1x128xf32> to vector<1x32xf32>
    %409 = vector.extract_strided_slice %407 {offsets = [0, 32], sizes = [1, 32], strides = [1, 1]} : vector<1x128xf32> to vector<1x32xf32>
    %410 = vector.extract_strided_slice %407 {offsets = [0, 96], sizes = [1, 32], strides = [1, 1]} : vector<1x128xf32> to vector<1x32xf32>
    %411 = vector.extract_strided_slice %402 {offsets = [0, 64], sizes = [1, 32], strides = [1, 1]} : vector<1x128xf32> to vector<1x32xf32>
    %412 = math.tanh %411 : vector<1x32xf32>
    %413 = arith.mulf %409, %397 : vector<1x32xf32>
    %414 = arith.mulf %408, %412 : vector<1x32xf32>
    %415 = arith.addf %413, %414 : vector<1x32xf32>
    %416 = math.tanh %415 : vector<1x32xf32>
    %417 = arith.mulf %410, %416 : vector<1x32xf32>
    %418 = arith.truncf %417 : vector<1x32xf32> to vector<1x32xbf16>
    %cst_65 = arith.constant dense<0.000000e+00> : vector<1x128xf32>
    %419 = tpu.matmul %418, %322, %cst_65 {dimension_numbers = #tpu.dot_dimension_numbers<[1], [0], [0], [1], [0, 0, 1, 1], [], []>} : vector<1x32xbf16>, vector<32x128xbf16>, vector<1x128xf32> -> vector<1x128xf32>
    %420 = arith.addf %326, %419 : vector<1x128xf32>
    %421 = arith.negf %420 : vector<1x128xf32>
    %422 = math.exp %421 : vector<1x128xf32>
    %cst_66 = arith.constant 1.000000e+00 : f32
    %423 = vector.broadcast %cst_66 : f32 to vector<1x128xf32>
    %424 = arith.addf %423, %422 : vector<1x128xf32>
    %425 = arith.divf %423, %424 : vector<1x128xf32>
    %426 = vector.extract_strided_slice %425 {offsets = [0, 0], sizes = [1, 32], strides = [1, 1]} : vector<1x128xf32> to vector<1x32xf32>
    %427 = vector.extract_strided_slice %425 {offsets = [0, 32], sizes = [1, 32], strides = [1, 1]} : vector<1x128xf32> to vector<1x32xf32>
    %428 = vector.extract_strided_slice %425 {offsets = [0, 96], sizes = [1, 32], strides = [1, 1]} : vector<1x128xf32> to vector<1x32xf32>
    %429 = vector.extract_strided_slice %420 {offsets = [0, 64], sizes = [1, 32], strides = [1, 1]} : vector<1x128xf32> to vector<1x32xf32>
    %430 = math.tanh %429 : vector<1x32xf32>
    %431 = arith.mulf %427, %415 : vector<1x32xf32>
    %432 = arith.mulf %426, %430 : vector<1x32xf32>
    %433 = arith.addf %431, %432 : vector<1x32xf32>
    %434 = math.tanh %433 : vector<1x32xf32>
    %435 = arith.mulf %428, %434 : vector<1x32xf32>
    %436 = arith.truncf %435 : vector<1x32xf32> to vector<1x32xbf16>
    %cst_67 = arith.constant dense<0.000000e+00> : vector<1x128xf32>
    %437 = tpu.matmul %436, %322, %cst_67 {dimension_numbers = #tpu.dot_dimension_numbers<[1], [0], [0], [1], [0, 0, 1, 1], [], []>} : vector<1x32xbf16>, vector<32x128xbf16>, vector<1x128xf32> -> vector<1x128xf32>
    %438 = arith.addf %326, %437 : vector<1x128xf32>
    %439 = arith.negf %438 : vector<1x128xf32>
    %440 = math.exp %439 : vector<1x128xf32>
    %cst_68 = arith.constant 1.000000e+00 : f32
    %441 = vector.broadcast %cst_68 : f32 to vector<1x128xf32>
    %442 = arith.addf %441, %440 : vector<1x128xf32>
    %443 = arith.divf %441, %442 : vector<1x128xf32>
    %444 = vector.extract_strided_slice %443 {offsets = [0, 0], sizes = [1, 32], strides = [1, 1]} : vector<1x128xf32> to vector<1x32xf32>
    %445 = vector.extract_strided_slice %443 {offsets = [0, 32], sizes = [1, 32], strides = [1, 1]} : vector<1x128xf32> to vector<1x32xf32>
    %446 = vector.extract_strided_slice %443 {offsets = [0, 96], sizes = [1, 32], strides = [1, 1]} : vector<1x128xf32> to vector<1x32xf32>
    %447 = vector.extract_strided_slice %438 {offsets = [0, 64], sizes = [1, 32], strides = [1, 1]} : vector<1x128xf32> to vector<1x32xf32>
    %448 = math.tanh %447 : vector<1x32xf32>
    %449 = arith.mulf %445, %433 : vector<1x32xf32>
    %450 = arith.mulf %444, %448 : vector<1x32xf32>
    %451 = arith.addf %449, %450 : vector<1x32xf32>
    %452 = math.tanh %451 : vector<1x32xf32>
    %453 = arith.mulf %446, %452 : vector<1x32xf32>
    %454 = arith.truncf %453 : vector<1x32xf32> to vector<1x32xbf16>
    %cst_69 = arith.constant dense<0.000000e+00> : vector<1x128xf32>
    %455 = tpu.matmul %454, %322, %cst_69 {dimension_numbers = #tpu.dot_dimension_numbers<[1], [0], [0], [1], [0, 0, 1, 1], [], []>} : vector<1x32xbf16>, vector<32x128xbf16>, vector<1x128xf32> -> vector<1x128xf32>
    %456 = arith.addf %326, %455 : vector<1x128xf32>
    %457 = arith.negf %456 : vector<1x128xf32>
    %458 = math.exp %457 : vector<1x128xf32>
    %cst_70 = arith.constant 1.000000e+00 : f32
    %459 = vector.broadcast %cst_70 : f32 to vector<1x128xf32>
    %460 = arith.addf %459, %458 : vector<1x128xf32>
    %461 = arith.divf %459, %460 : vector<1x128xf32>
    %462 = vector.extract_strided_slice %461 {offsets = [0, 0], sizes = [1, 32], strides = [1, 1]} : vector<1x128xf32> to vector<1x32xf32>
    %463 = vector.extract_strided_slice %461 {offsets = [0, 32], sizes = [1, 32], strides = [1, 1]} : vector<1x128xf32> to vector<1x32xf32>
    %464 = vector.extract_strided_slice %461 {offsets = [0, 96], sizes = [1, 32], strides = [1, 1]} : vector<1x128xf32> to vector<1x32xf32>
    %465 = vector.extract_strided_slice %456 {offsets = [0, 64], sizes = [1, 32], strides = [1, 1]} : vector<1x128xf32> to vector<1x32xf32>
    %466 = math.tanh %465 : vector<1x32xf32>
    %467 = arith.mulf %463, %451 : vector<1x32xf32>
    %468 = arith.mulf %462, %466 : vector<1x32xf32>
    %469 = arith.addf %467, %468 : vector<1x32xf32>
    %470 = math.tanh %469 : vector<1x32xf32>
    %471 = arith.mulf %464, %470 : vector<1x32xf32>
    %472 = tpu.concatenate %345, %363, %381, %399, %417, %435, %453, %471 in 0 : vector<1x32xf32>, vector<1x32xf32>, vector<1x32xf32>, vector<1x32xf32>, vector<1x32xf32>, vector<1x32xf32>, vector<1x32xf32>, vector<1x32xf32> -> vector<8x32xf32>
    %c0_71 = arith.constant 0 : index
    %c0_72 = arith.constant 0 : index
    %473 = vector.load %arg11[%c0_71, %c0_72] : memref<64x256xbf16, #tpu.memory_space<vmem>>, vector<64x256xbf16>
    %c0_73 = arith.constant 0 : index
    %c0_74 = arith.constant 0 : index
    %474 = vector.load %arg10[%c0_73, %c0_74] : memref<32x256xf32, #tpu.memory_space<vmem>>, vector<32x256xf32>
    %cst_75 = arith.constant dense<0.000000e+00> : vector<8x256xf32>
    %475 = tpu.matmul %472, %474, %cst_75 {dimension_numbers = #tpu.dot_dimension_numbers<[1], [0], [0], [1], [0, 0, 1, 1], [], []>} : vector<8x32xf32>, vector<32x256xf32>, vector<8x256xf32> -> vector<8x256xf32>
    %c0_76 = arith.constant 0 : index
    %c0_77 = arith.constant 0 : index
    %476 = vector.load %arg12[%c0_76, %c0_77] : memref<1x256xf32, #tpu.memory_space<vmem>>, vector<1x256xf32>
    %477 = vector.broadcast %476 : vector<1x256xf32> to vector<8x256xf32>
    %478 = arith.addf %475, %477 : vector<8x256xf32>
    %cst_78 = arith.constant 0.000000e+00 : f32
    %479 = vector.broadcast %cst_78 : f32 to vector<1x64xf32>
    %480 = vector.extract_strided_slice %478 {offsets = [0, 0], sizes = [1, 256], strides = [1, 1]} : vector<8x256xf32> to vector<1x256xf32>
    %481 = arith.truncf %479 : vector<1x64xf32> to vector<1x64xbf16>
    %cst_79 = arith.constant dense<0.000000e+00> : vector<1x256xf32>
    %482 = tpu.matmul %481, %473, %cst_79 {dimension_numbers = #tpu.dot_dimension_numbers<[1], [0], [0], [1], [0, 0, 1, 1], [], []>} : vector<1x64xbf16>, vector<64x256xbf16>, vector<1x256xf32> -> vector<1x256xf32>
    %483 = arith.addf %480, %482 : vector<1x256xf32>
    %484 = arith.negf %483 : vector<1x256xf32>
    %485 = math.exp %484 : vector<1x256xf32>
    %cst_80 = arith.constant 1.000000e+00 : f32
    %486 = vector.broadcast %cst_80 : f32 to vector<1x256xf32>
    %487 = arith.addf %486, %485 : vector<1x256xf32>
    %488 = arith.divf %486, %487 : vector<1x256xf32>
    %489 = vector.extract_strided_slice %488 {offsets = [0, 0], sizes = [1, 64], strides = [1, 1]} : vector<1x256xf32> to vector<1x64xf32>
    %490 = vector.extract_strided_slice %488 {offsets = [0, 64], sizes = [1, 64], strides = [1, 1]} : vector<1x256xf32> to vector<1x64xf32>
    %491 = vector.extract_strided_slice %488 {offsets = [0, 192], sizes = [1, 64], strides = [1, 1]} : vector<1x256xf32> to vector<1x64xf32>
    %492 = vector.extract_strided_slice %483 {offsets = [0, 128], sizes = [1, 64], strides = [1, 1]} : vector<1x256xf32> to vector<1x64xf32>
    %493 = math.tanh %492 : vector<1x64xf32>
    %494 = arith.mulf %490, %479 : vector<1x64xf32>
    %495 = arith.mulf %489, %493 : vector<1x64xf32>
    %496 = arith.addf %494, %495 : vector<1x64xf32>
    %497 = math.tanh %496 : vector<1x64xf32>
    %498 = arith.mulf %491, %497 : vector<1x64xf32>
    %499 = vector.extract_strided_slice %478 {offsets = [1, 0], sizes = [1, 256], strides = [1, 1]} : vector<8x256xf32> to vector<1x256xf32>
    %500 = arith.truncf %498 : vector<1x64xf32> to vector<1x64xbf16>
    %cst_81 = arith.constant dense<0.000000e+00> : vector<1x256xf32>
    %501 = tpu.matmul %500, %473, %cst_81 {dimension_numbers = #tpu.dot_dimension_numbers<[1], [0], [0], [1], [0, 0, 1, 1], [], []>} : vector<1x64xbf16>, vector<64x256xbf16>, vector<1x256xf32> -> vector<1x256xf32>
    %502 = arith.addf %499, %501 : vector<1x256xf32>
    %503 = arith.negf %502 : vector<1x256xf32>
    %504 = math.exp %503 : vector<1x256xf32>
    %cst_82 = arith.constant 1.000000e+00 : f32
    %505 = vector.broadcast %cst_82 : f32 to vector<1x256xf32>
    %506 = arith.addf %505, %504 : vector<1x256xf32>
    %507 = arith.divf %505, %506 : vector<1x256xf32>
    %508 = vector.extract_strided_slice %507 {offsets = [0, 0], sizes = [1, 64], strides = [1, 1]} : vector<1x256xf32> to vector<1x64xf32>
    %509 = vector.extract_strided_slice %507 {offsets = [0, 64], sizes = [1, 64], strides = [1, 1]} : vector<1x256xf32> to vector<1x64xf32>
    %510 = vector.extract_strided_slice %507 {offsets = [0, 192], sizes = [1, 64], strides = [1, 1]} : vector<1x256xf32> to vector<1x64xf32>
    %511 = vector.extract_strided_slice %502 {offsets = [0, 128], sizes = [1, 64], strides = [1, 1]} : vector<1x256xf32> to vector<1x64xf32>
    %512 = math.tanh %511 : vector<1x64xf32>
    %513 = arith.mulf %509, %496 : vector<1x64xf32>
    %514 = arith.mulf %508, %512 : vector<1x64xf32>
    %515 = arith.addf %513, %514 : vector<1x64xf32>
    %516 = math.tanh %515 : vector<1x64xf32>
    %517 = arith.mulf %510, %516 : vector<1x64xf32>
    %518 = vector.extract_strided_slice %478 {offsets = [2, 0], sizes = [1, 256], strides = [1, 1]} : vector<8x256xf32> to vector<1x256xf32>
    %519 = arith.truncf %517 : vector<1x64xf32> to vector<1x64xbf16>
    %cst_83 = arith.constant dense<0.000000e+00> : vector<1x256xf32>
    %520 = tpu.matmul %519, %473, %cst_83 {dimension_numbers = #tpu.dot_dimension_numbers<[1], [0], [0], [1], [0, 0, 1, 1], [], []>} : vector<1x64xbf16>, vector<64x256xbf16>, vector<1x256xf32> -> vector<1x256xf32>
    %521 = arith.addf %518, %520 : vector<1x256xf32>
    %522 = arith.negf %521 : vector<1x256xf32>
    %523 = math.exp %522 : vector<1x256xf32>
    %cst_84 = arith.constant 1.000000e+00 : f32
    %524 = vector.broadcast %cst_84 : f32 to vector<1x256xf32>
    %525 = arith.addf %524, %523 : vector<1x256xf32>
    %526 = arith.divf %524, %525 : vector<1x256xf32>
    %527 = vector.extract_strided_slice %526 {offsets = [0, 0], sizes = [1, 64], strides = [1, 1]} : vector<1x256xf32> to vector<1x64xf32>
    %528 = vector.extract_strided_slice %526 {offsets = [0, 64], sizes = [1, 64], strides = [1, 1]} : vector<1x256xf32> to vector<1x64xf32>
    %529 = vector.extract_strided_slice %526 {offsets = [0, 192], sizes = [1, 64], strides = [1, 1]} : vector<1x256xf32> to vector<1x64xf32>
    %530 = vector.extract_strided_slice %521 {offsets = [0, 128], sizes = [1, 64], strides = [1, 1]} : vector<1x256xf32> to vector<1x64xf32>
    %531 = math.tanh %530 : vector<1x64xf32>
    %532 = arith.mulf %528, %515 : vector<1x64xf32>
    %533 = arith.mulf %527, %531 : vector<1x64xf32>
    %534 = arith.addf %532, %533 : vector<1x64xf32>
    %535 = math.tanh %534 : vector<1x64xf32>
    %536 = arith.mulf %529, %535 : vector<1x64xf32>
    %537 = vector.extract_strided_slice %478 {offsets = [3, 0], sizes = [1, 256], strides = [1, 1]} : vector<8x256xf32> to vector<1x256xf32>
    %538 = arith.truncf %536 : vector<1x64xf32> to vector<1x64xbf16>
    %cst_85 = arith.constant dense<0.000000e+00> : vector<1x256xf32>
    %539 = tpu.matmul %538, %473, %cst_85 {dimension_numbers = #tpu.dot_dimension_numbers<[1], [0], [0], [1], [0, 0, 1, 1], [], []>} : vector<1x64xbf16>, vector<64x256xbf16>, vector<1x256xf32> -> vector<1x256xf32>
    %540 = arith.addf %537, %539 : vector<1x256xf32>
    %541 = arith.negf %540 : vector<1x256xf32>
    %542 = math.exp %541 : vector<1x256xf32>
    %cst_86 = arith.constant 1.000000e+00 : f32
    %543 = vector.broadcast %cst_86 : f32 to vector<1x256xf32>
    %544 = arith.addf %543, %542 : vector<1x256xf32>
    %545 = arith.divf %543, %544 : vector<1x256xf32>
    %546 = vector.extract_strided_slice %545 {offsets = [0, 0], sizes = [1, 64], strides = [1, 1]} : vector<1x256xf32> to vector<1x64xf32>
    %547 = vector.extract_strided_slice %545 {offsets = [0, 64], sizes = [1, 64], strides = [1, 1]} : vector<1x256xf32> to vector<1x64xf32>
    %548 = vector.extract_strided_slice %545 {offsets = [0, 192], sizes = [1, 64], strides = [1, 1]} : vector<1x256xf32> to vector<1x64xf32>
    %549 = vector.extract_strided_slice %540 {offsets = [0, 128], sizes = [1, 64], strides = [1, 1]} : vector<1x256xf32> to vector<1x64xf32>
    %550 = math.tanh %549 : vector<1x64xf32>
    %551 = arith.mulf %547, %534 : vector<1x64xf32>
    %552 = arith.mulf %546, %550 : vector<1x64xf32>
    %553 = arith.addf %551, %552 : vector<1x64xf32>
    %554 = math.tanh %553 : vector<1x64xf32>
    %555 = arith.mulf %548, %554 : vector<1x64xf32>
    %556 = vector.extract_strided_slice %478 {offsets = [4, 0], sizes = [1, 256], strides = [1, 1]} : vector<8x256xf32> to vector<1x256xf32>
    %557 = arith.truncf %555 : vector<1x64xf32> to vector<1x64xbf16>
    %cst_87 = arith.constant dense<0.000000e+00> : vector<1x256xf32>
    %558 = tpu.matmul %557, %473, %cst_87 {dimension_numbers = #tpu.dot_dimension_numbers<[1], [0], [0], [1], [0, 0, 1, 1], [], []>} : vector<1x64xbf16>, vector<64x256xbf16>, vector<1x256xf32> -> vector<1x256xf32>
    %559 = arith.addf %556, %558 : vector<1x256xf32>
    %560 = arith.negf %559 : vector<1x256xf32>
    %561 = math.exp %560 : vector<1x256xf32>
    %cst_88 = arith.constant 1.000000e+00 : f32
    %562 = vector.broadcast %cst_88 : f32 to vector<1x256xf32>
    %563 = arith.addf %562, %561 : vector<1x256xf32>
    %564 = arith.divf %562, %563 : vector<1x256xf32>
    %565 = vector.extract_strided_slice %564 {offsets = [0, 0], sizes = [1, 64], strides = [1, 1]} : vector<1x256xf32> to vector<1x64xf32>
    %566 = vector.extract_strided_slice %564 {offsets = [0, 64], sizes = [1, 64], strides = [1, 1]} : vector<1x256xf32> to vector<1x64xf32>
    %567 = vector.extract_strided_slice %564 {offsets = [0, 192], sizes = [1, 64], strides = [1, 1]} : vector<1x256xf32> to vector<1x64xf32>
    %568 = vector.extract_strided_slice %559 {offsets = [0, 128], sizes = [1, 64], strides = [1, 1]} : vector<1x256xf32> to vector<1x64xf32>
    %569 = math.tanh %568 : vector<1x64xf32>
    %570 = arith.mulf %566, %553 : vector<1x64xf32>
    %571 = arith.mulf %565, %569 : vector<1x64xf32>
    %572 = arith.addf %570, %571 : vector<1x64xf32>
    %573 = math.tanh %572 : vector<1x64xf32>
    %574 = arith.mulf %567, %573 : vector<1x64xf32>
    %575 = vector.extract_strided_slice %478 {offsets = [5, 0], sizes = [1, 256], strides = [1, 1]} : vector<8x256xf32> to vector<1x256xf32>
    %576 = arith.truncf %574 : vector<1x64xf32> to vector<1x64xbf16>
    %cst_89 = arith.constant dense<0.000000e+00> : vector<1x256xf32>
    %577 = tpu.matmul %576, %473, %cst_89 {dimension_numbers = #tpu.dot_dimension_numbers<[1], [0], [0], [1], [0, 0, 1, 1], [], []>} : vector<1x64xbf16>, vector<64x256xbf16>, vector<1x256xf32> -> vector<1x256xf32>
    %578 = arith.addf %575, %577 : vector<1x256xf32>
    %579 = arith.negf %578 : vector<1x256xf32>
    %580 = math.exp %579 : vector<1x256xf32>
    %cst_90 = arith.constant 1.000000e+00 : f32
    %581 = vector.broadcast %cst_90 : f32 to vector<1x256xf32>
    %582 = arith.addf %581, %580 : vector<1x256xf32>
    %583 = arith.divf %581, %582 : vector<1x256xf32>
    %584 = vector.extract_strided_slice %583 {offsets = [0, 0], sizes = [1, 64], strides = [1, 1]} : vector<1x256xf32> to vector<1x64xf32>
    %585 = vector.extract_strided_slice %583 {offsets = [0, 64], sizes = [1, 64], strides = [1, 1]} : vector<1x256xf32> to vector<1x64xf32>
    %586 = vector.extract_strided_slice %583 {offsets = [0, 192], sizes = [1, 64], strides = [1, 1]} : vector<1x256xf32> to vector<1x64xf32>
    %587 = vector.extract_strided_slice %578 {offsets = [0, 128], sizes = [1, 64], strides = [1, 1]} : vector<1x256xf32> to vector<1x64xf32>
    %588 = math.tanh %587 : vector<1x64xf32>
    %589 = arith.mulf %585, %572 : vector<1x64xf32>
    %590 = arith.mulf %584, %588 : vector<1x64xf32>
    %591 = arith.addf %589, %590 : vector<1x64xf32>
    %592 = math.tanh %591 : vector<1x64xf32>
    %593 = arith.mulf %586, %592 : vector<1x64xf32>
    %594 = vector.extract_strided_slice %478 {offsets = [6, 0], sizes = [1, 256], strides = [1, 1]} : vector<8x256xf32> to vector<1x256xf32>
    %595 = arith.truncf %593 : vector<1x64xf32> to vector<1x64xbf16>
    %cst_91 = arith.constant dense<0.000000e+00> : vector<1x256xf32>
    %596 = tpu.matmul %595, %473, %cst_91 {dimension_numbers = #tpu.dot_dimension_numbers<[1], [0], [0], [1], [0, 0, 1, 1], [], []>} : vector<1x64xbf16>, vector<64x256xbf16>, vector<1x256xf32> -> vector<1x256xf32>
    %597 = arith.addf %594, %596 : vector<1x256xf32>
    %598 = arith.negf %597 : vector<1x256xf32>
    %599 = math.exp %598 : vector<1x256xf32>
    %cst_92 = arith.constant 1.000000e+00 : f32
    %600 = vector.broadcast %cst_92 : f32 to vector<1x256xf32>
    %601 = arith.addf %600, %599 : vector<1x256xf32>
    %602 = arith.divf %600, %601 : vector<1x256xf32>
    %603 = vector.extract_strided_slice %602 {offsets = [0, 0], sizes = [1, 64], strides = [1, 1]} : vector<1x256xf32> to vector<1x64xf32>
    %604 = vector.extract_strided_slice %602 {offsets = [0, 64], sizes = [1, 64], strides = [1, 1]} : vector<1x256xf32> to vector<1x64xf32>
    %605 = vector.extract_strided_slice %602 {offsets = [0, 192], sizes = [1, 64], strides = [1, 1]} : vector<1x256xf32> to vector<1x64xf32>
    %606 = vector.extract_strided_slice %597 {offsets = [0, 128], sizes = [1, 64], strides = [1, 1]} : vector<1x256xf32> to vector<1x64xf32>
    %607 = math.tanh %606 : vector<1x64xf32>
    %608 = arith.mulf %604, %591 : vector<1x64xf32>
    %609 = arith.mulf %603, %607 : vector<1x64xf32>
    %610 = arith.addf %608, %609 : vector<1x64xf32>
    %611 = math.tanh %610 : vector<1x64xf32>
    %612 = arith.mulf %605, %611 : vector<1x64xf32>
    %613 = vector.extract_strided_slice %478 {offsets = [7, 0], sizes = [1, 256], strides = [1, 1]} : vector<8x256xf32> to vector<1x256xf32>
    %614 = arith.truncf %612 : vector<1x64xf32> to vector<1x64xbf16>
    %cst_93 = arith.constant dense<0.000000e+00> : vector<1x256xf32>
    %615 = tpu.matmul %614, %473, %cst_93 {dimension_numbers = #tpu.dot_dimension_numbers<[1], [0], [0], [1], [0, 0, 1, 1], [], []>} : vector<1x64xbf16>, vector<64x256xbf16>, vector<1x256xf32> -> vector<1x256xf32>
    %616 = arith.addf %613, %615 : vector<1x256xf32>
    %617 = arith.negf %616 : vector<1x256xf32>
    %618 = math.exp %617 : vector<1x256xf32>
    %cst_94 = arith.constant 1.000000e+00 : f32
    %619 = vector.broadcast %cst_94 : f32 to vector<1x256xf32>
    %620 = arith.addf %619, %618 : vector<1x256xf32>
    %621 = arith.divf %619, %620 : vector<1x256xf32>
    %622 = vector.extract_strided_slice %621 {offsets = [0, 0], sizes = [1, 64], strides = [1, 1]} : vector<1x256xf32> to vector<1x64xf32>
    %623 = vector.extract_strided_slice %621 {offsets = [0, 64], sizes = [1, 64], strides = [1, 1]} : vector<1x256xf32> to vector<1x64xf32>
    %624 = vector.extract_strided_slice %621 {offsets = [0, 192], sizes = [1, 64], strides = [1, 1]} : vector<1x256xf32> to vector<1x64xf32>
    %625 = vector.extract_strided_slice %616 {offsets = [0, 128], sizes = [1, 64], strides = [1, 1]} : vector<1x256xf32> to vector<1x64xf32>
    %626 = math.tanh %625 : vector<1x64xf32>
    %627 = arith.mulf %623, %610 : vector<1x64xf32>
    %628 = arith.mulf %622, %626 : vector<1x64xf32>
    %629 = arith.addf %627, %628 : vector<1x64xf32>
    %630 = math.tanh %629 : vector<1x64xf32>
    %631 = arith.mulf %624, %630 : vector<1x64xf32>
    %632 = tpu.concatenate %498, %517, %536, %555, %574, %593, %612, %631 in 0 : vector<1x64xf32>, vector<1x64xf32>, vector<1x64xf32>, vector<1x64xf32>, vector<1x64xf32>, vector<1x64xf32>, vector<1x64xf32>, vector<1x64xf32> -> vector<8x64xf32>
    %c0_95 = arith.constant 0 : index
    %c0_96 = arith.constant 0 : index
    %633 = vector.load %arg13[%c0_95, %c0_96] : memref<1x64xf32, #tpu.memory_space<vmem>>, vector<1x64xf32>
    %634 = vector.broadcast %633 : vector<1x64xf32> to vector<8x64xf32>
    %635 = arith.mulf %632, %634 : vector<8x64xf32>
    %cst_97 = arith.constant dense<0.000000e+00> : vector<8xf32>
    %636 = vector.multi_reduction <add>, %635, %cst_97 [1] : vector<8x64xf32> to vector<8xf32>
    %637 = vector.shape_cast %636 : vector<8xf32> to vector<8x1xf32>
    %c0_98 = arith.constant 0 : index
    %c0_99 = arith.constant 0 : index
    %638 = vector.load %arg14[%c0_98, %c0_99] : memref<1x1xf32, #tpu.memory_space<vmem>>, vector<1x1xf32>
    %639 = vector.broadcast %638 : vector<1x1xf32> to vector<8x1xf32>
    %640 = arith.addf %637, %639 : vector<8x1xf32>
    %c0_100 = arith.constant 0 : index
    %c0_101 = arith.constant 0 : index
    %641 = vector.load %arg15[%c0_100, %c0_101] : memref<8x1xf32, #tpu.memory_space<vmem>>, vector<8x1xf32>
    tpu.vector_store %arg15[%c0_100, %c0_101], %640 {strides = array<i32>} : memref<8x1xf32, #tpu.memory_space<vmem>>, vector<8x1xf32>,
    return
  }
}

</mosaic_0001>

<llo_original>
// kernel: tpu_custom_call.1
$region0: #{tpu_custom_call.1}
  #allocation0 [shape = 'u32[]', space=smem, size = 0x4, offset = 0x4, fixed_abs, tag = 'smem constant byte address 0x4 - core index']
  #allocation1 [shape = 'u32[144,128]{1,0:T(1,128)}', space=vmem, size = 0x12000, scoped, tag = 'internal scratch']
  #allocation2 [shape = 'f32[1,1]{1,0:T(1,128)S(1)}', space=vmem, size = 0x200, scoped, tag = 'scoped memory for tpu_custom_call.1']
  %s0 = inlined_call_operand.vmem [shape: f32[8,1], index: 0, kind: input, shape index: {}]
  %s1 = inlined_call_operand.vmem [shape: f32[1,256], index: 1, kind: input, shape index: {}]
  %s2 = inlined_call_operand.hbm [shape: bf16[64,256], index: 2, kind: input, shape index: {}]
  %s3 = inlined_call_operand.vmem [shape: f32[1,256], index: 3, kind: input, shape index: {}]
  %s4 = inlined_call_operand.hbm [shape: f32[64,128], index: 4, kind: input, shape index: {}]
  %s5 = inlined_call_operand.hbm [shape: bf16[32,128], index: 5, kind: input, shape index: {}]
  %s6 = inlined_call_operand.vmem [shape: f32[1,128], index: 6, kind: input, shape index: {}]
  %s7 = inlined_call_operand.vmem [shape: f32[32,128], index: 7, kind: input, shape index: {}]
  %s8 = inlined_call_operand.hbm [shape: bf16[32,128], index: 8, kind: input, shape index: {}]
  %s9 = inlined_call_operand.vmem [shape: f32[1,128], index: 9, kind: input, shape index: {}]
  %s10 = inlined_call_operand.hbm [shape: f32[32,256], index: 10, kind: input, shape index: {}]
  %s11 = inlined_call_operand.hbm [shape: bf16[64,256], index: 11, kind: input, shape index: {}]
  %s12 = inlined_call_operand.vmem [shape: f32[1,256], index: 12, kind: input, shape index: {}]
  %s13 = inlined_call_operand.vmem [shape: f32[1,64], index: 13, kind: input, shape index: {}]
  %s14 = inlined_call_operand.<no memory space> [shape: f32[1,1], index: 14, kind: input, shape index: {}]
  %s15 = inlined_call_operand.vmem [shape: f32[8,1], index: 15, kind: output, shape index: {}]
  %s16 = sld [smem:[#allocation0]]
  $region94: #{tpu_custom_call.1} parent=0
    _
  %s18 = ssub.s32 1, %s16
  %s19 = scalar_select 0, %s18, %s16
  %v20 = vstv %s14
  %21 = vst [vmem:[#allocation2] sm:$0x1] %v20
  $region1: #{tpu_custom_call.1} parent=0
    #allocation3 [shape = 'u8[32768]{0}', space=vmem, size = 0x8000, scoped, tag = 'input window, operand 2, single buffered']
    #allocation4 [shape = 's32[1]{0}', space=sflag, size = 0x4, scoped, tag = 'scoped memory for tpu_custom_call.1']
    #allocation5 [shape = 'u8[32768]{0}', space=vmem, size = 0x8000, scoped, tag = 'input window, operand 4, single buffered']
    #allocation6 [shape = 's32[1]{0}', space=sflag, size = 0x4, scoped, tag = 'scoped memory for tpu_custom_call.1']
    #allocation7 [shape = 'u8[8192]{0}', space=vmem, size = 0x2000, scoped, tag = 'input window, operand 5, single buffered']
    #allocation8 [shape = 'u8[8192]{0}', space=vmem, size = 0x2000, scoped, tag = 'input window, operand 8, single buffered']
    #allocation9 [shape = 's32[1]{0}', space=sflag, size = 0x4, scoped, tag = 'scoped memory for tpu_custom_call.1']
    #allocation10 [shape = 'u8[32768]{0}', space=vmem, size = 0x8000, scoped, tag = 'input window, operand 10, single buffered']
    #allocation11 [shape = 'u8[32768]{0}', space=vmem, size = 0x8000, scoped, tag = 'input window, operand 11, single buffered']
    #allocation12 [shape = 's32[1]{0}', space=sflag, size = 0x4, scoped, tag = 'scoped memory for tpu_custom_call.1']
    %22 = vsyncpa [#allocation4], 0
    %23 = vsyncpa [#allocation6], 0
    %24 = vsyncpa [#allocation9], 0
    %25 = vsyncpa [#allocation12], 0
    // Predicated region
    $region2: #{tpu_custom_call.1} parent=1 // pred_check
      _
    $region3: #{tpu_custom_call.1} parent=1 // pred_check_branch
      %27 = sbr.rel (0) target = $region5
    $region4: #{tpu_custom_call.1} parent=1 // pred_region
      _
    $region5: #{tpu_custom_call.1} parent=1 // pred_fallthru
      _
    // Predicated region
    $region6: #{tpu_custom_call.1} parent=1 // pred_check
      _
    $region7: #{tpu_custom_call.1} parent=1 // pred_check_branch
      %29 = sbr.rel (0) target = $region9
    $region8: #{tpu_custom_call.1} parent=1 // pred_region
      _
    $region9: #{tpu_custom_call.1} parent=1 // pred_fallthru
      _
    // Predicated region
    $region10: #{tpu_custom_call.1} parent=1 // pred_check
      _
    $region11: #{tpu_custom_call.1} parent=1 // pred_check_branch
      %31 = sbr.rel (0) target = $region13
    $region12: #{tpu_custom_call.1} parent=1 // pred_region
      %s33 = ssub.s32 1024, 1024
      %34 = vsyncadd [#allocation4], %s33
      %s35 = sshll.u32 [#allocation3], 4
      %s36 = int_to_ptr.vmem [resolvable:$true] %s35
      %41 = dma.hbm_to_vmem [thread:$0]  %s2, 1024, %s36, [#allocation4], 128, 128, 8
    $region13: #{tpu_custom_call.1} parent=1 // pred_fallthru
      _
    // Predicated region
    $region14: #{tpu_custom_call.1} parent=1 // pred_check
      _
    $region15: #{tpu_custom_call.1} parent=1 // pred_check_branch
      %43 = sbr.rel (0) target = $region17
    $region16: #{tpu_custom_call.1} parent=1 // pred_region
      _
    $region17: #{tpu_custom_call.1} parent=1 // pred_fallthru
      _
    // Predicated region
    $region18: #{tpu_custom_call.1} parent=1 // pred_check
      _
    $region19: #{tpu_custom_call.1} parent=1 // pred_check_branch
      %45 = sbr.rel (0) target = $region21
    $region20: #{tpu_custom_call.1} parent=1 // pred_region
      %s47 = ssub.s32 1024, 1024
      %48 = vsyncadd [#allocation6], %s47
      %s49 = sshll.u32 [#allocation5], 4
      %s50 = int_to_ptr.vmem [resolvable:$true] %s49
      %55 = dma.hbm_to_vmem [thread:$0]  %s4, 1024, %s50, [#allocation6], 128, 128, 8
    $region21: #{tpu_custom_call.1} parent=1 // pred_fallthru
      _
    // Predicated region
    $region22: #{tpu_custom_call.1} parent=1 // pred_check
      _
    $region23: #{tpu_custom_call.1} parent=1 // pred_check_branch
      %57 = sbr.rel (0) target = $region25
    $region24: #{tpu_custom_call.1} parent=1 // pred_region
      %s59 = ssub.s32 256, 256
      %60 = vsyncadd [#allocation6], %s59
      %s61 = sshll.u32 [#allocation7], 4
      %s62 = int_to_ptr.vmem [resolvable:$true] %s61
      %67 = dma.hbm_to_vmem [thread:$0]  %s5, 256, %s62, [#allocation6], 64, 64, 4
    $region25: #{tpu_custom_call.1} parent=1 // pred_fallthru
      _
    // Predicated region
    $region26: #{tpu_custom_call.1} parent=1 // pred_check
      _
    $region27: #{tpu_custom_call.1} parent=1 // pred_check_branch
      %69 = sbr.rel (0) target = $region29
    $region28: #{tpu_custom_call.1} parent=1 // pred_region
      _
    $region29: #{tpu_custom_call.1} parent=1 // pred_fallthru
      _
    // Predicated region
    $region30: #{tpu_custom_call.1} parent=1 // pred_check
      _
    $region31: #{tpu_custom_call.1} parent=1 // pred_check_branch
      %71 = sbr.rel (0) target = $region33
    $region32: #{tpu_custom_call.1} parent=1 // pred_region
      _
    $region33: #{tpu_custom_call.1} parent=1 // pred_fallthru
      _
    // Predicated region
    $region34: #{tpu_custom_call.1} parent=1 // pred_check
      _
    $region35: #{tpu_custom_call.1} parent=1 // pred_check_branch
      %73 = sbr.rel (0) target = $region37
    $region36: #{tpu_custom_call.1} parent=1 // pred_region
      %s75 = ssub.s32 256, 256
      %76 = vsyncadd [#allocation9], %s75
      %s77 = sshll.u32 [#allocation8], 4
      %s78 = int_to_ptr.vmem [resolvable:$true] %s77
      %83 = dma.hbm_to_vmem [thread:$0]  %s8, 256, %s78, [#allocation9], 64, 64, 4
    $region37: #{tpu_custom_call.1} parent=1 // pred_fallthru
      _
    // Predicated region
    $region38: #{tpu_custom_call.1} parent=1 // pred_check
      _
    $region39: #{tpu_custom_call.1} parent=1 // pred_check_branch
      %85 = sbr.rel (0) target = $region41
    $region40: #{tpu_custom_call.1} parent=1 // pred_region
      _
    $region41: #{tpu_custom_call.1} parent=1 // pred_fallthru
      _
    // Predicated region
    $region42: #{tpu_custom_call.1} parent=1 // pred_check
      _
    $region43: #{tpu_custom_call.1} parent=1 // pred_check_branch
      %87 = sbr.rel (0) target = $region45
    $region44: #{tpu_custom_call.1} parent=1 // pred_region
      %s89 = ssub.s32 1024, 1024
      %90 = vsyncadd [#allocation9], %s89
      %s91 = sshll.u32 [#allocation10], 4
      %s92 = int_to_ptr.vmem [resolvable:$true] %s91
      %97 = dma.hbm_to_vmem [thread:$0]  %s10, 1024, %s92, [#allocation9], 256, 256, 16
    $region45: #{tpu_custom_call.1} parent=1 // pred_fallthru
      _
    // Predicated region
    $region46: #{tpu_custom_call.1} parent=1 // pred_check
      _
    $region47: #{tpu_custom_call.1} parent=1 // pred_check_branch
      %99 = sbr.rel (0) target = $region49
    $region48: #{tpu_custom_call.1} parent=1 // pred_region
      %s101 = ssub.s32 1024, 1024
      %102 = vsyncadd [#allocation12], %s101
      %s103 = sshll.u32 [#allocation11], 4
      %s104 = int_to_ptr.vmem [resolvable:$true] %s103
      %109 = dma.hbm_to_vmem [thread:$0]  %s11, 1024, %s104, [#allocation12], 128, 128, 8
    $region49: #{tpu_custom_call.1} parent=1 // pred_fallthru
      _
    // Predicated region
    $region50: #{tpu_custom_call.1} parent=1 // pred_check
      _
    $region51: #{tpu_custom_call.1} parent=1 // pred_check_branch
      %111 = sbr.rel (0) target = $region53
    $region52: #{tpu_custom_call.1} parent=1 // pred_region
      _
    $region53: #{tpu_custom_call.1} parent=1 // pred_fallthru
      _
    // Predicated region
    $region54: #{tpu_custom_call.1} parent=1 // pred_check
      _
    $region55: #{tpu_custom_call.1} parent=1 // pred_check_branch
      %113 = sbr.rel (0) target = $region57
    $region56: #{tpu_custom_call.1} parent=1 // pred_region
      _
    $region57: #{tpu_custom_call.1} parent=1 // pred_fallthru
      _
    // Predicated region
    $region58: #{tpu_custom_call.1} parent=1 // pred_check
      _
    $region59: #{tpu_custom_call.1} parent=1 // pred_check_branch
      %115 = sbr.rel (0) target = $region61
    $region60: #{tpu_custom_call.1} parent=1 // pred_region
      _
    $region61: #{tpu_custom_call.1} parent=1 // pred_fallthru
      _
    // Predicated region
    $region62: #{tpu_custom_call.1} parent=1 // pred_check
      _
    $region63: #{tpu_custom_call.1} parent=1 // pred_check_branch
      %117 = sbr.rel (0) target = $region65
    $region64: #{tpu_custom_call.1} parent=1 // pred_region
      %118 = dma.done [#allocation4], 1024
    $region65: #{tpu_custom_call.1} parent=1 // pred_fallthru
      _
    // Predicated region
    $region66: #{tpu_custom_call.1} parent=1 // pred_check
      _
    $region67: #{tpu_custom_call.1} parent=1 // pred_check_branch
      %120 = sbr.rel (0) target = $region69
    $region68: #{tpu_custom_call.1} parent=1 // pred_region
      %121 = dma.done [#allocation6], 1024
    $region69: #{tpu_custom_call.1} parent=1 // pred_fallthru
      _
    // Predicated region
    $region70: #{tpu_custom_call.1} parent=1 // pred_check
      _
    $region71: #{tpu_custom_call.1} parent=1 // pred_check_branch
      %123 = sbr.rel (0) target = $region73
    $region72: #{tpu_custom_call.1} parent=1 // pred_region
      %124 = dma.done [#allocation6], 256
    $region73: #{tpu_custom_call.1} parent=1 // pred_fallthru
      _
    // Predicated region
    $region74: #{tpu_custom_call.1} parent=1 // pred_check
      _
    $region75: #{tpu_custom_call.1} parent=1 // pred_check_branch
      %126 = sbr.rel (0) target = $region77
    $region76: #{tpu_custom_call.1} parent=1 // pred_region
      %127 = dma.done [#allocation9], 256
    $region77: #{tpu_custom_call.1} parent=1 // pred_fallthru
      _
    // Predicated region
    $region78: #{tpu_custom_call.1} parent=1 // pred_check
      _
    $region79: #{tpu_custom_call.1} parent=1 // pred_check_branch
      %129 = sbr.rel (0) target = $region81
    $region80: #{tpu_custom_call.1} parent=1 // pred_region
      %130 = dma.done [#allocation9], 1024
    $region81: #{tpu_custom_call.1} parent=1 // pred_fallthru
      _
    // Predicated region
    $region82: #{tpu_custom_call.1} parent=1 // pred_check
      _
    $region83: #{tpu_custom_call.1} parent=1 // pred_check_branch
      %132 = sbr.rel (0) target = $region85
    $region84: #{tpu_custom_call.1} parent=1 // pred_region
      %133 = dma.done [#allocation12], 1024
    $region85: #{tpu_custom_call.1} parent=1 // pred_fallthru
      _
    %v135 = vld [vmem:[#allocation3] sm:$0xff]
    %v136 = vld [vmem:[#allocation3 + $0x8] sm:$0xff]
    %v137 = vld [vmem:[#allocation3 + $0x10] sm:$0xff]
    %v138 = vld [vmem:[#allocation3 + $0x18] sm:$0xff]
    %v139 = vld [vmem:[#allocation3 + $0x20] sm:$0xff]
    %v140 = vld [vmem:[#allocation3 + $0x28] sm:$0xff]
    %v141 = vld [vmem:[#allocation3 + $0x30] sm:$0xff]
    %v142 = vld [vmem:[#allocation3 + $0x38] sm:$0xff]
    %v143 = vld [vmem:[%s0] sm:$0xff]
    %v144 = vld [vmem:[%s1] sm:$0x3]
    %146 = vset.pattern.permute.xlu0 0
    %147 = vperm.xlu0 %146, %v143
    %v148 = vpop.permute.xlu0 %147
    %v151 = vlaneseq
    %v152 = vshrl.u32 %v151, 7
    %v153 = vsub.s32 0, %v152
    %v154 = vrot.slane %v144, %v153
    %v155 = vlaneseq
    %v156 = vshrl.u32 %v155, 7
    %v157 = vsub.s32 1, %v156
    %v158 = vrot.slane %v144, %v157
    %v161 = vmul.f32 %v148, %v154
    %v162 = vmul.f32 %v148, %v158
    %v163 = vld [vmem:[%s3] sm:$0x3]
    %v165 = vlaneseq
    %v166 = vshrl.u32 %v165, 7
    %v167 = vsub.s32 0, %v166
    %v168 = vrot.slane %v163, %v167
    %v169 = vlaneseq
    %v170 = vshrl.u32 %v169, 7
    %v171 = vsub.s32 1, %v170
    %v172 = vrot.slane %v163, %v171
    %v175 = vadd.f32 %v161, %v168
    %v176 = vadd.f32 %v162, %v172
    %v185 = vunpack.c.l.b16 %v135
    %v186 = vunpack.c.h.b16 %v135
    %v187 = vunpack.c.l.b16 %v136
    %v188 = vunpack.c.h.b16 %v136
    %v189 = vunpack.c.l.b16 %v137
    %v190 = vunpack.c.h.b16 %v137
    %v191 = vunpack.c.l.b16 %v138
    %v192 = vunpack.c.h.b16 %v138
    %v193 = vunpack.c.l.b16 %v139
    %v194 = vunpack.c.h.b16 %v139
    %v195 = vunpack.c.l.b16 %v140
    %v196 = vunpack.c.h.b16 %v140
    %v197 = vunpack.c.l.b16 %v141
    %v198 = vunpack.c.h.b16 %v141
    %v199 = vunpack.c.l.b16 %v142
    %v200 = vunpack.c.h.b16 %v142
    %v201 = vpack.c.b16 %v187, %v185
    %v202 = vpack.c.b16 %v188, %v186
    %v203 = vpack.c.b16 %v191, %v189
    %v204 = vpack.c.b16 %v192, %v190
    %v205 = vpack.c.b16 %v195, %v193
    %v206 = vpack.c.b16 %v196, %v194
    %v207 = vpack.c.b16 %v199, %v197
    %v208 = vpack.c.b16 %v200, %v198
    %vm217 = vcmask 523264
    %v219 = vsel %vm217, 0, 0
    %221 = vmatprep.subr.bf16.mxu0 %v202
    %222 = vmatpush1.bf16.msra.mxu0 %v201
    %223 = vmatprep.subr.bf16.mxu0 %v204
    %224 = vmatpush1.bf16.msra.mxu0 %v203
    %225 = vmatprep.subr.bf16.mxu0 %v206
    %226 = vmatpush1.bf16.msra.mxu0 %v205
    %227 = vmatprep.subr.bf16.mxu0 %v208
    %228 = vmatpush1.bf16.msra.mxu0 %v207
    %229 = vmatprep.subr.bf16.mxu0 0
    %230 = vmatpush1.bf16.msra.mxu0 0
    %231 = vmatprep.subr.bf16.mxu0 0
    %232 = vmatpush1.bf16.msra.mxu0 0
    %233 = vmatprep.subr.bf16.mxu0 0
    %234 = vmatpush1.bf16.msra.mxu0 0
    %235 = vmatprep.subr.bf16.mxu0 0
    %236 = vmatpush1.bf16.msra.mxu0 0
    %237 = vmatprep.subr.bf16.mxu0 0
    %238 = vmatpush1.bf16.msra.mxu0 0
    %239 = vmatprep.subr.bf16.mxu0 0
    %240 = vmatpush1.bf16.msra.mxu0 0
    %241 = vmatprep.subr.bf16.mxu0 0
    %242 = vmatpush1.bf16.msra.mxu0 0
    %243 = vmatprep.subr.bf16.mxu0 0
    %244 = vmatpush1.bf16.msra.mxu0 0
    %245 = vmatprep.subr.bf16.mxu0 0
    %246 = vmatpush1.bf16.msra.mxu0 0
    %247 = vmatprep.subr.bf16.mxu0 0
    %248 = vmatpush1.bf16.msra.mxu0 0
    %249 = vmatprep.subr.bf16.mxu0 0
    %250 = vmatpush1.bf16.msra.mxu0 0
    %251 = vmatprep.subr.bf16.mxu0 0
    %252 = vmatpush1.bf16.msra.mxu0 0
    %253 = vmatprep.mubr.bf16.mxu0 0
    %254 = vmatmul.mubr.bf16.gmra.mrb[0].mxu0 %v219
    %v255 = vpop.f32.mrb[0].mxu0
    %v256 = vadd.f32 0.0, %v255
    %v257 = vpop.f32.mrb[0].mxu0
    %v258 = vadd.f32 0.0, %v257
    %v259 = vpop.f32.mrb[0].mxu0
    %v260 = vpop.f32.mrb[0].mxu0
    %261 = vdwg.mxu0
    %v262 = vadd.f32 %v175, %v256
    %v263 = vadd.f32 %v176, %v258
    %v264 = vxor.u32 %v262, 2147483648
    %v265 = vxor.u32 %v263, 2147483648
    %v266 = vmul.f32 %v264, 1.442695
    %v267 = vpow.pop %v266
    %v268 = vmul.f32 %v265, 1.442695
    %v269 = vpow.pop %v268
    %v270 = vadd.f32 %v267, 1.0
    %v271 = vadd.f32 %v269, 1.0
    %v272 = vrcp.pop %v270
    %v273 = vmul.f32 1.0, %v272
    %v274 = vrcp.pop %v271
    %v275 = vmul.f32 1.0, %v274
    %v276 = vtanh.pop %v263
    %v277 = vmul.f32 %v273, 0.0
    %v278 = vmul.f32 %v273, %v276
    %280 = vrot.lane.b32.xlu0 %v278, 64
    %v281 = vpop.permute.xlu0 %280
    %v283 = vadd.f32 %v277, %v281
    %v284 = vtanh.pop %v283
    %v285 = vmul.f32 %v275, %v284
    %v286 = vpack.c.bf16 %v285, %v285
    %288 = vrot.lane.b32.xlu0 %v286, 64
    %v289 = vpop.permute.xlu0 %288
    %v291 = vsel %vm217, %v289, 0
    %293 = vmatprep.subr.bf16.mxu0 %v202
    %294 = vmatpush1.bf16.msra.mxu0 %v201
    %295 = vmatprep.subr.bf16.mxu0 %v204
    %296 = vmatpush1.bf16.msra.mxu0 %v203
    %297 = vmatprep.subr.bf16.mxu0 %v206
    %298 = vmatpush1.bf16.msra.mxu0 %v205
    %299 = vmatprep.subr.bf16.mxu0 %v208
    %300 = vmatpush1.bf16.msra.mxu0 %v207
    %301 = vmatprep.subr.bf16.mxu0 0
    %302 = vmatpush1.bf16.msra.mxu0 0
    %303 = vmatprep.subr.bf16.mxu0 0
    %304 = vmatpush1.bf16.msra.mxu0 0
    %305 = vmatprep.subr.bf16.mxu0 0
    %306 = vmatpush1.bf16.msra.mxu0 0
    %307 = vmatprep.subr.bf16.mxu0 0
    %308 = vmatpush1.bf16.msra.mxu0 0
    %309 = vmatprep.subr.bf16.mxu0 0
    %310 = vmatpush1.bf16.msra.mxu0 0
    %311 = vmatprep.subr.bf16.mxu0 0
    %312 = vmatpush1.bf16.msra.mxu0 0
    %313 = vmatprep.subr.bf16.mxu0 0
    %314 = vmatpush1.bf16.msra.mxu0 0
    %315 = vmatprep.subr.bf16.mxu0 0
    %316 = vmatpush1.bf16.msra.mxu0 0
    %317 = vmatprep.subr.bf16.mxu0 0
    %318 = vmatpush1.bf16.msra.mxu0 0
    %319 = vmatprep.subr.bf16.mxu0 0
    %320 = vmatpush1.bf16.msra.mxu0 0
    %321 = vmatprep.subr.bf16.mxu0 0
    %322 = vmatpush1.bf16.msra.mxu0 0
    %323 = vmatprep.subr.bf16.mxu0 0
    %324 = vmatpush1.bf16.msra.mxu0 0
    %325 = vmatprep.mubr.bf16.mxu0 0
    %326 = vmatmul.mubr.bf16.gmra.mrb[0].mxu0 %v291
    %v327 = vpop.f32.mrb[0].mxu0
    %v328 = vadd.f32 0.0, %v327
    %v329 = vpop.f32.mrb[0].mxu0
    %v330 = vadd.f32 0.0, %v329
    %v331 = vpop.f32.mrb[0].mxu0
    %v332 = vpop.f32.mrb[0].mxu0
    %333 = vdwg.mxu0
    %v336 = vrot.slane %v328, 7
    %v337 = vrot.slane %v330, 7
    %v340 = vadd.f32 %v175, %v336
    %v341 = vadd.f32 %v176, %v337
    %v342 = vxor.u32 %v340, 2147483648
    %v343 = vxor.u32 %v341, 2147483648
    %v344 = vmul.f32 %v342, 1.442695
    %v345 = vpow.pop %v344
    %v346 = vmul.f32 %v343, 1.442695
    %v347 = vpow.pop %v346
    %v348 = vadd.f32 %v345, 1.0
    %v349 = vadd.f32 %v347, 1.0
    %v350 = vrcp.pop %v348
    %v351 = vmul.f32 1.0, %v350
    %v352 = vrcp.pop %v349
    %v353 = vmul.f32 1.0, %v352
    %v354 = vtanh.pop %v341
    %v356 = vrot.slane %v283, 7
    %v358 = vmul.f32 %v351, %v356
    %v359 = vmul.f32 %v351, %v354
    %361 = vrot.lane.b32.xlu0 %v359, 64
    %v362 = vpop.permute.xlu0 %361
    %v364 = vadd.f32 %v358, %v362
    %v365 = vtanh.pop %v364
    %v366 = vmul.f32 %v353, %v365
    %v367 = vpack.c.bf16 %v366, %v366
    %v369 = vshrl.u32 %v367, 16
    %371 = vrot.lane.b32.xlu0 %v369, 64
    %v372 = vpop.permute.xlu0 %371
    %v374 = vsel %vm217, %v372, 0
    %376 = vmatprep.subr.bf16.mxu0 %v202
    %377 = vmatpush1.bf16.msra.mxu0 %v201
    %378 = vmatprep.subr.bf16.mxu0 %v204
    %379 = vmatpush1.bf16.msra.mxu0 %v203
    %380 = vmatprep.subr.bf16.mxu0 %v206
    %381 = vmatpush1.bf16.msra.mxu0 %v205
    %382 = vmatprep.subr.bf16.mxu0 %v208
    %383 = vmatpush1.bf16.msra.mxu0 %v207
    %384 = vmatprep.subr.bf16.mxu0 0
    %385 = vmatpush1.bf16.msra.mxu0 0
    %386 = vmatprep.subr.bf16.mxu0 0
    %387 = vmatpush1.bf16.msra.mxu0 0
    %388 = vmatprep.subr.bf16.mxu0 0
    %389 = vmatpush1.bf16.msra.mxu0 0
    %390 = vmatprep.subr.bf16.mxu0 0
    %391 = vmatpush1.bf16.msra.mxu0 0
    %392 = vmatprep.subr.bf16.mxu0 0
    %393 = vmatpush1.bf16.msra.mxu0 0
    %394 = vmatprep.subr.bf16.mxu0 0
    %395 = vmatpush1.bf16.msra.mxu0 0
    %396 = vmatprep.subr.bf16.mxu0 0
    %397 = vmatpush1.bf16.msra.mxu0 0
    %398 = vmatprep.subr.bf16.mxu0 0
    %399 = vmatpush1.bf16.msra.mxu0 0
    %400 = vmatprep.subr.bf16.mxu0 0
    %401 = vmatpush1.bf16.msra.mxu0 0
    %402 = vmatprep.subr.bf16.mxu0 0
    %403 = vmatpush1.bf16.msra.mxu0 0
    %404 = vmatprep.subr.bf16.mxu0 0
    %405 = vmatpush1.bf16.msra.mxu0 0
    %406 = vmatprep.subr.bf16.mxu0 0
    %407 = vmatpush1.bf16.msra.mxu0 0
    %408 = vmatprep.mubr.bf16.mxu0 0
    %409 = vmatmul.mubr.bf16.gmra.mrb[0].mxu0 %v374
    %v410 = vpop.f32.mrb[0].mxu0
    %v411 = vadd.f32 0.0, %v410
    %v412 = vpop.f32.mrb[0].mxu0
    %v413 = vadd.f32 0.0, %v412
    %v414 = vpop.f32.mrb[0].mxu0
    %v415 = vpop.f32.mrb[0].mxu0
    %416 = vdwg.mxu0
    %v419 = vrot.slane %v411, 6
    %v420 = vrot.slane %v413, 6
    %v423 = vadd.f32 %v175, %v419
    %v424 = vadd.f32 %v176, %v420
    %v425 = vxor.u32 %v423, 2147483648
    %v426 = vxor.u32 %v424, 2147483648
    %v427 = vmul.f32 %v425, 1.442695
    %v428 = vpow.pop %v427
    %v429 = vmul.f32 %v426, 1.442695
    %v430 = vpow.pop %v429
    %v431 = vadd.f32 %v428, 1.0
    %v432 = vadd.f32 %v430, 1.0
    %v433 = vrcp.pop %v431
    %v434 = vmul.f32 1.0, %v433
    %v435 = vrcp.pop %v432
    %v436 = vmul.f32 1.0, %v435
    %v437 = vtanh.pop %v424
    %v439 = vrot.slane %v364, 7
    %v441 = vmul.f32 %v434, %v439
    %v442 = vmul.f32 %v434, %v437
    %444 = vrot.lane.b32.xlu0 %v442, 64
    %v445 = vpop.permute.xlu0 %444
    %v447 = vadd.f32 %v441, %v445
    %v448 = vtanh.pop %v447
    %v449 = vmul.f32 %v436, %v448
    %v450 = vpack.c.bf16 %v449, %v449
    %v452 = vrot.slane %v450, 1
    %453 = vrot.lane.b32.xlu0 %v452, 64
    %v454 = vpop.permute.xlu0 %453
    %v456 = vsel %vm217, %v454, 0
    %458 = vmatprep.subr.bf16.mxu0 %v202
    %459 = vmatpush1.bf16.msra.mxu0 %v201
    %460 = vmatprep.subr.bf16.mxu0 %v204
    %461 = vmatpush1.bf16.msra.mxu0 %v203
    %462 = vmatprep.subr.bf16.mxu0 %v206
    %463 = vmatpush1.bf16.msra.mxu0 %v205
    %464 = vmatprep.subr.bf16.mxu0 %v208
    %465 = vmatpush1.bf16.msra.mxu0 %v207
    %466 = vmatprep.subr.bf16.mxu0 0
    %467 = vmatpush1.bf16.msra.mxu0 0
    %468 = vmatprep.subr.bf16.mxu0 0
    %469 = vmatpush1.bf16.msra.mxu0 0
    %470 = vmatprep.subr.bf16.mxu0 0
    %471 = vmatpush1.bf16.msra.mxu0 0
    %472 = vmatprep.subr.bf16.mxu0 0
    %473 = vmatpush1.bf16.msra.mxu0 0
    %474 = vmatprep.subr.bf16.mxu0 0
    %475 = vmatpush1.bf16.msra.mxu0 0
    %476 = vmatprep.subr.bf16.mxu0 0
    %477 = vmatpush1.bf16.msra.mxu0 0
    %478 = vmatprep.subr.bf16.mxu0 0
    %479 = vmatpush1.bf16.msra.mxu0 0
    %480 = vmatprep.subr.bf16.mxu0 0
    %481 = vmatpush1.bf16.msra.mxu0 0
    %482 = vmatprep.subr.bf16.mxu0 0
    %483 = vmatpush1.bf16.msra.mxu0 0
    %484 = vmatprep.subr.bf16.mxu0 0
    %485 = vmatpush1.bf16.msra.mxu0 0
    %486 = vmatprep.subr.bf16.mxu0 0
    %487 = vmatpush1.bf16.msra.mxu0 0
    %488 = vmatprep.subr.bf16.mxu0 0
    %489 = vmatpush1.bf16.msra.mxu0 0
    %490 = vmatprep.mubr.bf16.mxu0 0
    %491 = vmatmul.mubr.bf16.gmra.mrb[0].mxu0 %v456
    %v492 = vpop.f32.mrb[0].mxu0
    %v493 = vadd.f32 0.0, %v492
    %v494 = vpop.f32.mrb[0].mxu0
    %v495 = vadd.f32 0.0, %v494
    %v496 = vpop.f32.mrb[0].mxu0
    %v497 = vpop.f32.mrb[0].mxu0
    %498 = vdwg.mxu0
    %v501 = vrot.slane %v493, 5
    %v502 = vrot.slane %v495, 5
    %v505 = vadd.f32 %v175, %v501
    %v506 = vadd.f32 %v176, %v502
    %v507 = vxor.u32 %v505, 2147483648
    %v508 = vxor.u32 %v506, 2147483648
    %v509 = vmul.f32 %v507, 1.442695
    %v510 = vpow.pop %v509
    %v511 = vmul.f32 %v508, 1.442695
    %v512 = vpow.pop %v511
    %v513 = vadd.f32 %v510, 1.0
    %v514 = vadd.f32 %v512, 1.0
    %v515 = vrcp.pop %v513
    %v516 = vmul.f32 1.0, %v515
    %v517 = vrcp.pop %v514
    %v518 = vmul.f32 1.0, %v517
    %v519 = vtanh.pop %v506
    %v521 = vrot.slane %v447, 7
    %v523 = vmul.f32 %v516, %v521
    %v524 = vmul.f32 %v516, %v519
    %526 = vrot.lane.b32.xlu0 %v524, 64
    %v527 = vpop.permute.xlu0 %526
    %v529 = vadd.f32 %v523, %v527
    %v530 = vtanh.pop %v529
    %v531 = vmul.f32 %v518, %v530
    %v532 = vpack.c.bf16 %v531, %v531
    %v534 = vshrl.u32 %v532, 16
    %v536 = vrot.slane %v534, 1
    %537 = vrot.lane.b32.xlu0 %v536, 64
    %v538 = vpop.permute.xlu0 %537
    %v540 = vsel %vm217, %v538, 0
    %542 = vmatprep.subr.bf16.mxu0 %v202
    %543 = vmatpush1.bf16.msra.mxu0 %v201
    %544 = vmatprep.subr.bf16.mxu0 %v204
    %545 = vmatpush1.bf16.msra.mxu0 %v203
    %546 = vmatprep.subr.bf16.mxu0 %v206
    %547 = vmatpush1.bf16.msra.mxu0 %v205
    %548 = vmatprep.subr.bf16.mxu0 %v208
    %549 = vmatpush1.bf16.msra.mxu0 %v207
    %550 = vmatprep.subr.bf16.mxu0 0
    %551 = vmatpush1.bf16.msra.mxu0 0
    %552 = vmatprep.subr.bf16.mxu0 0
    %553 = vmatpush1.bf16.msra.mxu0 0
    %554 = vmatprep.subr.bf16.mxu0 0
    %555 = vmatpush1.bf16.msra.mxu0 0
    %556 = vmatprep.subr.bf16.mxu0 0
    %557 = vmatpush1.bf16.msra.mxu0 0
    %558 = vmatprep.subr.bf16.mxu0 0
    %559 = vmatpush1.bf16.msra.mxu0 0
    %560 = vmatprep.subr.bf16.mxu0 0
    %561 = vmatpush1.bf16.msra.mxu0 0
    %562 = vmatprep.subr.bf16.mxu0 0
    %563 = vmatpush1.bf16.msra.mxu0 0
    %564 = vmatprep.subr.bf16.mxu0 0
    %565 = vmatpush1.bf16.msra.mxu0 0
    %566 = vmatprep.subr.bf16.mxu0 0
    %567 = vmatpush1.bf16.msra.mxu0 0
    %568 = vmatprep.subr.bf16.mxu0 0
    %569 = vmatpush1.bf16.msra.mxu0 0
    %570 = vmatprep.subr.bf16.mxu0 0
    %571 = vmatpush1.bf16.msra.mxu0 0
    %572 = vmatprep.subr.bf16.mxu0 0
    %573 = vmatpush1.bf16.msra.mxu0 0
    %574 = vmatprep.mubr.bf16.mxu0 0
    %575 = vmatmul.mubr.bf16.gmra.mrb[0].mxu0 %v540
    %v576 = vpop.f32.mrb[0].mxu0
    %v577 = vadd.f32 0.0, %v576
    %v578 = vpop.f32.mrb[0].mxu0
    %v579 = vadd.f32 0.0, %v578
    %v580 = vpop.f32.mrb[0].mxu0
    %v581 = vpop.f32.mrb[0].mxu0
    %582 = vdwg.mxu0
    %v585 = vrot.slane %v577, 4
    %v586 = vrot.slane %v579, 4
    %v589 = vadd.f32 %v175, %v585
    %v590 = vadd.f32 %v176, %v586
    %v591 = vxor.u32 %v589, 2147483648
    %v592 = vxor.u32 %v590, 2147483648
    %v593 = vmul.f32 %v591, 1.442695
    %v594 = vpow.pop %v593
    %v595 = vmul.f32 %v592, 1.442695
    %v596 = vpow.pop %v595
    %v597 = vadd.f32 %v594, 1.0
    %v598 = vadd.f32 %v596, 1.0
    %v599 = vrcp.pop %v597
    %v600 = vmul.f32 1.0, %v599
    %v601 = vrcp.pop %v598
    %v602 = vmul.f32 1.0, %v601
    %v603 = vtanh.pop %v590
    %v605 = vrot.slane %v529, 7
    %v607 = vmul.f32 %v600, %v605
    %v608 = vmul.f32 %v600, %v603
    %610 = vrot.lane.b32.xlu0 %v608, 64
    %v611 = vpop.permute.xlu0 %610
    %v613 = vadd.f32 %v607, %v611
    %v614 = vtanh.pop %v613
    %v615 = vmul.f32 %v602, %v614
    %v616 = vpack.c.bf16 %v615, %v615
    %v618 = vrot.slane %v616, 2
    %619 = vrot.lane.b32.xlu0 %v618, 64
    %v620 = vpop.permute.xlu0 %619
    %v622 = vsel %vm217, %v620, 0
    %624 = vmatprep.subr.bf16.mxu0 %v202
    %625 = vmatpush1.bf16.msra.mxu0 %v201
    %626 = vmatprep.subr.bf16.mxu0 %v204
    %627 = vmatpush1.bf16.msra.mxu0 %v203
    %628 = vmatprep.subr.bf16.mxu0 %v206
    %629 = vmatpush1.bf16.msra.mxu0 %v205
    %630 = vmatprep.subr.bf16.mxu0 %v208
    %631 = vmatpush1.bf16.msra.mxu0 %v207
    %632 = vmatprep.subr.bf16.mxu0 0
    %633 = vmatpush1.bf16.msra.mxu0 0
    %634 = vmatprep.subr.bf16.mxu0 0
    %635 = vmatpush1.bf16.msra.mxu0 0
    %636 = vmatprep.subr.bf16.mxu0 0
    %637 = vmatpush1.bf16.msra.mxu0 0
    %638 = vmatprep.subr.bf16.mxu0 0
    %639 = vmatpush1.bf16.msra.mxu0 0
    %640 = vmatprep.subr.bf16.mxu0 0
    %641 = vmatpush1.bf16.msra.mxu0 0
    %642 = vmatprep.subr.bf16.mxu0 0
    %643 = vmatpush1.bf16.msra.mxu0 0
    %644 = vmatprep.subr.bf16.mxu0 0
    %645 = vmatpush1.bf16.msra.mxu0 0
    %646 = vmatprep.subr.bf16.mxu0 0
    %647 = vmatpush1.bf16.msra.mxu0 0
    %648 = vmatprep.subr.bf16.mxu0 0
    %649 = vmatpush1.bf16.msra.mxu0 0
    %650 = vmatprep.subr.bf16.mxu0 0
    %651 = vmatpush1.bf16.msra.mxu0 0
    %652 = vmatprep.subr.bf16.mxu0 0
    %653 = vmatpush1.bf16.msra.mxu0 0
    %654 = vmatprep.subr.bf16.mxu0 0
    %655 = vmatpush1.bf16.msra.mxu0 0
    %656 = vmatprep.mubr.bf16.mxu0 0
    %657 = vmatmul.mubr.bf16.gmra.mrb[0].mxu0 %v622
    %v658 = vpop.f32.mrb[0].mxu0
    %v659 = vadd.f32 0.0, %v658
    %v660 = vpop.f32.mrb[0].mxu0
    %v661 = vadd.f32 0.0, %v660
    %v662 = vpop.f32.mrb[0].mxu0
    %v663 = vpop.f32.mrb[0].mxu0
    %664 = vdwg.mxu0
    %v667 = vrot.slane %v659, 3
    %v668 = vrot.slane %v661, 3
    %v671 = vadd.f32 %v175, %v667
    %v672 = vadd.f32 %v176, %v668
    %v673 = vxor.u32 %v671, 2147483648
    %v674 = vxor.u32 %v672, 2147483648
    %v675 = vmul.f32 %v673, 1.442695
    %v676 = vpow.pop %v675
    %v677 = vmul.f32 %v674, 1.442695
    %v678 = vpow.pop %v677
    %v679 = vadd.f32 %v676, 1.0
    %v680 = vadd.f32 %v678, 1.0
    %v681 = vrcp.pop %v679
    %v682 = vmul.f32 1.0, %v681
    %v683 = vrcp.pop %v680
    %v684 = vmul.f32 1.0, %v683
    %v685 = vtanh.pop %v672
    %v687 = vrot.slane %v613, 7
    %v689 = vmul.f32 %v682, %v687
    %v690 = vmul.f32 %v682, %v685
    %692 = vrot.lane.b32.xlu0 %v690, 64
    %v693 = vpop.permute.xlu0 %692
    %v695 = vadd.f32 %v689, %v693
    %v696 = vtanh.pop %v695
    %v697 = vmul.f32 %v684, %v696
    %v698 = vpack.c.bf16 %v697, %v697
    %v700 = vshrl.u32 %v698, 16
    %v702 = vrot.slane %v700, 2
    %703 = vrot.lane.b32.xlu0 %v702, 64
    %v704 = vpop.permute.xlu0 %703
    %v706 = vsel %vm217, %v704, 0
    %708 = vmatprep.subr.bf16.mxu0 %v202
    %709 = vmatpush1.bf16.msra.mxu0 %v201
    %710 = vmatprep.subr.bf16.mxu0 %v204
    %711 = vmatpush1.bf16.msra.mxu0 %v203
    %712 = vmatprep.subr.bf16.mxu0 %v206
    %713 = vmatpush1.bf16.msra.mxu0 %v205
    %714 = vmatprep.subr.bf16.mxu0 %v208
    %715 = vmatpush1.bf16.msra.mxu0 %v207
    %716 = vmatprep.subr.bf16.mxu0 0
    %717 = vmatpush1.bf16.msra.mxu0 0
    %718 = vmatprep.subr.bf16.mxu0 0
    %719 = vmatpush1.bf16.msra.mxu0 0
    %720 = vmatprep.subr.bf16.mxu0 0
    %721 = vmatpush1.bf16.msra.mxu0 0
    %722 = vmatprep.subr.bf16.mxu0 0
    %723 = vmatpush1.bf16.msra.mxu0 0
    %724 = vmatprep.subr.bf16.mxu0 0
    %725 = vmatpush1.bf16.msra.mxu0 0
    %726 = vmatprep.subr.bf16.mxu0 0
    %727 = vmatpush1.bf16.msra.mxu0 0
    %728 = vmatprep.subr.bf16.mxu0 0
    %729 = vmatpush1.bf16.msra.mxu0 0
    %730 = vmatprep.subr.bf16.mxu0 0
    %731 = vmatpush1.bf16.msra.mxu0 0
    %732 = vmatprep.subr.bf16.mxu0 0
    %733 = vmatpush1.bf16.msra.mxu0 0
    %734 = vmatprep.subr.bf16.mxu0 0
    %735 = vmatpush1.bf16.msra.mxu0 0
    %736 = vmatprep.subr.bf16.mxu0 0
    %737 = vmatpush1.bf16.msra.mxu0 0
    %738 = vmatprep.subr.bf16.mxu0 0
    %739 = vmatpush1.bf16.msra.mxu0 0
    %740 = vmatprep.mubr.bf16.mxu0 0
    %741 = vmatmul.mubr.bf16.gmra.mrb[0].mxu0 %v706
    %v742 = vpop.f32.mrb[0].mxu0
    %v743 = vadd.f32 0.0, %v742
    %v744 = vpop.f32.mrb[0].mxu0
    %v745 = vadd.f32 0.0, %v744
    %v746 = vpop.f32.mrb[0].mxu0
    %v747 = vpop.f32.mrb[0].mxu0
    %748 = vdwg.mxu0
    %v751 = vrot.slane %v743, 2
    %v752 = vrot.slane %v745, 2
    %v755 = vadd.f32 %v175, %v751
    %v756 = vadd.f32 %v176, %v752
    %v757 = vxor.u32 %v755, 2147483648
    %v758 = vxor.u32 %v756, 2147483648
    %v759 = vmul.f32 %v757, 1.442695
    %v760 = vpow.pop %v759
    %v761 = vmul.f32 %v758, 1.442695
    %v762 = vpow.pop %v761
    %v763 = vadd.f32 %v760, 1.0
    %v764 = vadd.f32 %v762, 1.0
    %v765 = vrcp.pop %v763
    %v766 = vmul.f32 1.0, %v765
    %v767 = vrcp.pop %v764
    %v768 = vmul.f32 1.0, %v767
    %v769 = vtanh.pop %v756
    %v771 = vrot.slane %v695, 7
    %v773 = vmul.f32 %v766, %v771
    %v774 = vmul.f32 %v766, %v769
    %776 = vrot.lane.b32.xlu0 %v774, 64
    %v777 = vpop.permute.xlu0 %776
    %v779 = vadd.f32 %v773, %v777
    %v780 = vtanh.pop %v779
    %v781 = vmul.f32 %v768, %v780
    %v782 = vpack.c.bf16 %v781, %v781
    %v784 = vrot.slane %v782, 3
    %785 = vrot.lane.b32.xlu0 %v784, 64
    %v786 = vpop.permute.xlu0 %785
    %v788 = vsel %vm217, %v786, 0
    %790 = vmatprep.subr.bf16.mxu0 %v202
    %791 = vmatpush1.bf16.msra.mxu0 %v201
    %792 = vmatprep.subr.bf16.mxu0 %v204
    %793 = vmatpush1.bf16.msra.mxu0 %v203
    %794 = vmatprep.subr.bf16.mxu0 %v206
    %795 = vmatpush1.bf16.msra.mxu0 %v205
    %796 = vmatprep.subr.bf16.mxu0 %v208
    %797 = vmatpush1.bf16.msra.mxu0 %v207
    %798 = vmatprep.subr.bf16.mxu0 0
    %799 = vmatpush1.bf16.msra.mxu0 0
    %800 = vmatprep.subr.bf16.mxu0 0
    %801 = vmatpush1.bf16.msra.mxu0 0
    %802 = vmatprep.subr.bf16.mxu0 0
    %803 = vmatpush1.bf16.msra.mxu0 0
    %804 = vmatprep.subr.bf16.mxu0 0
    %805 = vmatpush1.bf16.msra.mxu0 0
    %806 = vmatprep.subr.bf16.mxu0 0
    %807 = vmatpush1.bf16.msra.mxu0 0
    %808 = vmatprep.subr.bf16.mxu0 0
    %809 = vmatpush1.bf16.msra.mxu0 0
    %810 = vmatprep.subr.bf16.mxu0 0
    %811 = vmatpush1.bf16.msra.mxu0 0
    %812 = vmatprep.subr.bf16.mxu0 0
    %813 = vmatpush1.bf16.msra.mxu0 0
    %814 = vmatprep.subr.bf16.mxu0 0
    %815 = vmatpush1.bf16.msra.mxu0 0
    %816 = vmatprep.subr.bf16.mxu0 0
    %817 = vmatpush1.bf16.msra.mxu0 0
    %818 = vmatprep.subr.bf16.mxu0 0
    %819 = vmatpush1.bf16.msra.mxu0 0
    %820 = vmatprep.subr.bf16.mxu0 0
    %821 = vmatpush1.bf16.msra.mxu0 0
    %822 = vmatprep.mubr.bf16.mxu0 0
    %823 = vmatmul.mubr.bf16.gmra.mrb[0].mxu0 %v788
    %v824 = vpop.f32.mrb[0].mxu0
    %v825 = vadd.f32 0.0, %v824
    %v826 = vpop.f32.mrb[0].mxu0
    %v827 = vadd.f32 0.0, %v826
    %v828 = vpop.f32.mrb[0].mxu0
    %v829 = vpop.f32.mrb[0].mxu0
    %830 = vdwg.mxu0
    %v833 = vrot.slane %v825, 1
    %v834 = vrot.slane %v827, 1
    %v837 = vadd.f32 %v175, %v833
    %v838 = vadd.f32 %v176, %v834
    %v839 = vxor.u32 %v837, 2147483648
    %v840 = vxor.u32 %v838, 2147483648
    %v841 = vmul.f32 %v839, 1.442695
    %v842 = vpow.pop %v841
    %v843 = vmul.f32 %v840, 1.442695
    %v844 = vpow.pop %v843
    %v845 = vadd.f32 %v842, 1.0
    %v846 = vadd.f32 %v844, 1.0
    %v847 = vrcp.pop %v845
    %v848 = vmul.f32 1.0, %v847
    %v849 = vrcp.pop %v846
    %v850 = vmul.f32 1.0, %v849
    %v851 = vtanh.pop %v838
    %v853 = vrot.slane %v779, 7
    %v855 = vmul.f32 %v848, %v853
    %v856 = vmul.f32 %v848, %v851
    %858 = vrot.lane.b32.xlu0 %v856, 64
    %v859 = vpop.permute.xlu0 %858
    %v861 = vadd.f32 %v855, %v859
    %v862 = vtanh.pop %v861
    %v863 = vmul.f32 %v850, %v862
    %vm864 = vcmask 1040384
    %v865 = vsel %vm864, %v285, %v366
    %vm866 = vcmask 1041408
    %v867 = vsel %vm866, %v865, %v449
    %vm868 = vcmask 1042432
    %v869 = vsel %vm868, %v867, %v531
    %vm870 = vcmask 1043456
    %v871 = vsel %vm870, %v869, %v615
    %vm872 = vcmask 1044480
    %v873 = vsel %vm872, %v871, %v697
    %vm874 = vcmask 1045504
    %v875 = vsel %vm874, %v873, %v781
    %vm876 = vcmask 1046528
    %v877 = vsel %vm876, %v875, %v863
    %v878 = vld [vmem:[#allocation7] sm:$0xf]
    %v879 = vld [vmem:[#allocation7 + $0x4] sm:$0xf]
    %v880 = vld [vmem:[#allocation7 + $0x8] sm:$0xf]
    %v881 = vld [vmem:[#allocation7 + $0xc] sm:$0xf]
    %v882 = vld [vmem:[#allocation5] sm:$0xff]
    %v883 = vld [vmem:[#allocation5 + $0x8] sm:$0xff]
    %v884 = vld [vmem:[#allocation5 + $0x10] sm:$0xff]
    %v885 = vld [vmem:[#allocation5 + $0x18] sm:$0xff]
    %v886 = vld [vmem:[#allocation5 + $0x20] sm:$0xff]
    %v887 = vld [vmem:[#allocation5 + $0x28] sm:$0xff]
    %v888 = vld [vmem:[#allocation5 + $0x30] sm:$0xff]
    %v889 = vld [vmem:[#allocation5 + $0x38] sm:$0xff]
    %v890 = vld [vmem:[%s6] sm:$0x1]
    %v892 = vlaneseq
    %v893 = vshrl.u32 %v892, 7
    %v894 = vsub.s32 0, %v893
    %v895 = vrot.slane %v890, %v894
    %898 = vrot.lane.b32.xlu0 %v877, 64
    %v899 = vpop.permute.xlu0 %898
    %v900 = vsel %vm217, %v899, 0
    %902 = vmatprep.subr.mxu0 0.0
    %903 = vmatpush1.msra.mxu0 %v882
    %904 = vmatprep.subr.mxu0 0.0
    %905 = vmatpush1.msra.mxu0 %v883
    %906 = vmatprep.subr.mxu0 0.0
    %907 = vmatpush1.msra.mxu0 %v884
    %908 = vmatprep.subr.mxu0 0.0
    %909 = vmatpush1.msra.mxu0 %v885
    %910 = vmatprep.subr.mxu0 0.0
    %911 = vmatpush1.msra.mxu0 %v886
    %912 = vmatprep.subr.mxu0 0.0
    %913 = vmatpush1.msra.mxu0 %v887
    %914 = vmatprep.subr.mxu0 0.0
    %915 = vmatpush1.msra.mxu0 %v888
    %916 = vmatprep.subr.mxu0 0.0
    %917 = vmatpush1.msra.mxu0 %v889
    %918 = vmatprep.subr.mxu0 0.0
    %919 = vmatpush1.msra.mxu0 0.0
    %920 = vmatprep.subr.mxu0 0.0
    %921 = vmatpush1.msra.mxu0 0.0
    %922 = vmatprep.subr.mxu0 0.0
    %923 = vmatpush1.msra.mxu0 0.0
    %924 = vmatprep.subr.mxu0 0.0
    %925 = vmatpush1.msra.mxu0 0.0
    %926 = vmatprep.subr.mxu0 0.0
    %927 = vmatpush1.msra.mxu0 0.0
    %928 = vmatprep.subr.mxu0 0.0
    %929 = vmatpush1.msra.mxu0 0.0
    %930 = vmatprep.subr.mxu0 0.0
    %931 = vmatpush1.msra.mxu0 0.0
    %932 = vmatprep.subr.mxu0 0.0
    %933 = vmatpush1.msra.mxu0 0.0
    %934 = vmatprep.subr.mxu0 0.0
    %935 = vmatpush1.msra.mxu0 0.0
    %936 = vmatprep.subr.mxu0 0.0
    %937 = vmatpush1.msra.mxu0 0.0
    %938 = vmatprep.subr.mxu0 0.0
    %939 = vmatpush1.msra.mxu0 0.0
    %940 = vmatprep.subr.mxu0 0.0
    %941 = vmatpush1.msra.mxu0 0.0
    %942 = vmatprep.subr.mxu0 0.0
    %943 = vmatpush1.msra.mxu0 0.0
    %944 = vmatprep.subr.mxu0 0.0
    %945 = vmatpush1.msra.mxu0 0.0
    %946 = vmatprep.subr.mxu0 0.0
    %947 = vmatpush1.msra.mxu0 0.0
    %948 = vmatprep.subr.mxu0 0.0
    %949 = vmatpush1.msra.mxu0 0.0
    %950 = vmatprep.subr.mxu0 0.0
    %951 = vmatpush1.msra.mxu0 0.0
    %952 = vmatprep.subr.mxu0 0.0
    %953 = vmatpush1.msra.mxu0 0.0
    %954 = vmatprep.subr.mxu0 0.0
    %955 = vmatpush1.msra.mxu0 0.0
    %956 = vmatprep.subr.mxu0 0.0
    %957 = vmatpush1.msra.mxu0 0.0
    %958 = vmatprep.subr.mxu0 0.0
    %959 = vmatpush1.msra.mxu0 0.0
    %960 = vmatprep.subr.mxu0 0.0
    %961 = vmatpush1.msra.mxu0 0.0
    %962 = vmatprep.subr.mxu0 0.0
    %963 = vmatpush1.msra.mxu0 0.0
    %964 = vmatprep.subr.mxu0 0.0
    %965 = vmatpush1.msra.mxu0 0.0
    %966 = vmatprep.mubr.f32.mxu0 0.0
    %967 = vmatmul.mubr.f32.gmra.mrb[0].mxu0 %v900
    %v968 = vpop.f32.mrb[0].mxu0
    %v969 = vadd.f32 %v895, %v968
    %v970 = vpop.f32.mrb[0].mxu0
    %971 = vdwg.mxu0
    %v976 = vunpack.c.l.b16 %v878
    %v977 = vunpack.c.l.b16 %v879
    %v978 = vunpack.c.l.b16 %v880
    %v979 = vunpack.c.l.b16 %v881
    %v980 = vpack.c.b16 %v977, %v976
    %v981 = vpack.c.b16 %v979, %v978
    %vm984 = vcmask 261120
    %v985 = vsel %vm984, 0, 0
    %987 = vmatprep.subr.bf16.mxu0 0
    %988 = vmatpush1.bf16.msra.mxu0 %v980
    %989 = vmatprep.subr.bf16.mxu0 0
    %990 = vmatpush1.bf16.msra.mxu0 %v981
    %991 = vmatprep.subr.bf16.mxu0 0
    %992 = vmatpush1.bf16.msra.mxu0 0
    %993 = vmatprep.subr.bf16.mxu0 0
    %994 = vmatpush1.bf16.msra.mxu0 0
    %995 = vmatprep.subr.bf16.mxu0 0
    %996 = vmatpush1.bf16.msra.mxu0 0
    %997 = vmatprep.subr.bf16.mxu0 0
    %998 = vmatpush1.bf16.msra.mxu0 0
    %999 = vmatprep.subr.bf16.mxu0 0
    %1000 = vmatpush1.bf16.msra.mxu0 0
    %1001 = vmatprep.subr.bf16.mxu0 0
    %1002 = vmatpush1.bf16.msra.mxu0 0
    %1003 = vmatprep.subr.bf16.mxu0 0
    %1004 = vmatpush1.bf16.msra.mxu0 0
    %1005 = vmatprep.subr.bf16.mxu0 0
    %1006 = vmatpush1.bf16.msra.mxu0 0
    %1007 = vmatprep.subr.bf16.mxu0 0
    %1008 = vmatpush1.bf16.msra.mxu0 0
    %1009 = vmatprep.subr.bf16.mxu0 0
    %1010 = vmatpush1.bf16.msra.mxu0 0
    %1011 = vmatprep.subr.bf16.mxu0 0
    %1012 = vmatpush1.bf16.msra.mxu0 0
    %1013 = vmatprep.subr.bf16.mxu0 0
    %1014 = vmatpush1.bf16.msra.mxu0 0
    %1015 = vmatprep.subr.bf16.mxu0 0
    %1016 = vmatpush1.bf16.msra.mxu0 0
    %1017 = vmatprep.subr.bf16.mxu0 0
    %1018 = vmatpush1.bf16.msra.mxu0 0
    %1019 = vmatprep.mubr.bf16.mxu0 0
    %1020 = vmatmul.mubr.bf16.gmra.mrb[0].mxu0 %v985
    %v1021 = vpop.f32.mrb[0].mxu0
    %v1022 = vadd.f32 0.0, %v1021
    %v1023 = vpop.f32.mrb[0].mxu0
    %v1024 = vpop.f32.mrb[0].mxu0
    %v1025 = vpop.f32.mrb[0].mxu0
    %1026 = vdwg.mxu0
    %v1027 = vadd.f32 %v969, %v1022
    %v1028 = vxor.u32 %v1027, 2147483648
    %v1029 = vmul.f32 %v1028, 1.442695
    %v1030 = vpow.pop %v1029
    %v1031 = vadd.f32 %v1030, 1.0
    %v1032 = vrcp.pop %v1031
    %v1033 = vmul.f32 1.0, %v1032
    %v1034 = vtanh.pop %v1027
    %v1035 = vmul.f32 %v1033, 0.0
    %1037 = vrot.lane.b32.xlu0 %v1034, 64
    %v1038 = vpop.permute.xlu0 %1037
    %v1040 = vmul.f32 %v1033, %v1038
    %1042 = vrot.lane.b32.xlu0 %v1040, 32
    %v1043 = vpop.permute.xlu0 %1042
    %v1045 = vadd.f32 %v1035, %v1043
    %v1046 = vtanh.pop %v1045
    %1048 = vrot.lane.b32.xlu0 %v1046, 64
    %v1049 = vpop.permute.xlu0 %1048
    %v1051 = vmul.f32 %v1033, %v1049
    %v1052 = vpack.c.bf16 %v1051, %v1051
    %1054 = vrot.lane.b32.xlu0 %v1052, 32
    %v1055 = vpop.permute.xlu0 %1054
    %v1057 = vsel %vm984, %v1055, 0
    %1059 = vmatprep.subr.bf16.mxu0 0
    %1060 = vmatpush1.bf16.msra.mxu0 %v980
    %1061 = vmatprep.subr.bf16.mxu0 0
    %1062 = vmatpush1.bf16.msra.mxu0 %v981
    %1063 = vmatprep.subr.bf16.mxu0 0
    %1064 = vmatpush1.bf16.msra.mxu0 0
    %1065 = vmatprep.subr.bf16.mxu0 0
    %1066 = vmatpush1.bf16.msra.mxu0 0
    %1067 = vmatprep.subr.bf16.mxu0 0
    %1068 = vmatpush1.bf16.msra.mxu0 0
    %1069 = vmatprep.subr.bf16.mxu0 0
    %1070 = vmatpush1.bf16.msra.mxu0 0
    %1071 = vmatprep.subr.bf16.mxu0 0
    %1072 = vmatpush1.bf16.msra.mxu0 0
    %1073 = vmatprep.subr.bf16.mxu0 0
    %1074 = vmatpush1.bf16.msra.mxu0 0
    %1075 = vmatprep.subr.bf16.mxu0 0
    %1076 = vmatpush1.bf16.msra.mxu0 0
    %1077 = vmatprep.subr.bf16.mxu0 0
    %1078 = vmatpush1.bf16.msra.mxu0 0
    %1079 = vmatprep.subr.bf16.mxu0 0
    %1080 = vmatpush1.bf16.msra.mxu0 0
    %1081 = vmatprep.subr.bf16.mxu0 0
    %1082 = vmatpush1.bf16.msra.mxu0 0
    %1083 = vmatprep.subr.bf16.mxu0 0
    %1084 = vmatpush1.bf16.msra.mxu0 0
    %1085 = vmatprep.subr.bf16.mxu0 0
    %1086 = vmatpush1.bf16.msra.mxu0 0
    %1087 = vmatprep.subr.bf16.mxu0 0
    %1088 = vmatpush1.bf16.msra.mxu0 0
    %1089 = vmatprep.subr.bf16.mxu0 0
    %1090 = vmatpush1.bf16.msra.mxu0 0
    %1091 = vmatprep.mubr.bf16.mxu0 0
    %1092 = vmatmul.mubr.bf16.gmra.mrb[0].mxu0 %v1057
    %v1093 = vpop.f32.mrb[0].mxu0
    %v1094 = vadd.f32 0.0, %v1093
    %v1095 = vpop.f32.mrb[0].mxu0
    %v1096 = vpop.f32.mrb[0].mxu0
    %v1097 = vpop.f32.mrb[0].mxu0
    %1098 = vdwg.mxu0
    %v1100 = vrot.slane %v1094, 7
    %v1102 = vadd.f32 %v969, %v1100
    %v1103 = vxor.u32 %v1102, 2147483648
    %v1104 = vmul.f32 %v1103, 1.442695
    %v1105 = vpow.pop %v1104
    %v1106 = vadd.f32 %v1105, 1.0
    %v1107 = vrcp.pop %v1106
    %v1108 = vmul.f32 1.0, %v1107
    %v1109 = vtanh.pop %v1102
    %v1111 = vrot.slane %v1045, 7
    %v1113 = vmul.f32 %v1108, %v1111
    %1115 = vrot.lane.b32.xlu0 %v1109, 64
    %v1116 = vpop.permute.xlu0 %1115
    %v1118 = vmul.f32 %v1108, %v1116
    %1120 = vrot.lane.b32.xlu0 %v1118, 32
    %v1121 = vpop.permute.xlu0 %1120
    %v1123 = vadd.f32 %v1113, %v1121
    %v1124 = vtanh.pop %v1123
    %1126 = vrot.lane.b32.xlu0 %v1124, 64
    %v1127 = vpop.permute.xlu0 %1126
    %v1129 = vmul.f32 %v1108, %v1127
    %v1130 = vpack.c.bf16 %v1129, %v1129
    %v1132 = vshrl.u32 %v1130, 16
    %1134 = vrot.lane.b32.xlu0 %v1132, 32
    %v1135 = vpop.permute.xlu0 %1134
    %v1137 = vsel %vm984, %v1135, 0
    %1139 = vmatprep.subr.bf16.mxu0 0
    %1140 = vmatpush1.bf16.msra.mxu0 %v980
    %1141 = vmatprep.subr.bf16.mxu0 0
    %1142 = vmatpush1.bf16.msra.mxu0 %v981
    %1143 = vmatprep.subr.bf16.mxu0 0
    %1144 = vmatpush1.bf16.msra.mxu0 0
    %1145 = vmatprep.subr.bf16.mxu0 0
    %1146 = vmatpush1.bf16.msra.mxu0 0
    %1147 = vmatprep.subr.bf16.mxu0 0
    %1148 = vmatpush1.bf16.msra.mxu0 0
    %1149 = vmatprep.subr.bf16.mxu0 0
    %1150 = vmatpush1.bf16.msra.mxu0 0
    %1151 = vmatprep.subr.bf16.mxu0 0
    %1152 = vmatpush1.bf16.msra.mxu0 0
    %1153 = vmatprep.subr.bf16.mxu0 0
    %1154 = vmatpush1.bf16.msra.mxu0 0
    %1155 = vmatprep.subr.bf16.mxu0 0
    %1156 = vmatpush1.bf16.msra.mxu0 0
    %1157 = vmatprep.subr.bf16.mxu0 0
    %1158 = vmatpush1.bf16.msra.mxu0 0
    %1159 = vmatprep.subr.bf16.mxu0 0
    %1160 = vmatpush1.bf16.msra.mxu0 0
    %1161 = vmatprep.subr.bf16.mxu0 0
    %1162 = vmatpush1.bf16.msra.mxu0 0
    %1163 = vmatprep.subr.bf16.mxu0 0
    %1164 = vmatpush1.bf16.msra.mxu0 0
    %1165 = vmatprep.subr.bf16.mxu0 0
    %1166 = vmatpush1.bf16.msra.mxu0 0
    %1167 = vmatprep.subr.bf16.mxu0 0
    %1168 = vmatpush1.bf16.msra.mxu0 0
    %1169 = vmatprep.subr.bf16.mxu0 0
    %1170 = vmatpush1.bf16.msra.mxu0 0
    %1171 = vmatprep.mubr.bf16.mxu0 0
    %1172 = vmatmul.mubr.bf16.gmra.mrb[0].mxu0 %v1137
    %v1173 = vpop.f32.mrb[0].mxu0
    %v1174 = vadd.f32 0.0, %v1173
    %v1175 = vpop.f32.mrb[0].mxu0
    %v1176 = vpop.f32.mrb[0].mxu0
    %v1177 = vpop.f32.mrb[0].mxu0
    %1178 = vdwg.mxu0
    %v1180 = vrot.slane %v1174, 6
    %v1182 = vadd.f32 %v969, %v1180
    %v1183 = vxor.u32 %v1182, 2147483648
    %v1184 = vmul.f32 %v1183, 1.442695
    %v1185 = vpow.pop %v1184
    %v1186 = vadd.f32 %v1185, 1.0
    %v1187 = vrcp.pop %v1186
    %v1188 = vmul.f32 1.0, %v1187
    %v1189 = vtanh.pop %v1182
    %v1191 = vrot.slane %v1123, 7
    %v1193 = vmul.f32 %v1188, %v1191
    %1195 = vrot.lane.b32.xlu0 %v1189, 64
    %v1196 = vpop.permute.xlu0 %1195
    %v1198 = vmul.f32 %v1188, %v1196
    %1200 = vrot.lane.b32.xlu0 %v1198, 32
    %v1201 = vpop.permute.xlu0 %1200
    %v1203 = vadd.f32 %v1193, %v1201
    %v1204 = vtanh.pop %v1203
    %1206 = vrot.lane.b32.xlu0 %v1204, 64
    %v1207 = vpop.permute.xlu0 %1206
    %v1209 = vmul.f32 %v1188, %v1207
    %v1210 = vpack.c.bf16 %v1209, %v1209
    %v1212 = vrot.slane %v1210, 1
    %1213 = vrot.lane.b32.xlu0 %v1212, 32
    %v1214 = vpop.permute.xlu0 %1213
    %v1216 = vsel %vm984, %v1214, 0
    %1218 = vmatprep.subr.bf16.mxu0 0
    %1219 = vmatpush1.bf16.msra.mxu0 %v980
    %1220 = vmatprep.subr.bf16.mxu0 0
    %1221 = vmatpush1.bf16.msra.mxu0 %v981
    %1222 = vmatprep.subr.bf16.mxu0 0
    %1223 = vmatpush1.bf16.msra.mxu0 0
    %1224 = vmatprep.subr.bf16.mxu0 0
    %1225 = vmatpush1.bf16.msra.mxu0 0
    %1226 = vmatprep.subr.bf16.mxu0 0
    %1227 = vmatpush1.bf16.msra.mxu0 0
    %1228 = vmatprep.subr.bf16.mxu0 0
    %1229 = vmatpush1.bf16.msra.mxu0 0
    %1230 = vmatprep.subr.bf16.mxu0 0
    %1231 = vmatpush1.bf16.msra.mxu0 0
    %1232 = vmatprep.subr.bf16.mxu0 0
    %1233 = vmatpush1.bf16.msra.mxu0 0
    %1234 = vmatprep.subr.bf16.mxu0 0
    %1235 = vmatpush1.bf16.msra.mxu0 0
    %1236 = vmatprep.subr.bf16.mxu0 0
    %1237 = vmatpush1.bf16.msra.mxu0 0
    %1238 = vmatprep.subr.bf16.mxu0 0
    %1239 = vmatpush1.bf16.msra.mxu0 0
    %1240 = vmatprep.subr.bf16.mxu0 0
    %1241 = vmatpush1.bf16.msra.mxu0 0
    %1242 = vmatprep.subr.bf16.mxu0 0
    %1243 = vmatpush1.bf16.msra.mxu0 0
    %1244 = vmatprep.subr.bf16.mxu0 0
    %1245 = vmatpush1.bf16.msra.mxu0 0
    %1246 = vmatprep.subr.bf16.mxu0 0
    %1247 = vmatpush1.bf16.msra.mxu0 0
    %1248 = vmatprep.subr.bf16.mxu0 0
    %1249 = vmatpush1.bf16.msra.mxu0 0
    %1250 = vmatprep.mubr.bf16.mxu0 0
    %1251 = vmatmul.mubr.bf16.gmra.mrb[0].mxu0 %v1216
    %v1252 = vpop.f32.mrb[0].mxu0
    %v1253 = vadd.f32 0.0, %v1252
    %v1254 = vpop.f32.mrb[0].mxu0
    %v1255 = vpop.f32.mrb[0].mxu0
    %v1256 = vpop.f32.mrb[0].mxu0
    %1257 = vdwg.mxu0
    %v1259 = vrot.slane %v1253, 5
    %v1261 = vadd.f32 %v969, %v1259
    %v1262 = vxor.u32 %v1261, 2147483648
    %v1263 = vmul.f32 %v1262, 1.442695
    %v1264 = vpow.pop %v1263
    %v1265 = vadd.f32 %v1264, 1.0
    %v1266 = vrcp.pop %v1265
    %v1267 = vmul.f32 1.0, %v1266
    %v1268 = vtanh.pop %v1261
    %v1270 = vrot.slane %v1203, 7
    %v1272 = vmul.f32 %v1267, %v1270
    %1274 = vrot.lane.b32.xlu0 %v1268, 64
    %v1275 = vpop.permute.xlu0 %1274
    %v1277 = vmul.f32 %v1267, %v1275
    %1279 = vrot.lane.b32.xlu0 %v1277, 32
    %v1280 = vpop.permute.xlu0 %1279
    %v1282 = vadd.f32 %v1272, %v1280
    %v1283 = vtanh.pop %v1282
    %1285 = vrot.lane.b32.xlu0 %v1283, 64
    %v1286 = vpop.permute.xlu0 %1285
    %v1288 = vmul.f32 %v1267, %v1286
    %v1289 = vpack.c.bf16 %v1288, %v1288
    %v1291 = vshrl.u32 %v1289, 16
    %v1293 = vrot.slane %v1291, 1
    %1294 = vrot.lane.b32.xlu0 %v1293, 32
    %v1295 = vpop.permute.xlu0 %1294
    %v1297 = vsel %vm984, %v1295, 0
    %1299 = vmatprep.subr.bf16.mxu0 0
    %1300 = vmatpush1.bf16.msra.mxu0 %v980
    %1301 = vmatprep.subr.bf16.mxu0 0
    %1302 = vmatpush1.bf16.msra.mxu0 %v981
    %1303 = vmatprep.subr.bf16.mxu0 0
    %1304 = vmatpush1.bf16.msra.mxu0 0
    %1305 = vmatprep.subr.bf16.mxu0 0
    %1306 = vmatpush1.bf16.msra.mxu0 0
    %1307 = vmatprep.subr.bf16.mxu0 0
    %1308 = vmatpush1.bf16.msra.mxu0 0
    %1309 = vmatprep.subr.bf16.mxu0 0
    %1310 = vmatpush1.bf16.msra.mxu0 0
    %1311 = vmatprep.subr.bf16.mxu0 0
    %1312 = vmatpush1.bf16.msra.mxu0 0
    %1313 = vmatprep.subr.bf16.mxu0 0
    %1314 = vmatpush1.bf16.msra.mxu0 0
    %1315 = vmatprep.subr.bf16.mxu0 0
    %1316 = vmatpush1.bf16.msra.mxu0 0
    %1317 = vmatprep.subr.bf16.mxu0 0
    %1318 = vmatpush1.bf16.msra.mxu0 0
    %1319 = vmatprep.subr.bf16.mxu0 0
    %1320 = vmatpush1.bf16.msra.mxu0 0
    %1321 = vmatprep.subr.bf16.mxu0 0
    %1322 = vmatpush1.bf16.msra.mxu0 0
    %1323 = vmatprep.subr.bf16.mxu0 0
    %1324 = vmatpush1.bf16.msra.mxu0 0
    %1325 = vmatprep.subr.bf16.mxu0 0
    %1326 = vmatpush1.bf16.msra.mxu0 0
    %1327 = vmatprep.subr.bf16.mxu0 0
    %1328 = vmatpush1.bf16.msra.mxu0 0
    %1329 = vmatprep.subr.bf16.mxu0 0
    %1330 = vmatpush1.bf16.msra.mxu0 0
    %1331 = vmatprep.mubr.bf16.mxu0 0
    %1332 = vmatmul.mubr.bf16.gmra.mrb[0].mxu0 %v1297
    %v1333 = vpop.f32.mrb[0].mxu0
    %v1334 = vadd.f32 0.0, %v1333
    %v1335 = vpop.f32.mrb[0].mxu0
    %v1336 = vpop.f32.mrb[0].mxu0
    %v1337 = vpop.f32.mrb[0].mxu0
    %1338 = vdwg.mxu0
    %v1340 = vrot.slane %v1334, 4
    %v1342 = vadd.f32 %v969, %v1340
    %v1343 = vxor.u32 %v1342, 2147483648
    %v1344 = vmul.f32 %v1343, 1.442695
    %v1345 = vpow.pop %v1344
    %v1346 = vadd.f32 %v1345, 1.0
    %v1347 = vrcp.pop %v1346
    %v1348 = vmul.f32 1.0, %v1347
    %v1349 = vtanh.pop %v1342
    %v1351 = vrot.slane %v1282, 7
    %v1353 = vmul.f32 %v1348, %v1351
    %1355 = vrot.lane.b32.xlu0 %v1349, 64
    %v1356 = vpop.permute.xlu0 %1355
    %v1358 = vmul.f32 %v1348, %v1356
    %1360 = vrot.lane.b32.xlu0 %v1358, 32
    %v1361 = vpop.permute.xlu0 %1360
    %v1363 = vadd.f32 %v1353, %v1361
    %v1364 = vtanh.pop %v1363
    %1366 = vrot.lane.b32.xlu0 %v1364, 64
    %v1367 = vpop.permute.xlu0 %1366
    %v1369 = vmul.f32 %v1348, %v1367
    %v1370 = vpack.c.bf16 %v1369, %v1369
    %v1372 = vrot.slane %v1370, 2
    %1373 = vrot.lane.b32.xlu0 %v1372, 32
    %v1374 = vpop.permute.xlu0 %1373
    %v1376 = vsel %vm984, %v1374, 0
    %1378 = vmatprep.subr.bf16.mxu0 0
    %1379 = vmatpush1.bf16.msra.mxu0 %v980
    %1380 = vmatprep.subr.bf16.mxu0 0
    %1381 = vmatpush1.bf16.msra.mxu0 %v981
    %1382 = vmatprep.subr.bf16.mxu0 0
    %1383 = vmatpush1.bf16.msra.mxu0 0
    %1384 = vmatprep.subr.bf16.mxu0 0
    %1385 = vmatpush1.bf16.msra.mxu0 0
    %1386 = vmatprep.subr.bf16.mxu0 0
    %1387 = vmatpush1.bf16.msra.mxu0 0
    %1388 = vmatprep.subr.bf16.mxu0 0
    %1389 = vmatpush1.bf16.msra.mxu0 0
    %1390 = vmatprep.subr.bf16.mxu0 0
    %1391 = vmatpush1.bf16.msra.mxu0 0
    %1392 = vmatprep.subr.bf16.mxu0 0
    %1393 = vmatpush1.bf16.msra.mxu0 0
    %1394 = vmatprep.subr.bf16.mxu0 0
    %1395 = vmatpush1.bf16.msra.mxu0 0
    %1396 = vmatprep.subr.bf16.mxu0 0
    %1397 = vmatpush1.bf16.msra.mxu0 0
    %1398 = vmatprep.subr.bf16.mxu0 0
    %1399 = vmatpush1.bf16.msra.mxu0 0
    %1400 = vmatprep.subr.bf16.mxu0 0
    %1401 = vmatpush1.bf16.msra.mxu0 0
    %1402 = vmatprep.subr.bf16.mxu0 0
    %1403 = vmatpush1.bf16.msra.mxu0 0
    %1404 = vmatprep.subr.bf16.mxu0 0
    %1405 = vmatpush1.bf16.msra.mxu0 0
    %1406 = vmatprep.subr.bf16.mxu0 0
    %1407 = vmatpush1.bf16.msra.mxu0 0
    %1408 = vmatprep.subr.bf16.mxu0 0
    %1409 = vmatpush1.bf16.msra.mxu0 0
    %1410 = vmatprep.mubr.bf16.mxu0 0
    %1411 = vmatmul.mubr.bf16.gmra.mrb[0].mxu0 %v1376
    %v1412 = vpop.f32.mrb[0].mxu0
    %v1413 = vadd.f32 0.0, %v1412
    %v1414 = vpop.f32.mrb[0].mxu0
    %v1415 = vpop.f32.mrb[0].mxu0
    %v1416 = vpop.f32.mrb[0].mxu0
    %1417 = vdwg.mxu0
    %v1419 = vrot.slane %v1413, 3
    %v1421 = vadd.f32 %v969, %v1419
    %v1422 = vxor.u32 %v1421, 2147483648
    %v1423 = vmul.f32 %v1422, 1.442695
    %v1424 = vpow.pop %v1423
    %v1425 = vadd.f32 %v1424, 1.0
    %v1426 = vrcp.pop %v1425
    %v1427 = vmul.f32 1.0, %v1426
    %v1428 = vtanh.pop %v1421
    %v1430 = vrot.slane %v1363, 7
    %v1432 = vmul.f32 %v1427, %v1430
    %1434 = vrot.lane.b32.xlu0 %v1428, 64
    %v1435 = vpop.permute.xlu0 %1434
    %v1437 = vmul.f32 %v1427, %v1435
    %1439 = vrot.lane.b32.xlu0 %v1437, 32
    %v1440 = vpop.permute.xlu0 %1439
    %v1442 = vadd.f32 %v1432, %v1440
    %v1443 = vtanh.pop %v1442
    %1445 = vrot.lane.b32.xlu0 %v1443, 64
    %v1446 = vpop.permute.xlu0 %1445
    %v1448 = vmul.f32 %v1427, %v1446
    %v1449 = vpack.c.bf16 %v1448, %v1448
    %v1451 = vshrl.u32 %v1449, 16
    %v1453 = vrot.slane %v1451, 2
    %1454 = vrot.lane.b32.xlu0 %v1453, 32
    %v1455 = vpop.permute.xlu0 %1454
    %v1457 = vsel %vm984, %v1455, 0
    %1459 = vmatprep.subr.bf16.mxu0 0
    %1460 = vmatpush1.bf16.msra.mxu0 %v980
    %1461 = vmatprep.subr.bf16.mxu0 0
    %1462 = vmatpush1.bf16.msra.mxu0 %v981
    %1463 = vmatprep.subr.bf16.mxu0 0
    %1464 = vmatpush1.bf16.msra.mxu0 0
    %1465 = vmatprep.subr.bf16.mxu0 0
    %1466 = vmatpush1.bf16.msra.mxu0 0
    %1467 = vmatprep.subr.bf16.mxu0 0
    %1468 = vmatpush1.bf16.msra.mxu0 0
    %1469 = vmatprep.subr.bf16.mxu0 0
    %1470 = vmatpush1.bf16.msra.mxu0 0
    %1471 = vmatprep.subr.bf16.mxu0 0
    %1472 = vmatpush1.bf16.msra.mxu0 0
    %1473 = vmatprep.subr.bf16.mxu0 0
    %1474 = vmatpush1.bf16.msra.mxu0 0
    %1475 = vmatprep.subr.bf16.mxu0 0
    %1476 = vmatpush1.bf16.msra.mxu0 0
    %1477 = vmatprep.subr.bf16.mxu0 0
    %1478 = vmatpush1.bf16.msra.mxu0 0
    %1479 = vmatprep.subr.bf16.mxu0 0
    %1480 = vmatpush1.bf16.msra.mxu0 0
    %1481 = vmatprep.subr.bf16.mxu0 0
    %1482 = vmatpush1.bf16.msra.mxu0 0
    %1483 = vmatprep.subr.bf16.mxu0 0
    %1484 = vmatpush1.bf16.msra.mxu0 0
    %1485 = vmatprep.subr.bf16.mxu0 0
    %1486 = vmatpush1.bf16.msra.mxu0 0
    %1487 = vmatprep.subr.bf16.mxu0 0
    %1488 = vmatpush1.bf16.msra.mxu0 0
    %1489 = vmatprep.subr.bf16.mxu0 0
    %1490 = vmatpush1.bf16.msra.mxu0 0
    %1491 = vmatprep.mubr.bf16.mxu0 0
    %1492 = vmatmul.mubr.bf16.gmra.mrb[0].mxu0 %v1457
    %v1493 = vpop.f32.mrb[0].mxu0
    %v1494 = vadd.f32 0.0, %v1493
    %v1495 = vpop.f32.mrb[0].mxu0
    %v1496 = vpop.f32.mrb[0].mxu0
    %v1497 = vpop.f32.mrb[0].mxu0
    %1498 = vdwg.mxu0
    %v1500 = vrot.slane %v1494, 2
    %v1502 = vadd.f32 %v969, %v1500
    %v1503 = vxor.u32 %v1502, 2147483648
    %v1504 = vmul.f32 %v1503, 1.442695
    %v1505 = vpow.pop %v1504
    %v1506 = vadd.f32 %v1505, 1.0
    %v1507 = vrcp.pop %v1506
    %v1508 = vmul.f32 1.0, %v1507
    %v1509 = vtanh.pop %v1502
    %v1511 = vrot.slane %v1442, 7
    %v1513 = vmul.f32 %v1508, %v1511
    %1515 = vrot.lane.b32.xlu0 %v1509, 64
    %v1516 = vpop.permute.xlu0 %1515
    %v1518 = vmul.f32 %v1508, %v1516
    %1520 = vrot.lane.b32.xlu0 %v1518, 32
    %v1521 = vpop.permute.xlu0 %1520
    %v1523 = vadd.f32 %v1513, %v1521
    %v1524 = vtanh.pop %v1523
    %1526 = vrot.lane.b32.xlu0 %v1524, 64
    %v1527 = vpop.permute.xlu0 %1526
    %v1529 = vmul.f32 %v1508, %v1527
    %v1530 = vpack.c.bf16 %v1529, %v1529
    %v1532 = vrot.slane %v1530, 3
    %1533 = vrot.lane.b32.xlu0 %v1532, 32
    %v1534 = vpop.permute.xlu0 %1533
    %v1536 = vsel %vm984, %v1534, 0
    %1538 = vmatprep.subr.bf16.mxu0 0
    %1539 = vmatpush1.bf16.msra.mxu0 %v980
    %1540 = vmatprep.subr.bf16.mxu0 0
    %1541 = vmatpush1.bf16.msra.mxu0 %v981
    %1542 = vmatprep.subr.bf16.mxu0 0
    %1543 = vmatpush1.bf16.msra.mxu0 0
    %1544 = vmatprep.subr.bf16.mxu0 0
    %1545 = vmatpush1.bf16.msra.mxu0 0
    %1546 = vmatprep.subr.bf16.mxu0 0
    %1547 = vmatpush1.bf16.msra.mxu0 0
    %1548 = vmatprep.subr.bf16.mxu0 0
    %1549 = vmatpush1.bf16.msra.mxu0 0
    %1550 = vmatprep.subr.bf16.mxu0 0
    %1551 = vmatpush1.bf16.msra.mxu0 0
    %1552 = vmatprep.subr.bf16.mxu0 0
    %1553 = vmatpush1.bf16.msra.mxu0 0
    %1554 = vmatprep.subr.bf16.mxu0 0
    %1555 = vmatpush1.bf16.msra.mxu0 0
    %1556 = vmatprep.subr.bf16.mxu0 0
    %1557 = vmatpush1.bf16.msra.mxu0 0
    %1558 = vmatprep.subr.bf16.mxu0 0
    %1559 = vmatpush1.bf16.msra.mxu0 0
    %1560 = vmatprep.subr.bf16.mxu0 0
    %1561 = vmatpush1.bf16.msra.mxu0 0
    %1562 = vmatprep.subr.bf16.mxu0 0
    %1563 = vmatpush1.bf16.msra.mxu0 0
    %1564 = vmatprep.subr.bf16.mxu0 0
    %1565 = vmatpush1.bf16.msra.mxu0 0
    %1566 = vmatprep.subr.bf16.mxu0 0
    %1567 = vmatpush1.bf16.msra.mxu0 0
    %1568 = vmatprep.subr.bf16.mxu0 0
    %1569 = vmatpush1.bf16.msra.mxu0 0
    %1570 = vmatprep.mubr.bf16.mxu0 0
    %1571 = vmatmul.mubr.bf16.gmra.mrb[0].mxu0 %v1536
    %v1572 = vpop.f32.mrb[0].mxu0
    %v1573 = vadd.f32 0.0, %v1572
    %v1574 = vpop.f32.mrb[0].mxu0
    %v1575 = vpop.f32.mrb[0].mxu0
    %v1576 = vpop.f32.mrb[0].mxu0
    %1577 = vdwg.mxu0
    %v1579 = vrot.slane %v1573, 1
    %v1581 = vadd.f32 %v969, %v1579
    %v1582 = vxor.u32 %v1581, 2147483648
    %v1583 = vmul.f32 %v1582, 1.442695
    %v1584 = vpow.pop %v1583
    %v1585 = vadd.f32 %v1584, 1.0
    %v1586 = vrcp.pop %v1585
    %v1587 = vmul.f32 1.0, %v1586
    %v1588 = vtanh.pop %v1581
    %v1590 = vrot.slane %v1523, 7
    %v1592 = vmul.f32 %v1587, %v1590
    %1594 = vrot.lane.b32.xlu0 %v1588, 64
    %v1595 = vpop.permute.xlu0 %1594
    %v1597 = vmul.f32 %v1587, %v1595
    %1599 = vrot.lane.b32.xlu0 %v1597, 32
    %v1600 = vpop.permute.xlu0 %1599
    %v1602 = vadd.f32 %v1592, %v1600
    %v1603 = vtanh.pop %v1602
    %1605 = vrot.lane.b32.xlu0 %v1603, 64
    %v1606 = vpop.permute.xlu0 %1605
    %v1608 = vmul.f32 %v1587, %v1606
    %v1609 = vld [vmem:[#allocation8] sm:$0xf]
    %v1610 = vld [vmem:[#allocation8 + $0x4] sm:$0xf]
    %v1611 = vld [vmem:[#allocation8 + $0x8] sm:$0xf]
    %v1612 = vld [vmem:[#allocation8 + $0xc] sm:$0xf]
    %v1613 = vld [vmem:[%s7] sm:$0xff]
    %v1614 = vld [vmem:[%s7 + $0x8] sm:$0xff]
    %v1615 = vld [vmem:[%s7 + $0x10] sm:$0xff]
    %v1616 = vld [vmem:[%s7 + $0x18] sm:$0xff]
    %v1617 = vld [vmem:[%s9] sm:$0x1]
    %v1619 = vrot.slane %v1608, 7
    %1620 = vrot.lane.b32.xlu0 %v1619, 32
    %v1621 = vpop.permute.xlu0 %1620
    %v1622 = vsel %vm984, %v1621, 0
    %1624 = vmatprep.subr.mxu0 0.0
    %1625 = vmatpush1.msra.mxu0 %v1613
    %1626 = vmatprep.subr.mxu0 0.0
    %1627 = vmatpush1.msra.mxu0 %v1614
    %1628 = vmatprep.subr.mxu0 0.0
    %1629 = vmatpush1.msra.mxu0 %v1615
    %1630 = vmatprep.subr.mxu0 0.0
    %1631 = vmatpush1.msra.mxu0 %v1616
    %1632 = vmatprep.subr.mxu0 0.0
    %1633 = vmatpush1.msra.mxu0 0.0
    %1634 = vmatprep.subr.mxu0 0.0
    %1635 = vmatpush1.msra.mxu0 0.0
    %1636 = vmatprep.subr.mxu0 0.0
    %1637 = vmatpush1.msra.mxu0 0.0
    %1638 = vmatprep.subr.mxu0 0.0
    %1639 = vmatpush1.msra.mxu0 0.0
    %1640 = vmatprep.subr.mxu0 0.0
    %1641 = vmatpush1.msra.mxu0 0.0
    %1642 = vmatprep.subr.mxu0 0.0
    %1643 = vmatpush1.msra.mxu0 0.0
    %1644 = vmatprep.subr.mxu0 0.0
    %1645 = vmatpush1.msra.mxu0 0.0
    %1646 = vmatprep.subr.mxu0 0.0
    %1647 = vmatpush1.msra.mxu0 0.0
    %1648 = vmatprep.subr.mxu0 0.0
    %1649 = vmatpush1.msra.mxu0 0.0
    %1650 = vmatprep.subr.mxu0 0.0
    %1651 = vmatpush1.msra.mxu0 0.0
    %1652 = vmatprep.subr.mxu0 0.0
    %1653 = vmatpush1.msra.mxu0 0.0
    %1654 = vmatprep.subr.mxu0 0.0
    %1655 = vmatpush1.msra.mxu0 0.0
    %1656 = vmatprep.subr.mxu0 0.0
    %1657 = vmatpush1.msra.mxu0 0.0
    %1658 = vmatprep.subr.mxu0 0.0
    %1659 = vmatpush1.msra.mxu0 0.0
    %1660 = vmatprep.subr.mxu0 0.0
    %1661 = vmatpush1.msra.mxu0 0.0
    %1662 = vmatprep.subr.mxu0 0.0
    %1663 = vmatpush1.msra.mxu0 0.0
    %1664 = vmatprep.subr.mxu0 0.0
    %1665 = vmatpush1.msra.mxu0 0.0
    %1666 = vmatprep.subr.mxu0 0.0
    %1667 = vmatpush1.msra.mxu0 0.0
    %1668 = vmatprep.subr.mxu0 0.0
    %1669 = vmatpush1.msra.mxu0 0.0
    %1670 = vmatprep.subr.mxu0 0.0
    %1671 = vmatpush1.msra.mxu0 0.0
    %1672 = vmatprep.subr.mxu0 0.0
    %1673 = vmatpush1.msra.mxu0 0.0
    %1674 = vmatprep.subr.mxu0 0.0
    %1675 = vmatpush1.msra.mxu0 0.0
    %1676 = vmatprep.subr.mxu0 0.0
    %1677 = vmatpush1.msra.mxu0 0.0
    %1678 = vmatprep.subr.mxu0 0.0
    %1679 = vmatpush1.msra.mxu0 0.0
    %1680 = vmatprep.subr.mxu0 0.0
    %1681 = vmatpush1.msra.mxu0 0.0
    %1682 = vmatprep.subr.mxu0 0.0
    %1683 = vmatpush1.msra.mxu0 0.0
    %1684 = vmatprep.subr.mxu0 0.0
    %1685 = vmatpush1.msra.mxu0 0.0
    %1686 = vmatprep.subr.mxu0 0.0
    %1687 = vmatpush1.msra.mxu0 0.0
    %1688 = vmatprep.mubr.f32.mxu0 0.0
    %1689 = vmatmul.mubr.f32.gmra.mrb[0].mxu0 %v1622
    %v1690 = vpop.f32.mrb[0].mxu0
    %v1691 = vadd.f32 %v1617, %v1690
    %v1692 = vpop.f32.mrb[0].mxu0
    %1693 = vdwg.mxu0
    %v1698 = vunpack.c.l.b16 %v1609
    %v1699 = vunpack.c.l.b16 %v1610
    %v1700 = vunpack.c.l.b16 %v1611
    %v1701 = vunpack.c.l.b16 %v1612
    %v1702 = vpack.c.b16 %v1699, %v1698
    %v1703 = vpack.c.b16 %v1701, %v1700
    %1706 = vmatprep.subr.bf16.mxu0 0
    %1707 = vmatpush1.bf16.msra.mxu0 %v1702
    %1708 = vmatprep.subr.bf16.mxu0 0
    %1709 = vmatpush1.bf16.msra.mxu0 %v1703
    %1710 = vmatprep.subr.bf16.mxu0 0
    %1711 = vmatpush1.bf16.msra.mxu0 0
    %1712 = vmatprep.subr.bf16.mxu0 0
    %1713 = vmatpush1.bf16.msra.mxu0 0
    %1714 = vmatprep.subr.bf16.mxu0 0
    %1715 = vmatpush1.bf16.msra.mxu0 0
    %1716 = vmatprep.subr.bf16.mxu0 0
    %1717 = vmatpush1.bf16.msra.mxu0 0
    %1718 = vmatprep.subr.bf16.mxu0 0
    %1719 = vmatpush1.bf16.msra.mxu0 0
    %1720 = vmatprep.subr.bf16.mxu0 0
    %1721 = vmatpush1.bf16.msra.mxu0 0
    %1722 = vmatprep.subr.bf16.mxu0 0
    %1723 = vmatpush1.bf16.msra.mxu0 0
    %1724 = vmatprep.subr.bf16.mxu0 0
    %1725 = vmatpush1.bf16.msra.mxu0 0
    %1726 = vmatprep.subr.bf16.mxu0 0
    %1727 = vmatpush1.bf16.msra.mxu0 0
    %1728 = vmatprep.subr.bf16.mxu0 0
    %1729 = vmatpush1.bf16.msra.mxu0 0
    %1730 = vmatprep.subr.bf16.mxu0 0
    %1731 = vmatpush1.bf16.msra.mxu0 0
    %1732 = vmatprep.subr.bf16.mxu0 0
    %1733 = vmatpush1.bf16.msra.mxu0 0
    %1734 = vmatprep.subr.bf16.mxu0 0
    %1735 = vmatpush1.bf16.msra.mxu0 0
    %1736 = vmatprep.subr.bf16.mxu0 0
    %1737 = vmatpush1.bf16.msra.mxu0 0
    %1738 = vmatprep.mubr.bf16.mxu0 0
    %1739 = vmatmul.mubr.bf16.gmra.mrb[0].mxu0 %v985
    %v1740 = vpop.f32.mrb[0].mxu0
    %v1741 = vadd.f32 0.0, %v1740
    %v1742 = vpop.f32.mrb[0].mxu0
    %v1743 = vpop.f32.mrb[0].mxu0
    %v1744 = vpop.f32.mrb[0].mxu0
    %1745 = vdwg.mxu0
    %v1746 = vadd.f32 %v1691, %v1741
    %v1747 = vxor.u32 %v1746, 2147483648
    %v1748 = vmul.f32 %v1747, 1.442695
    %v1749 = vpow.pop %v1748
    %v1750 = vadd.f32 %v1749, 1.0
    %v1751 = vrcp.pop %v1750
    %v1752 = vmul.f32 1.0, %v1751
    %v1753 = vtanh.pop %v1746
    %v1754 = vmul.f32 %v1752, 0.0
    %1756 = vrot.lane.b32.xlu0 %v1753, 64
    %v1757 = vpop.permute.xlu0 %1756
    %v1759 = vmul.f32 %v1752, %v1757
    %1761 = vrot.lane.b32.xlu0 %v1759, 32
    %v1762 = vpop.permute.xlu0 %1761
    %v1764 = vadd.f32 %v1754, %v1762
    %v1765 = vtanh.pop %v1764
    %1767 = vrot.lane.b32.xlu0 %v1765, 64
    %v1768 = vpop.permute.xlu0 %1767
    %v1770 = vmul.f32 %v1752, %v1768
    %v1771 = vpack.c.bf16 %v1770, %v1770
    %1773 = vrot.lane.b32.xlu0 %v1771, 32
    %v1774 = vpop.permute.xlu0 %1773
    %v1776 = vsel %vm984, %v1774, 0
    %1778 = vmatprep.subr.bf16.mxu0 0
    %1779 = vmatpush1.bf16.msra.mxu0 %v1702
    %1780 = vmatprep.subr.bf16.mxu0 0
    %1781 = vmatpush1.bf16.msra.mxu0 %v1703
    %1782 = vmatprep.subr.bf16.mxu0 0
    %1783 = vmatpush1.bf16.msra.mxu0 0
    %1784 = vmatprep.subr.bf16.mxu0 0
    %1785 = vmatpush1.bf16.msra.mxu0 0
    %1786 = vmatprep.subr.bf16.mxu0 0
    %1787 = vmatpush1.bf16.msra.mxu0 0
    %1788 = vmatprep.subr.bf16.mxu0 0
    %1789 = vmatpush1.bf16.msra.mxu0 0
    %1790 = vmatprep.subr.bf16.mxu0 0
    %1791 = vmatpush1.bf16.msra.mxu0 0
    %1792 = vmatprep.subr.bf16.mxu0 0
    %1793 = vmatpush1.bf16.msra.mxu0 0
    %1794 = vmatprep.subr.bf16.mxu0 0
    %1795 = vmatpush1.bf16.msra.mxu0 0
    %1796 = vmatprep.subr.bf16.mxu0 0
    %1797 = vmatpush1.bf16.msra.mxu0 0
    %1798 = vmatprep.subr.bf16.mxu0 0
    %1799 = vmatpush1.bf16.msra.mxu0 0
    %1800 = vmatprep.subr.bf16.mxu0 0
    %1801 = vmatpush1.bf16.msra.mxu0 0
    %1802 = vmatprep.subr.bf16.mxu0 0
    %1803 = vmatpush1.bf16.msra.mxu0 0
    %1804 = vmatprep.subr.bf16.mxu0 0
    %1805 = vmatpush1.bf16.msra.mxu0 0
    %1806 = vmatprep.subr.bf16.mxu0 0
    %1807 = vmatpush1.bf16.msra.mxu0 0
    %1808 = vmatprep.subr.bf16.mxu0 0
    %1809 = vmatpush1.bf16.msra.mxu0 0
    %1810 = vmatprep.mubr.bf16.mxu0 0
    %1811 = vmatmul.mubr.bf16.gmra.mrb[0].mxu0 %v1776
    %v1812 = vpop.f32.mrb[0].mxu0
    %v1813 = vadd.f32 0.0, %v1812
    %v1814 = vpop.f32.mrb[0].mxu0
    %v1815 = vpop.f32.mrb[0].mxu0
    %v1816 = vpop.f32.mrb[0].mxu0
    %1817 = vdwg.mxu0
    %v1818 = vadd.f32 %v1691, %v1813
    %v1819 = vxor.u32 %v1818, 2147483648
    %v1820 = vmul.f32 %v1819, 1.442695
    %v1821 = vpow.pop %v1820
    %v1822 = vadd.f32 %v1821, 1.0
    %v1823 = vrcp.pop %v1822
    %v1824 = vmul.f32 1.0, %v1823
    %v1825 = vtanh.pop %v1818
    %v1826 = vmul.f32 %v1824, %v1764
    %1828 = vrot.lane.b32.xlu0 %v1825, 64
    %v1829 = vpop.permute.xlu0 %1828
    %v1831 = vmul.f32 %v1824, %v1829
    %1833 = vrot.lane.b32.xlu0 %v1831, 32
    %v1834 = vpop.permute.xlu0 %1833
    %v1836 = vadd.f32 %v1826, %v1834
    %v1837 = vtanh.pop %v1836
    %1839 = vrot.lane.b32.xlu0 %v1837, 64
    %v1840 = vpop.permute.xlu0 %1839
    %v1842 = vmul.f32 %v1824, %v1840
    %v1843 = vpack.c.bf16 %v1842, %v1842
    %1845 = vrot.lane.b32.xlu0 %v1843, 32
    %v1846 = vpop.permute.xlu0 %1845
    %v1848 = vsel %vm984, %v1846, 0
    %1850 = vmatprep.subr.bf16.mxu0 0
    %1851 = vmatpush1.bf16.msra.mxu0 %v1702
    %1852 = vmatprep.subr.bf16.mxu0 0
    %1853 = vmatpush1.bf16.msra.mxu0 %v1703
    %1854 = vmatprep.subr.bf16.mxu0 0
    %1855 = vmatpush1.bf16.msra.mxu0 0
    %1856 = vmatprep.subr.bf16.mxu0 0
    %1857 = vmatpush1.bf16.msra.mxu0 0
    %1858 = vmatprep.subr.bf16.mxu0 0
    %1859 = vmatpush1.bf16.msra.mxu0 0
    %1860 = vmatprep.subr.bf16.mxu0 0
    %1861 = vmatpush1.bf16.msra.mxu0 0
    %1862 = vmatprep.subr.bf16.mxu0 0
    %1863 = vmatpush1.bf16.msra.mxu0 0
    %1864 = vmatprep.subr.bf16.mxu0 0
    %1865 = vmatpush1.bf16.msra.mxu0 0
    %1866 = vmatprep.subr.bf16.mxu0 0
    %1867 = vmatpush1.bf16.msra.mxu0 0
    %1868 = vmatprep.subr.bf16.mxu0 0
    %1869 = vmatpush1.bf16.msra.mxu0 0
    %1870 = vmatprep.subr.bf16.mxu0 0
    %1871 = vmatpush1.bf16.msra.mxu0 0
    %1872 = vmatprep.subr.bf16.mxu0 0
    %1873 = vmatpush1.bf16.msra.mxu0 0
    %1874 = vmatprep.subr.bf16.mxu0 0
    %1875 = vmatpush1.bf16.msra.mxu0 0
    %1876 = vmatprep.subr.bf16.mxu0 0
    %1877 = vmatpush1.bf16.msra.mxu0 0
    %1878 = vmatprep.subr.bf16.mxu0 0
    %1879 = vmatpush1.bf16.msra.mxu0 0
    %1880 = vmatprep.subr.bf16.mxu0 0
    %1881 = vmatpush1.bf16.msra.mxu0 0
    %1882 = vmatprep.mubr.bf16.mxu0 0
    %1883 = vmatmul.mubr.bf16.gmra.mrb[0].mxu0 %v1848
    %v1884 = vpop.f32.mrb[0].mxu0
    %v1885 = vadd.f32 0.0, %v1884
    %v1886 = vpop.f32.mrb[0].mxu0
    %v1887 = vpop.f32.mrb[0].mxu0
    %v1888 = vpop.f32.mrb[0].mxu0
    %1889 = vdwg.mxu0
    %v1890 = vadd.f32 %v1691, %v1885
    %v1891 = vxor.u32 %v1890, 2147483648
    %v1892 = vmul.f32 %v1891, 1.442695
    %v1893 = vpow.pop %v1892
    %v1894 = vadd.f32 %v1893, 1.0
    %v1895 = vrcp.pop %v1894
    %v1896 = vmul.f32 1.0, %v1895
    %v1897 = vtanh.pop %v1890
    %v1898 = vmul.f32 %v1896, %v1836
    %1900 = vrot.lane.b32.xlu0 %v1897, 64
    %v1901 = vpop.permute.xlu0 %1900
    %v1903 = vmul.f32 %v1896, %v1901
    %1905 = vrot.lane.b32.xlu0 %v1903, 32
    %v1906 = vpop.permute.xlu0 %1905
    %v1908 = vadd.f32 %v1898, %v1906
    %v1909 = vtanh.pop %v1908
    %1911 = vrot.lane.b32.xlu0 %v1909, 64
    %v1912 = vpop.permute.xlu0 %1911
    %v1914 = vmul.f32 %v1896, %v1912
    %v1915 = vpack.c.bf16 %v1914, %v1914
    %1917 = vrot.lane.b32.xlu0 %v1915, 32
    %v1918 = vpop.permute.xlu0 %1917
    %v1920 = vsel %vm984, %v1918, 0
    %1922 = vmatprep.subr.bf16.mxu0 0
    %1923 = vmatpush1.bf16.msra.mxu0 %v1702
    %1924 = vmatprep.subr.bf16.mxu0 0
    %1925 = vmatpush1.bf16.msra.mxu0 %v1703
    %1926 = vmatprep.subr.bf16.mxu0 0
    %1927 = vmatpush1.bf16.msra.mxu0 0
    %1928 = vmatprep.subr.bf16.mxu0 0
    %1929 = vmatpush1.bf16.msra.mxu0 0
    %1930 = vmatprep.subr.bf16.mxu0 0
    %1931 = vmatpush1.bf16.msra.mxu0 0
    %1932 = vmatprep.subr.bf16.mxu0 0
    %1933 = vmatpush1.bf16.msra.mxu0 0
    %1934 = vmatprep.subr.bf16.mxu0 0
    %1935 = vmatpush1.bf16.msra.mxu0 0
    %1936 = vmatprep.subr.bf16.mxu0 0
    %1937 = vmatpush1.bf16.msra.mxu0 0
    %1938 = vmatprep.subr.bf16.mxu0 0
    %1939 = vmatpush1.bf16.msra.mxu0 0
    %1940 = vmatprep.subr.bf16.mxu0 0
    %1941 = vmatpush1.bf16.msra.mxu0 0
    %1942 = vmatprep.subr.bf16.mxu0 0
    %1943 = vmatpush1.bf16.msra.mxu0 0
    %1944 = vmatprep.subr.bf16.mxu0 0
    %1945 = vmatpush1.bf16.msra.mxu0 0
    %1946 = vmatprep.subr.bf16.mxu0 0
    %1947 = vmatpush1.bf16.msra.mxu0 0
    %1948 = vmatprep.subr.bf16.mxu0 0
    %1949 = vmatpush1.bf16.msra.mxu0 0
    %1950 = vmatprep.subr.bf16.mxu0 0
    %1951 = vmatpush1.bf16.msra.mxu0 0
    %1952 = vmatprep.subr.bf16.mxu0 0
    %1953 = vmatpush1.bf16.msra.mxu0 0
    %1954 = vmatprep.mubr.bf16.mxu0 0
    %1955 = vmatmul.mubr.bf16.gmra.mrb[0].mxu0 %v1920
    %v1956 = vpop.f32.mrb[0].mxu0
    %v1957 = vadd.f32 0.0, %v1956
    %v1958 = vpop.f32.mrb[0].mxu0
    %v1959 = vpop.f32.mrb[0].mxu0
    %v1960 = vpop.f32.mrb[0].mxu0
    %1961 = vdwg.mxu0
    %v1962 = vadd.f32 %v1691, %v1957
    %v1963 = vxor.u32 %v1962, 2147483648
    %v1964 = vmul.f32 %v1963, 1.442695
    %v1965 = vpow.pop %v1964
    %v1966 = vadd.f32 %v1965, 1.0
    %v1967 = vrcp.pop %v1966
    %v1968 = vmul.f32 1.0, %v1967
    %v1969 = vtanh.pop %v1962
    %v1970 = vmul.f32 %v1968, %v1908
    %1972 = vrot.lane.b32.xlu0 %v1969, 64
    %v1973 = vpop.permute.xlu0 %1972
    %v1975 = vmul.f32 %v1968, %v1973
    %1977 = vrot.lane.b32.xlu0 %v1975, 32
    %v1978 = vpop.permute.xlu0 %1977
    %v1980 = vadd.f32 %v1970, %v1978
    %v1981 = vtanh.pop %v1980
    %1983 = vrot.lane.b32.xlu0 %v1981, 64
    %v1984 = vpop.permute.xlu0 %1983
    %v1986 = vmul.f32 %v1968, %v1984
    %v1987 = vpack.c.bf16 %v1986, %v1986
    %1989 = vrot.lane.b32.xlu0 %v1987, 32
    %v1990 = vpop.permute.xlu0 %1989
    %v1992 = vsel %vm984, %v1990, 0
    %1994 = vmatprep.subr.bf16.mxu0 0
    %1995 = vmatpush1.bf16.msra.mxu0 %v1702
    %1996 = vmatprep.subr.bf16.mxu0 0
    %1997 = vmatpush1.bf16.msra.mxu0 %v1703
    %1998 = vmatprep.subr.bf16.mxu0 0
    %1999 = vmatpush1.bf16.msra.mxu0 0
    %2000 = vmatprep.subr.bf16.mxu0 0
    %2001 = vmatpush1.bf16.msra.mxu0 0
    %2002 = vmatprep.subr.bf16.mxu0 0
    %2003 = vmatpush1.bf16.msra.mxu0 0
    %2004 = vmatprep.subr.bf16.mxu0 0
    %2005 = vmatpush1.bf16.msra.mxu0 0
    %2006 = vmatprep.subr.bf16.mxu0 0
    %2007 = vmatpush1.bf16.msra.mxu0 0
    %2008 = vmatprep.subr.bf16.mxu0 0
    %2009 = vmatpush1.bf16.msra.mxu0 0
    %2010 = vmatprep.subr.bf16.mxu0 0
    %2011 = vmatpush1.bf16.msra.mxu0 0
    %2012 = vmatprep.subr.bf16.mxu0 0
    %2013 = vmatpush1.bf16.msra.mxu0 0
    %2014 = vmatprep.subr.bf16.mxu0 0
    %2015 = vmatpush1.bf16.msra.mxu0 0
    %2016 = vmatprep.subr.bf16.mxu0 0
    %2017 = vmatpush1.bf16.msra.mxu0 0
    %2018 = vmatprep.subr.bf16.mxu0 0
    %2019 = vmatpush1.bf16.msra.mxu0 0
    %2020 = vmatprep.subr.bf16.mxu0 0
    %2021 = vmatpush1.bf16.msra.mxu0 0
    %2022 = vmatprep.subr.bf16.mxu0 0
    %2023 = vmatpush1.bf16.msra.mxu0 0
    %2024 = vmatprep.subr.bf16.mxu0 0
    %2025 = vmatpush1.bf16.msra.mxu0 0
    %2026 = vmatprep.mubr.bf16.mxu0 0
    %2027 = vmatmul.mubr.bf16.gmra.mrb[0].mxu0 %v1992
    %v2028 = vpop.f32.mrb[0].mxu0
    %v2029 = vadd.f32 0.0, %v2028
    %v2030 = vpop.f32.mrb[0].mxu0
    %v2031 = vpop.f32.mrb[0].mxu0
    %v2032 = vpop.f32.mrb[0].mxu0
    %2033 = vdwg.mxu0
    %v2034 = vadd.f32 %v1691, %v2029
    %v2035 = vxor.u32 %v2034, 2147483648
    %v2036 = vmul.f32 %v2035, 1.442695
    %v2037 = vpow.pop %v2036
    %v2038 = vadd.f32 %v2037, 1.0
    %v2039 = vrcp.pop %v2038
    %v2040 = vmul.f32 1.0, %v2039
    %v2041 = vtanh.pop %v2034
    %v2042 = vmul.f32 %v2040, %v1980
    %2044 = vrot.lane.b32.xlu0 %v2041, 64
    %v2045 = vpop.permute.xlu0 %2044
    %v2047 = vmul.f32 %v2040, %v2045
    %2049 = vrot.lane.b32.xlu0 %v2047, 32
    %v2050 = vpop.permute.xlu0 %2049
    %v2052 = vadd.f32 %v2042, %v2050
    %v2053 = vtanh.pop %v2052
    %2055 = vrot.lane.b32.xlu0 %v2053, 64
    %v2056 = vpop.permute.xlu0 %2055
    %v2058 = vmul.f32 %v2040, %v2056
    %v2059 = vpack.c.bf16 %v2058, %v2058
    %2061 = vrot.lane.b32.xlu0 %v2059, 32
    %v2062 = vpop.permute.xlu0 %2061
    %v2064 = vsel %vm984, %v2062, 0
    %2066 = vmatprep.subr.bf16.mxu0 0
    %2067 = vmatpush1.bf16.msra.mxu0 %v1702
    %2068 = vmatprep.subr.bf16.mxu0 0
    %2069 = vmatpush1.bf16.msra.mxu0 %v1703
    %2070 = vmatprep.subr.bf16.mxu0 0
    %2071 = vmatpush1.bf16.msra.mxu0 0
    %2072 = vmatprep.subr.bf16.mxu0 0
    %2073 = vmatpush1.bf16.msra.mxu0 0
    %2074 = vmatprep.subr.bf16.mxu0 0
    %2075 = vmatpush1.bf16.msra.mxu0 0
    %2076 = vmatprep.subr.bf16.mxu0 0
    %2077 = vmatpush1.bf16.msra.mxu0 0
    %2078 = vmatprep.subr.bf16.mxu0 0
    %2079 = vmatpush1.bf16.msra.mxu0 0
    %2080 = vmatprep.subr.bf16.mxu0 0
    %2081 = vmatpush1.bf16.msra.mxu0 0
    %2082 = vmatprep.subr.bf16.mxu0 0
    %2083 = vmatpush1.bf16.msra.mxu0 0
    %2084 = vmatprep.subr.bf16.mxu0 0
    %2085 = vmatpush1.bf16.msra.mxu0 0
    %2086 = vmatprep.subr.bf16.mxu0 0
    %2087 = vmatpush1.bf16.msra.mxu0 0
    %2088 = vmatprep.subr.bf16.mxu0 0
    %2089 = vmatpush1.bf16.msra.mxu0 0
    %2090 = vmatprep.subr.bf16.mxu0 0
    %2091 = vmatpush1.bf16.msra.mxu0 0
    %2092 = vmatprep.subr.bf16.mxu0 0
    %2093 = vmatpush1.bf16.msra.mxu0 0
    %2094 = vmatprep.subr.bf16.mxu0 0
    %2095 = vmatpush1.bf16.msra.mxu0 0
    %2096 = vmatprep.subr.bf16.mxu0 0
    %2097 = vmatpush1.bf16.msra.mxu0 0
    %2098 = vmatprep.mubr.bf16.mxu0 0
    %2099 = vmatmul.mubr.bf16.gmra.mrb[0].mxu0 %v2064
    %v2100 = vpop.f32.mrb[0].mxu0
    %v2101 = vadd.f32 0.0, %v2100
    %v2102 = vpop.f32.mrb[0].mxu0
    %v2103 = vpop.f32.mrb[0].mxu0
    %v2104 = vpop.f32.mrb[0].mxu0
    %2105 = vdwg.mxu0
    %v2106 = vadd.f32 %v1691, %v2101
    %v2107 = vxor.u32 %v2106, 2147483648
    %v2108 = vmul.f32 %v2107, 1.442695
    %v2109 = vpow.pop %v2108
    %v2110 = vadd.f32 %v2109, 1.0
    %v2111 = vrcp.pop %v2110
    %v2112 = vmul.f32 1.0, %v2111
    %v2113 = vtanh.pop %v2106
    %v2114 = vmul.f32 %v2112, %v2052
    %2116 = vrot.lane.b32.xlu0 %v2113, 64
    %v2117 = vpop.permute.xlu0 %2116
    %v2119 = vmul.f32 %v2112, %v2117
    %2121 = vrot.lane.b32.xlu0 %v2119, 32
    %v2122 = vpop.permute.xlu0 %2121
    %v2124 = vadd.f32 %v2114, %v2122
    %v2125 = vtanh.pop %v2124
    %2127 = vrot.lane.b32.xlu0 %v2125, 64
    %v2128 = vpop.permute.xlu0 %2127
    %v2130 = vmul.f32 %v2112, %v2128
    %v2131 = vpack.c.bf16 %v2130, %v2130
    %2133 = vrot.lane.b32.xlu0 %v2131, 32
    %v2134 = vpop.permute.xlu0 %2133
    %v2136 = vsel %vm984, %v2134, 0
    %2138 = vmatprep.subr.bf16.mxu0 0
    %2139 = vmatpush1.bf16.msra.mxu0 %v1702
    %2140 = vmatprep.subr.bf16.mxu0 0
    %2141 = vmatpush1.bf16.msra.mxu0 %v1703
    %2142 = vmatprep.subr.bf16.mxu0 0
    %2143 = vmatpush1.bf16.msra.mxu0 0
    %2144 = vmatprep.subr.bf16.mxu0 0
    %2145 = vmatpush1.bf16.msra.mxu0 0
    %2146 = vmatprep.subr.bf16.mxu0 0
    %2147 = vmatpush1.bf16.msra.mxu0 0
    %2148 = vmatprep.subr.bf16.mxu0 0
    %2149 = vmatpush1.bf16.msra.mxu0 0
    %2150 = vmatprep.subr.bf16.mxu0 0
    %2151 = vmatpush1.bf16.msra.mxu0 0
    %2152 = vmatprep.subr.bf16.mxu0 0
    %2153 = vmatpush1.bf16.msra.mxu0 0
    %2154 = vmatprep.subr.bf16.mxu0 0
    %2155 = vmatpush1.bf16.msra.mxu0 0
    %2156 = vmatprep.subr.bf16.mxu0 0
    %2157 = vmatpush1.bf16.msra.mxu0 0
    %2158 = vmatprep.subr.bf16.mxu0 0
    %2159 = vmatpush1.bf16.msra.mxu0 0
    %2160 = vmatprep.subr.bf16.mxu0 0
    %2161 = vmatpush1.bf16.msra.mxu0 0
    %2162 = vmatprep.subr.bf16.mxu0 0
    %2163 = vmatpush1.bf16.msra.mxu0 0
    %2164 = vmatprep.subr.bf16.mxu0 0
    %2165 = vmatpush1.bf16.msra.mxu0 0
    %2166 = vmatprep.subr.bf16.mxu0 0
    %2167 = vmatpush1.bf16.msra.mxu0 0
    %2168 = vmatprep.subr.bf16.mxu0 0
    %2169 = vmatpush1.bf16.msra.mxu0 0
    %2170 = vmatprep.mubr.bf16.mxu0 0
    %2171 = vmatmul.mubr.bf16.gmra.mrb[0].mxu0 %v2136
    %v2172 = vpop.f32.mrb[0].mxu0
    %v2173 = vadd.f32 0.0, %v2172
    %v2174 = vpop.f32.mrb[0].mxu0
    %v2175 = vpop.f32.mrb[0].mxu0
    %v2176 = vpop.f32.mrb[0].mxu0
    %2177 = vdwg.mxu0
    %v2178 = vadd.f32 %v1691, %v2173
    %v2179 = vxor.u32 %v2178, 2147483648
    %v2180 = vmul.f32 %v2179, 1.442695
    %v2181 = vpow.pop %v2180
    %v2182 = vadd.f32 %v2181, 1.0
    %v2183 = vrcp.pop %v2182
    %v2184 = vmul.f32 1.0, %v2183
    %v2185 = vtanh.pop %v2178
    %v2186 = vmul.f32 %v2184, %v2124
    %2188 = vrot.lane.b32.xlu0 %v2185, 64
    %v2189 = vpop.permute.xlu0 %2188
    %v2191 = vmul.f32 %v2184, %v2189
    %2193 = vrot.lane.b32.xlu0 %v2191, 32
    %v2194 = vpop.permute.xlu0 %2193
    %v2196 = vadd.f32 %v2186, %v2194
    %v2197 = vtanh.pop %v2196
    %2199 = vrot.lane.b32.xlu0 %v2197, 64
    %v2200 = vpop.permute.xlu0 %2199
    %v2202 = vmul.f32 %v2184, %v2200
    %v2203 = vpack.c.bf16 %v2202, %v2202
    %2205 = vrot.lane.b32.xlu0 %v2203, 32
    %v2206 = vpop.permute.xlu0 %2205
    %v2208 = vsel %vm984, %v2206, 0
    %2210 = vmatprep.subr.bf16.mxu0 0
    %2211 = vmatpush1.bf16.msra.mxu0 %v1702
    %2212 = vmatprep.subr.bf16.mxu0 0
    %2213 = vmatpush1.bf16.msra.mxu0 %v1703
    %2214 = vmatprep.subr.bf16.mxu0 0
    %2215 = vmatpush1.bf16.msra.mxu0 0
    %2216 = vmatprep.subr.bf16.mxu0 0
    %2217 = vmatpush1.bf16.msra.mxu0 0
    %2218 = vmatprep.subr.bf16.mxu0 0
    %2219 = vmatpush1.bf16.msra.mxu0 0
    %2220 = vmatprep.subr.bf16.mxu0 0
    %2221 = vmatpush1.bf16.msra.mxu0 0
    %2222 = vmatprep.subr.bf16.mxu0 0
    %2223 = vmatpush1.bf16.msra.mxu0 0
    %2224 = vmatprep.subr.bf16.mxu0 0
    %2225 = vmatpush1.bf16.msra.mxu0 0
    %2226 = vmatprep.subr.bf16.mxu0 0
    %2227 = vmatpush1.bf16.msra.mxu0 0
    %2228 = vmatprep.subr.bf16.mxu0 0
    %2229 = vmatpush1.bf16.msra.mxu0 0
    %2230 = vmatprep.subr.bf16.mxu0 0
    %2231 = vmatpush1.bf16.msra.mxu0 0
    %2232 = vmatprep.subr.bf16.mxu0 0
    %2233 = vmatpush1.bf16.msra.mxu0 0
    %2234 = vmatprep.subr.bf16.mxu0 0
    %2235 = vmatpush1.bf16.msra.mxu0 0
    %2236 = vmatprep.subr.bf16.mxu0 0
    %2237 = vmatpush1.bf16.msra.mxu0 0
    %2238 = vmatprep.subr.bf16.mxu0 0
    %2239 = vmatpush1.bf16.msra.mxu0 0
    %2240 = vmatprep.subr.bf16.mxu0 0
    %2241 = vmatpush1.bf16.msra.mxu0 0
    %2242 = vmatprep.mubr.bf16.mxu0 0
    %2243 = vmatmul.mubr.bf16.gmra.mrb[0].mxu0 %v2208
    %v2244 = vpop.f32.mrb[0].mxu0
    %v2245 = vadd.f32 0.0, %v2244
    %v2246 = vpop.f32.mrb[0].mxu0
    %v2247 = vpop.f32.mrb[0].mxu0
    %v2248 = vpop.f32.mrb[0].mxu0
    %2249 = vdwg.mxu0
    %v2250 = vadd.f32 %v1691, %v2245
    %v2251 = vxor.u32 %v2250, 2147483648
    %v2252 = vmul.f32 %v2251, 1.442695
    %v2253 = vpow.pop %v2252
    %v2254 = vadd.f32 %v2253, 1.0
    %v2255 = vrcp.pop %v2254
    %v2256 = vmul.f32 1.0, %v2255
    %v2257 = vtanh.pop %v2250
    %v2258 = vmul.f32 %v2256, %v2196
    %2260 = vrot.lane.b32.xlu0 %v2257, 64
    %v2261 = vpop.permute.xlu0 %2260
    %v2263 = vmul.f32 %v2256, %v2261
    %2265 = vrot.lane.b32.xlu0 %v2263, 32
    %v2266 = vpop.permute.xlu0 %2265
    %v2268 = vadd.f32 %v2258, %v2266
    %v2269 = vtanh.pop %v2268
    %2271 = vrot.lane.b32.xlu0 %v2269, 64
    %v2272 = vpop.permute.xlu0 %2271
    %v2274 = vmul.f32 %v2256, %v2272
    %v2276 = vrot.slane %v1842, 7
    %v2279 = vrot.slane %v1914, 6
    %v2282 = vrot.slane %v1986, 5
    %v2285 = vrot.slane %v2058, 4
    %v2288 = vrot.slane %v2130, 3
    %v2291 = vrot.slane %v2202, 2
    %v2294 = vrot.slane %v2274, 1
    %v2296 = vsel %vm864, %v1770, %v2276
    %v2297 = vsel %vm866, %v2296, %v2279
    %v2298 = vsel %vm868, %v2297, %v2282
    %v2299 = vsel %vm870, %v2298, %v2285
    %v2300 = vsel %vm872, %v2299, %v2288
    %v2301 = vsel %vm874, %v2300, %v2291
    %v2302 = vsel %vm876, %v2301, %v2294
    %v2303 = vld [vmem:[#allocation11] sm:$0xff]
    %v2304 = vld [vmem:[#allocation11 + $0x8] sm:$0xff]
    %v2305 = vld [vmem:[#allocation11 + $0x10] sm:$0xff]
    %v2306 = vld [vmem:[#allocation11 + $0x18] sm:$0xff]
    %v2307 = vld [vmem:[#allocation11 + $0x20] sm:$0xff]
    %v2308 = vld [vmem:[#allocation11 + $0x28] sm:$0xff]
    %v2309 = vld [vmem:[#allocation11 + $0x30] sm:$0xff]
    %v2310 = vld [vmem:[#allocation11 + $0x38] sm:$0xff]
    %v2311 = vld [vmem:[#allocation10] sm:$0xff]
    %v2312 = vld [vmem:[#allocation10 + $0x8] sm:$0xff]
    %v2313 = vld [vmem:[#allocation10 + $0x10] sm:$0xff]
    %v2314 = vld [vmem:[#allocation10 + $0x18] sm:$0xff]
    %v2315 = vld [vmem:[#allocation10 + $0x20] sm:$0xff]
    %v2316 = vld [vmem:[#allocation10 + $0x28] sm:$0xff]
    %v2317 = vld [vmem:[#allocation10 + $0x30] sm:$0xff]
    %v2318 = vld [vmem:[#allocation10 + $0x38] sm:$0xff]
    %v2319 = vld [vmem:[%s12] sm:$0x3]
    %v2321 = vlaneseq
    %v2322 = vshrl.u32 %v2321, 7
    %v2323 = vsub.s32 0, %v2322
    %v2324 = vrot.slane %v2319, %v2323
    %v2325 = vlaneseq
    %v2326 = vshrl.u32 %v2325, 7
    %v2327 = vsub.s32 1, %v2326
    %v2328 = vrot.slane %v2319, %v2327
    %2332 = vrot.lane.b32.xlu0 %v2302, 32
    %v2333 = vpop.permute.xlu0 %2332
    %v2334 = vsel %vm984, %v2333, 0
    %2336 = vmatprep.subr.mxu0 %v2312
    %2337 = vmatpush1.msra.mxu0 %v2311
    %2338 = vmatprep.subr.mxu0 %v2314
    %2339 = vmatpush1.msra.mxu0 %v2313
    %2340 = vmatprep.subr.mxu0 %v2316
    %2341 = vmatpush1.msra.mxu0 %v2315
    %2342 = vmatprep.subr.mxu0 %v2318
    %2343 = vmatpush1.msra.mxu0 %v2317
    %2344 = vmatprep.subr.mxu0 0.0
    %2345 = vmatpush1.msra.mxu0 0.0
    %2346 = vmatprep.subr.mxu0 0.0
    %2347 = vmatpush1.msra.mxu0 0.0
    %2348 = vmatprep.subr.mxu0 0.0
    %2349 = vmatpush1.msra.mxu0 0.0
    %2350 = vmatprep.subr.mxu0 0.0
    %2351 = vmatpush1.msra.mxu0 0.0
    %2352 = vmatprep.subr.mxu0 0.0
    %2353 = vmatpush1.msra.mxu0 0.0
    %2354 = vmatprep.subr.mxu0 0.0
    %2355 = vmatpush1.msra.mxu0 0.0
    %2356 = vmatprep.subr.mxu0 0.0
    %2357 = vmatpush1.msra.mxu0 0.0
    %2358 = vmatprep.subr.mxu0 0.0
    %2359 = vmatpush1.msra.mxu0 0.0
    %2360 = vmatprep.subr.mxu0 0.0
    %2361 = vmatpush1.msra.mxu0 0.0
    %2362 = vmatprep.subr.mxu0 0.0
    %2363 = vmatpush1.msra.mxu0 0.0
    %2364 = vmatprep.subr.mxu0 0.0
    %2365 = vmatpush1.msra.mxu0 0.0
    %2366 = vmatprep.subr.mxu0 0.0
    %2367 = vmatpush1.msra.mxu0 0.0
    %2368 = vmatprep.subr.mxu0 0.0
    %2369 = vmatpush1.msra.mxu0 0.0
    %2370 = vmatprep.subr.mxu0 0.0
    %2371 = vmatpush1.msra.mxu0 0.0
    %2372 = vmatprep.subr.mxu0 0.0
    %2373 = vmatpush1.msra.mxu0 0.0
    %2374 = vmatprep.subr.mxu0 0.0
    %2375 = vmatpush1.msra.mxu0 0.0
    %2376 = vmatprep.subr.mxu0 0.0
    %2377 = vmatpush1.msra.mxu0 0.0
    %2378 = vmatprep.subr.mxu0 0.0
    %2379 = vmatpush1.msra.mxu0 0.0
    %2380 = vmatprep.subr.mxu0 0.0
    %2381 = vmatpush1.msra.mxu0 0.0
    %2382 = vmatprep.subr.mxu0 0.0
    %2383 = vmatpush1.msra.mxu0 0.0
    %2384 = vmatprep.subr.mxu0 0.0
    %2385 = vmatpush1.msra.mxu0 0.0
    %2386 = vmatprep.subr.mxu0 0.0
    %2387 = vmatpush1.msra.mxu0 0.0
    %2388 = vmatprep.subr.mxu0 0.0
    %2389 = vmatpush1.msra.mxu0 0.0
    %2390 = vmatprep.subr.mxu0 0.0
    %2391 = vmatpush1.msra.mxu0 0.0
    %2392 = vmatprep.subr.mxu0 0.0
    %2393 = vmatpush1.msra.mxu0 0.0
    %2394 = vmatprep.subr.mxu0 0.0
    %2395 = vmatpush1.msra.mxu0 0.0
    %2396 = vmatprep.subr.mxu0 0.0
    %2397 = vmatpush1.msra.mxu0 0.0
    %2398 = vmatprep.subr.mxu0 0.0
    %2399 = vmatpush1.msra.mxu0 0.0
    %2400 = vmatprep.mubr.f32.mxu0 0.0
    %2401 = vmatmul.mubr.f32.gmra.mrb[0].mxu0 %v2334
    %v2402 = vpop.f32.mrb[0].mxu0
    %v2403 = vadd.f32 %v2324, %v2402
    %v2404 = vpop.f32.mrb[0].mxu0
    %v2405 = vadd.f32 %v2328, %v2404
    %2406 = vdwg.mxu0
    %v2415 = vunpack.c.l.b16 %v2303
    %v2416 = vunpack.c.h.b16 %v2303
    %v2417 = vunpack.c.l.b16 %v2304
    %v2418 = vunpack.c.h.b16 %v2304
    %v2419 = vunpack.c.l.b16 %v2305
    %v2420 = vunpack.c.h.b16 %v2305
    %v2421 = vunpack.c.l.b16 %v2306
    %v2422 = vunpack.c.h.b16 %v2306
    %v2423 = vunpack.c.l.b16 %v2307
    %v2424 = vunpack.c.h.b16 %v2307
    %v2425 = vunpack.c.l.b16 %v2308
    %v2426 = vunpack.c.h.b16 %v2308
    %v2427 = vunpack.c.l.b16 %v2309
    %v2428 = vunpack.c.h.b16 %v2309
    %v2429 = vunpack.c.l.b16 %v2310
    %v2430 = vunpack.c.h.b16 %v2310
    %v2431 = vpack.c.b16 %v2417, %v2415
    %v2432 = vpack.c.b16 %v2418, %v2416
    %v2433 = vpack.c.b16 %v2421, %v2419
    %v2434 = vpack.c.b16 %v2422, %v2420
    %v2435 = vpack.c.b16 %v2425, %v2423
    %v2436 = vpack.c.b16 %v2426, %v2424
    %v2437 = vpack.c.b16 %v2429, %v2427
    %v2438 = vpack.c.b16 %v2430, %v2428
    %2447 = vmatprep.subr.bf16.mxu0 %v2432
    %2448 = vmatpush1.bf16.msra.mxu0 %v2431
    %2449 = vmatprep.subr.bf16.mxu0 %v2434
    %2450 = vmatpush1.bf16.msra.mxu0 %v2433
    %2451 = vmatprep.subr.bf16.mxu0 %v2436
    %2452 = vmatpush1.bf16.msra.mxu0 %v2435
    %2453 = vmatprep.subr.bf16.mxu0 %v2438
    %2454 = vmatpush1.bf16.msra.mxu0 %v2437
    %2455 = vmatprep.subr.bf16.mxu0 0
    %2456 = vmatpush1.bf16.msra.mxu0 0
    %2457 = vmatprep.subr.bf16.mxu0 0
    %2458 = vmatpush1.bf16.msra.mxu0 0
    %2459 = vmatprep.subr.bf16.mxu0 0
    %2460 = vmatpush1.bf16.msra.mxu0 0
    %2461 = vmatprep.subr.bf16.mxu0 0
    %2462 = vmatpush1.bf16.msra.mxu0 0
    %2463 = vmatprep.subr.bf16.mxu0 0
    %2464 = vmatpush1.bf16.msra.mxu0 0
    %2465 = vmatprep.subr.bf16.mxu0 0
    %2466 = vmatpush1.bf16.msra.mxu0 0
    %2467 = vmatprep.subr.bf16.mxu0 0
    %2468 = vmatpush1.bf16.msra.mxu0 0
    %2469 = vmatprep.subr.bf16.mxu0 0
    %2470 = vmatpush1.bf16.msra.mxu0 0
    %2471 = vmatprep.subr.bf16.mxu0 0
    %2472 = vmatpush1.bf16.msra.mxu0 0
    %2473 = vmatprep.subr.bf16.mxu0 0
    %2474 = vmatpush1.bf16.msra.mxu0 0
    %2475 = vmatprep.subr.bf16.mxu0 0
    %2476 = vmatpush1.bf16.msra.mxu0 0
    %2477 = vmatprep.subr.bf16.mxu0 0
    %2478 = vmatpush1.bf16.msra.mxu0 0
    %2479 = vmatprep.mubr.bf16.mxu0 0
    %2480 = vmatmul.mubr.bf16.gmra.mrb[0].mxu0 %v219
    %v2481 = vpop.f32.mrb[0].mxu0
    %v2482 = vadd.f32 0.0, %v2481
    %v2483 = vpop.f32.mrb[0].mxu0
    %v2484 = vadd.f32 0.0, %v2483
    %v2485 = vpop.f32.mrb[0].mxu0
    %v2486 = vpop.f32.mrb[0].mxu0
    %2487 = vdwg.mxu0
    %v2488 = vadd.f32 %v2403, %v2482
    %v2489 = vadd.f32 %v2405, %v2484
    %v2490 = vxor.u32 %v2488, 2147483648
    %v2491 = vxor.u32 %v2489, 2147483648
    %v2492 = vmul.f32 %v2490, 1.442695
    %v2493 = vpow.pop %v2492
    %v2494 = vmul.f32 %v2491, 1.442695
    %v2495 = vpow.pop %v2494
    %v2496 = vadd.f32 %v2493, 1.0
    %v2497 = vadd.f32 %v2495, 1.0
    %v2498 = vrcp.pop %v2496
    %v2499 = vmul.f32 1.0, %v2498
    %v2500 = vrcp.pop %v2497
    %v2501 = vmul.f32 1.0, %v2500
    %v2502 = vtanh.pop %v2489
    %v2503 = vmul.f32 %v2499, 0.0
    %v2504 = vmul.f32 %v2499, %v2502
    %2506 = vrot.lane.b32.xlu0 %v2504, 64
    %v2507 = vpop.permute.xlu0 %2506
    %v2509 = vadd.f32 %v2503, %v2507
    %v2510 = vtanh.pop %v2509
    %v2511 = vmul.f32 %v2501, %v2510
    %v2512 = vpack.c.bf16 %v2511, %v2511
    %2514 = vrot.lane.b32.xlu0 %v2512, 64
    %v2515 = vpop.permute.xlu0 %2514
    %v2517 = vsel %vm217, %v2515, 0
    %2519 = vmatprep.subr.bf16.mxu0 %v2432
    %2520 = vmatpush1.bf16.msra.mxu0 %v2431
    %2521 = vmatprep.subr.bf16.mxu0 %v2434
    %2522 = vmatpush1.bf16.msra.mxu0 %v2433
    %2523 = vmatprep.subr.bf16.mxu0 %v2436
    %2524 = vmatpush1.bf16.msra.mxu0 %v2435
    %2525 = vmatprep.subr.bf16.mxu0 %v2438
    %2526 = vmatpush1.bf16.msra.mxu0 %v2437
    %2527 = vmatprep.subr.bf16.mxu0 0
    %2528 = vmatpush1.bf16.msra.mxu0 0
    %2529 = vmatprep.subr.bf16.mxu0 0
    %2530 = vmatpush1.bf16.msra.mxu0 0
    %2531 = vmatprep.subr.bf16.mxu0 0
    %2532 = vmatpush1.bf16.msra.mxu0 0
    %2533 = vmatprep.subr.bf16.mxu0 0
    %2534 = vmatpush1.bf16.msra.mxu0 0
    %2535 = vmatprep.subr.bf16.mxu0 0
    %2536 = vmatpush1.bf16.msra.mxu0 0
    %2537 = vmatprep.subr.bf16.mxu0 0
    %2538 = vmatpush1.bf16.msra.mxu0 0
    %2539 = vmatprep.subr.bf16.mxu0 0
    %2540 = vmatpush1.bf16.msra.mxu0 0
    %2541 = vmatprep.subr.bf16.mxu0 0
    %2542 = vmatpush1.bf16.msra.mxu0 0
    %2543 = vmatprep.subr.bf16.mxu0 0
    %2544 = vmatpush1.bf16.msra.mxu0 0
    %2545 = vmatprep.subr.bf16.mxu0 0
    %2546 = vmatpush1.bf16.msra.mxu0 0
    %2547 = vmatprep.subr.bf16.mxu0 0
    %2548 = vmatpush1.bf16.msra.mxu0 0
    %2549 = vmatprep.subr.bf16.mxu0 0
    %2550 = vmatpush1.bf16.msra.mxu0 0
    %2551 = vmatprep.mubr.bf16.mxu0 0
    %2552 = vmatmul.mubr.bf16.gmra.mrb[0].mxu0 %v2517
    %v2553 = vpop.f32.mrb[0].mxu0
    %v2554 = vadd.f32 0.0, %v2553
    %v2555 = vpop.f32.mrb[0].mxu0
    %v2556 = vadd.f32 0.0, %v2555
    %v2557 = vpop.f32.mrb[0].mxu0
    %v2558 = vpop.f32.mrb[0].mxu0
    %2559 = vdwg.mxu0
    %v2562 = vrot.slane %v2554, 7
    %v2563 = vrot.slane %v2556, 7
    %v2566 = vadd.f32 %v2403, %v2562
    %v2567 = vadd.f32 %v2405, %v2563
    %v2568 = vxor.u32 %v2566, 2147483648
    %v2569 = vxor.u32 %v2567, 2147483648
    %v2570 = vmul.f32 %v2568, 1.442695
    %v2571 = vpow.pop %v2570
    %v2572 = vmul.f32 %v2569, 1.442695
    %v2573 = vpow.pop %v2572
    %v2574 = vadd.f32 %v2571, 1.0
    %v2575 = vadd.f32 %v2573, 1.0
    %v2576 = vrcp.pop %v2574
    %v2577 = vmul.f32 1.0, %v2576
    %v2578 = vrcp.pop %v2575
    %v2579 = vmul.f32 1.0, %v2578
    %v2580 = vtanh.pop %v2567
    %v2582 = vrot.slane %v2509, 7
    %v2584 = vmul.f32 %v2577, %v2582
    %v2585 = vmul.f32 %v2577, %v2580
    %2587 = vrot.lane.b32.xlu0 %v2585, 64
    %v2588 = vpop.permute.xlu0 %2587
    %v2590 = vadd.f32 %v2584, %v2588
    %v2591 = vtanh.pop %v2590
    %v2592 = vmul.f32 %v2579, %v2591
    %v2593 = vpack.c.bf16 %v2592, %v2592
    %v2595 = vshrl.u32 %v2593, 16
    %2597 = vrot.lane.b32.xlu0 %v2595, 64
    %v2598 = vpop.permute.xlu0 %2597
    %v2600 = vsel %vm217, %v2598, 0
    %2602 = vmatprep.subr.bf16.mxu0 %v2432
    %2603 = vmatpush1.bf16.msra.mxu0 %v2431
    %2604 = vmatprep.subr.bf16.mxu0 %v2434
    %2605 = vmatpush1.bf16.msra.mxu0 %v2433
    %2606 = vmatprep.subr.bf16.mxu0 %v2436
    %2607 = vmatpush1.bf16.msra.mxu0 %v2435
    %2608 = vmatprep.subr.bf16.mxu0 %v2438
    %2609 = vmatpush1.bf16.msra.mxu0 %v2437
    %2610 = vmatprep.subr.bf16.mxu0 0
    %2611 = vmatpush1.bf16.msra.mxu0 0
    %2612 = vmatprep.subr.bf16.mxu0 0
    %2613 = vmatpush1.bf16.msra.mxu0 0
    %2614 = vmatprep.subr.bf16.mxu0 0
    %2615 = vmatpush1.bf16.msra.mxu0 0
    %2616 = vmatprep.subr.bf16.mxu0 0
    %2617 = vmatpush1.bf16.msra.mxu0 0
    %2618 = vmatprep.subr.bf16.mxu0 0
    %2619 = vmatpush1.bf16.msra.mxu0 0
    %2620 = vmatprep.subr.bf16.mxu0 0
    %2621 = vmatpush1.bf16.msra.mxu0 0
    %2622 = vmatprep.subr.bf16.mxu0 0
    %2623 = vmatpush1.bf16.msra.mxu0 0
    %2624 = vmatprep.subr.bf16.mxu0 0
    %2625 = vmatpush1.bf16.msra.mxu0 0
    %2626 = vmatprep.subr.bf16.mxu0 0
    %2627 = vmatpush1.bf16.msra.mxu0 0
    %2628 = vmatprep.subr.bf16.mxu0 0
    %2629 = vmatpush1.bf16.msra.mxu0 0
    %2630 = vmatprep.subr.bf16.mxu0 0
    %2631 = vmatpush1.bf16.msra.mxu0 0
    %2632 = vmatprep.subr.bf16.mxu0 0
    %2633 = vmatpush1.bf16.msra.mxu0 0
    %2634 = vmatprep.mubr.bf16.mxu0 0
    %2635 = vmatmul.mubr.bf16.gmra.mrb[0].mxu0 %v2600
    %v2636 = vpop.f32.mrb[0].mxu0
    %v2637 = vadd.f32 0.0, %v2636
    %v2638 = vpop.f32.mrb[0].mxu0
    %v2639 = vadd.f32 0.0, %v2638
    %v2640 = vpop.f32.mrb[0].mxu0
    %v2641 = vpop.f32.mrb[0].mxu0
    %2642 = vdwg.mxu0
    %v2645 = vrot.slane %v2637, 6
    %v2646 = vrot.slane %v2639, 6
    %v2649 = vadd.f32 %v2403, %v2645
    %v2650 = vadd.f32 %v2405, %v2646
    %v2651 = vxor.u32 %v2649, 2147483648
    %v2652 = vxor.u32 %v2650, 2147483648
    %v2653 = vmul.f32 %v2651, 1.442695
    %v2654 = vpow.pop %v2653
    %v2655 = vmul.f32 %v2652, 1.442695
    %v2656 = vpow.pop %v2655
    %v2657 = vadd.f32 %v2654, 1.0
    %v2658 = vadd.f32 %v2656, 1.0
    %v2659 = vrcp.pop %v2657
    %v2660 = vmul.f32 1.0, %v2659
    %v2661 = vrcp.pop %v2658
    %v2662 = vmul.f32 1.0, %v2661
    %v2663 = vtanh.pop %v2650
    %v2665 = vrot.slane %v2590, 7
    %v2667 = vmul.f32 %v2660, %v2665
    %v2668 = vmul.f32 %v2660, %v2663
    %2670 = vrot.lane.b32.xlu0 %v2668, 64
    %v2671 = vpop.permute.xlu0 %2670
    %v2673 = vadd.f32 %v2667, %v2671
    %v2674 = vtanh.pop %v2673
    %v2675 = vmul.f32 %v2662, %v2674
    %v2676 = vpack.c.bf16 %v2675, %v2675
    %v2678 = vrot.slane %v2676, 1
    %2679 = vrot.lane.b32.xlu0 %v2678, 64
    %v2680 = vpop.permute.xlu0 %2679
    %v2682 = vsel %vm217, %v2680, 0
    %2684 = vmatprep.subr.bf16.mxu0 %v2432
    %2685 = vmatpush1.bf16.msra.mxu0 %v2431
    %2686 = vmatprep.subr.bf16.mxu0 %v2434
    %2687 = vmatpush1.bf16.msra.mxu0 %v2433
    %2688 = vmatprep.subr.bf16.mxu0 %v2436
    %2689 = vmatpush1.bf16.msra.mxu0 %v2435
    %2690 = vmatprep.subr.bf16.mxu0 %v2438
    %2691 = vmatpush1.bf16.msra.mxu0 %v2437
    %2692 = vmatprep.subr.bf16.mxu0 0
    %2693 = vmatpush1.bf16.msra.mxu0 0
    %2694 = vmatprep.subr.bf16.mxu0 0
    %2695 = vmatpush1.bf16.msra.mxu0 0
    %2696 = vmatprep.subr.bf16.mxu0 0
    %2697 = vmatpush1.bf16.msra.mxu0 0
    %2698 = vmatprep.subr.bf16.mxu0 0
    %2699 = vmatpush1.bf16.msra.mxu0 0
    %2700 = vmatprep.subr.bf16.mxu0 0
    %2701 = vmatpush1.bf16.msra.mxu0 0
    %2702 = vmatprep.subr.bf16.mxu0 0
    %2703 = vmatpush1.bf16.msra.mxu0 0
    %2704 = vmatprep.subr.bf16.mxu0 0
    %2705 = vmatpush1.bf16.msra.mxu0 0
    %2706 = vmatprep.subr.bf16.mxu0 0
    %2707 = vmatpush1.bf16.msra.mxu0 0
    %2708 = vmatprep.subr.bf16.mxu0 0
    %2709 = vmatpush1.bf16.msra.mxu0 0
    %2710 = vmatprep.subr.bf16.mxu0 0
    %2711 = vmatpush1.bf16.msra.mxu0 0
    %2712 = vmatprep.subr.bf16.mxu0 0
    %2713 = vmatpush1.bf16.msra.mxu0 0
    %2714 = vmatprep.subr.bf16.mxu0 0
    %2715 = vmatpush1.bf16.msra.mxu0 0
    %2716 = vmatprep.mubr.bf16.mxu0 0
    %2717 = vmatmul.mubr.bf16.gmra.mrb[0].mxu0 %v2682
    %v2718 = vpop.f32.mrb[0].mxu0
    %v2719 = vadd.f32 0.0, %v2718
    %v2720 = vpop.f32.mrb[0].mxu0
    %v2721 = vadd.f32 0.0, %v2720
    %v2722 = vpop.f32.mrb[0].mxu0
    %v2723 = vpop.f32.mrb[0].mxu0
    %2724 = vdwg.mxu0
    %v2727 = vrot.slane %v2719, 5
    %v2728 = vrot.slane %v2721, 5
    %v2731 = vadd.f32 %v2403, %v2727
    %v2732 = vadd.f32 %v2405, %v2728
    %v2733 = vxor.u32 %v2731, 2147483648
    %v2734 = vxor.u32 %v2732, 2147483648
    %v2735 = vmul.f32 %v2733, 1.442695
    %v2736 = vpow.pop %v2735
    %v2737 = vmul.f32 %v2734, 1.442695
    %v2738 = vpow.pop %v2737
    %v2739 = vadd.f32 %v2736, 1.0
    %v2740 = vadd.f32 %v2738, 1.0
    %v2741 = vrcp.pop %v2739
    %v2742 = vmul.f32 1.0, %v2741
    %v2743 = vrcp.pop %v2740
    %v2744 = vmul.f32 1.0, %v2743
    %v2745 = vtanh.pop %v2732
    %v2747 = vrot.slane %v2673, 7
    %v2749 = vmul.f32 %v2742, %v2747
    %v2750 = vmul.f32 %v2742, %v2745
    %2752 = vrot.lane.b32.xlu0 %v2750, 64
    %v2753 = vpop.permute.xlu0 %2752
    %v2755 = vadd.f32 %v2749, %v2753
    %v2756 = vtanh.pop %v2755
    %v2757 = vmul.f32 %v2744, %v2756
    %v2758 = vpack.c.bf16 %v2757, %v2757
    %v2760 = vshrl.u32 %v2758, 16
    %v2762 = vrot.slane %v2760, 1
    %2763 = vrot.lane.b32.xlu0 %v2762, 64
    %v2764 = vpop.permute.xlu0 %2763
    %v2766 = vsel %vm217, %v2764, 0
    %2768 = vmatprep.subr.bf16.mxu0 %v2432
    %2769 = vmatpush1.bf16.msra.mxu0 %v2431
    %2770 = vmatprep.subr.bf16.mxu0 %v2434
    %2771 = vmatpush1.bf16.msra.mxu0 %v2433
    %2772 = vmatprep.subr.bf16.mxu0 %v2436
    %2773 = vmatpush1.bf16.msra.mxu0 %v2435
    %2774 = vmatprep.subr.bf16.mxu0 %v2438
    %2775 = vmatpush1.bf16.msra.mxu0 %v2437
    %2776 = vmatprep.subr.bf16.mxu0 0
    %2777 = vmatpush1.bf16.msra.mxu0 0
    %2778 = vmatprep.subr.bf16.mxu0 0
    %2779 = vmatpush1.bf16.msra.mxu0 0
    %2780 = vmatprep.subr.bf16.mxu0 0
    %2781 = vmatpush1.bf16.msra.mxu0 0
    %2782 = vmatprep.subr.bf16.mxu0 0
    %2783 = vmatpush1.bf16.msra.mxu0 0
    %2784 = vmatprep.subr.bf16.mxu0 0
    %2785 = vmatpush1.bf16.msra.mxu0 0
    %2786 = vmatprep.subr.bf16.mxu0 0
    %2787 = vmatpush1.bf16.msra.mxu0 0
    %2788 = vmatprep.subr.bf16.mxu0 0
    %2789 = vmatpush1.bf16.msra.mxu0 0
    %2790 = vmatprep.subr.bf16.mxu0 0
    %2791 = vmatpush1.bf16.msra.mxu0 0
    %2792 = vmatprep.subr.bf16.mxu0 0
    %2793 = vmatpush1.bf16.msra.mxu0 0
    %2794 = vmatprep.subr.bf16.mxu0 0
    %2795 = vmatpush1.bf16.msra.mxu0 0
    %2796 = vmatprep.subr.bf16.mxu0 0
    %2797 = vmatpush1.bf16.msra.mxu0 0
    %2798 = vmatprep.subr.bf16.mxu0 0
    %2799 = vmatpush1.bf16.msra.mxu0 0
    %2800 = vmatprep.mubr.bf16.mxu0 0
    %2801 = vmatmul.mubr.bf16.gmra.mrb[0].mxu0 %v2766
    %v2802 = vpop.f32.mrb[0].mxu0
    %v2803 = vadd.f32 0.0, %v2802
    %v2804 = vpop.f32.mrb[0].mxu0
    %v2805 = vadd.f32 0.0, %v2804
    %v2806 = vpop.f32.mrb[0].mxu0
    %v2807 = vpop.f32.mrb[0].mxu0
    %2808 = vdwg.mxu0
    %v2811 = vrot.slane %v2803, 4
    %v2812 = vrot.slane %v2805, 4
    %v2815 = vadd.f32 %v2403, %v2811
    %v2816 = vadd.f32 %v2405, %v2812
    %v2817 = vxor.u32 %v2815, 2147483648
    %v2818 = vxor.u32 %v2816, 2147483648
    %v2819 = vmul.f32 %v2817, 1.442695
    %v2820 = vpow.pop %v2819
    %v2821 = vmul.f32 %v2818, 1.442695
    %v2822 = vpow.pop %v2821
    %v2823 = vadd.f32 %v2820, 1.0
    %v2824 = vadd.f32 %v2822, 1.0
    %v2825 = vrcp.pop %v2823
    %v2826 = vmul.f32 1.0, %v2825
    %v2827 = vrcp.pop %v2824
    %v2828 = vmul.f32 1.0, %v2827
    %v2829 = vtanh.pop %v2816
    %v2831 = vrot.slane %v2755, 7
    %v2833 = vmul.f32 %v2826, %v2831
    %v2834 = vmul.f32 %v2826, %v2829
    %2836 = vrot.lane.b32.xlu0 %v2834, 64
    %v2837 = vpop.permute.xlu0 %2836
    %v2839 = vadd.f32 %v2833, %v2837
    %v2840 = vtanh.pop %v2839
    %v2841 = vmul.f32 %v2828, %v2840
    %v2842 = vpack.c.bf16 %v2841, %v2841
    %v2844 = vrot.slane %v2842, 2
    %2845 = vrot.lane.b32.xlu0 %v2844, 64
    %v2846 = vpop.permute.xlu0 %2845
    %v2848 = vsel %vm217, %v2846, 0
    %2850 = vmatprep.subr.bf16.mxu0 %v2432
    %2851 = vmatpush1.bf16.msra.mxu0 %v2431
    %2852 = vmatprep.subr.bf16.mxu0 %v2434
    %2853 = vmatpush1.bf16.msra.mxu0 %v2433
    %2854 = vmatprep.subr.bf16.mxu0 %v2436
    %2855 = vmatpush1.bf16.msra.mxu0 %v2435
    %2856 = vmatprep.subr.bf16.mxu0 %v2438
    %2857 = vmatpush1.bf16.msra.mxu0 %v2437
    %2858 = vmatprep.subr.bf16.mxu0 0
    %2859 = vmatpush1.bf16.msra.mxu0 0
    %2860 = vmatprep.subr.bf16.mxu0 0
    %2861 = vmatpush1.bf16.msra.mxu0 0
    %2862 = vmatprep.subr.bf16.mxu0 0
    %2863 = vmatpush1.bf16.msra.mxu0 0
    %2864 = vmatprep.subr.bf16.mxu0 0
    %2865 = vmatpush1.bf16.msra.mxu0 0
    %2866 = vmatprep.subr.bf16.mxu0 0
    %2867 = vmatpush1.bf16.msra.mxu0 0
    %2868 = vmatprep.subr.bf16.mxu0 0
    %2869 = vmatpush1.bf16.msra.mxu0 0
    %2870 = vmatprep.subr.bf16.mxu0 0
    %2871 = vmatpush1.bf16.msra.mxu0 0
    %2872 = vmatprep.subr.bf16.mxu0 0
    %2873 = vmatpush1.bf16.msra.mxu0 0
    %2874 = vmatprep.subr.bf16.mxu0 0
    %2875 = vmatpush1.bf16.msra.mxu0 0
    %2876 = vmatprep.subr.bf16.mxu0 0
    %2877 = vmatpush1.bf16.msra.mxu0 0
    %2878 = vmatprep.subr.bf16.mxu0 0
    %2879 = vmatpush1.bf16.msra.mxu0 0
    %2880 = vmatprep.subr.bf16.mxu0 0
    %2881 = vmatpush1.bf16.msra.mxu0 0
    %2882 = vmatprep.mubr.bf16.mxu0 0
    %2883 = vmatmul.mubr.bf16.gmra.mrb[0].mxu0 %v2848
    %v2884 = vpop.f32.mrb[0].mxu0
    %v2885 = vadd.f32 0.0, %v2884
    %v2886 = vpop.f32.mrb[0].mxu0
    %v2887 = vadd.f32 0.0, %v2886
    %v2888 = vpop.f32.mrb[0].mxu0
    %v2889 = vpop.f32.mrb[0].mxu0
    %2890 = vdwg.mxu0
    %v2893 = vrot.slane %v2885, 3
    %v2894 = vrot.slane %v2887, 3
    %v2897 = vadd.f32 %v2403, %v2893
    %v2898 = vadd.f32 %v2405, %v2894
    %v2899 = vxor.u32 %v2897, 2147483648
    %v2900 = vxor.u32 %v2898, 2147483648
    %v2901 = vmul.f32 %v2899, 1.442695
    %v2902 = vpow.pop %v2901
    %v2903 = vmul.f32 %v2900, 1.442695
    %v2904 = vpow.pop %v2903
    %v2905 = vadd.f32 %v2902, 1.0
    %v2906 = vadd.f32 %v2904, 1.0
    %v2907 = vrcp.pop %v2905
    %v2908 = vmul.f32 1.0, %v2907
    %v2909 = vrcp.pop %v2906
    %v2910 = vmul.f32 1.0, %v2909
    %v2911 = vtanh.pop %v2898
    %v2913 = vrot.slane %v2839, 7
    %v2915 = vmul.f32 %v2908, %v2913
    %v2916 = vmul.f32 %v2908, %v2911
    %2918 = vrot.lane.b32.xlu0 %v2916, 64
    %v2919 = vpop.permute.xlu0 %2918
    %v2921 = vadd.f32 %v2915, %v2919
    %v2922 = vtanh.pop %v2921
    %v2923 = vmul.f32 %v2910, %v2922
    %v2924 = vpack.c.bf16 %v2923, %v2923
    %v2926 = vshrl.u32 %v2924, 16
    %v2928 = vrot.slane %v2926, 2
    %2929 = vrot.lane.b32.xlu0 %v2928, 64
    %v2930 = vpop.permute.xlu0 %2929
    %v2932 = vsel %vm217, %v2930, 0
    %2934 = vmatprep.subr.bf16.mxu0 %v2432
    %2935 = vmatpush1.bf16.msra.mxu0 %v2431
    %2936 = vmatprep.subr.bf16.mxu0 %v2434
    %2937 = vmatpush1.bf16.msra.mxu0 %v2433
    %2938 = vmatprep.subr.bf16.mxu0 %v2436
    %2939 = vmatpush1.bf16.msra.mxu0 %v2435
    %2940 = vmatprep.subr.bf16.mxu0 %v2438
    %2941 = vmatpush1.bf16.msra.mxu0 %v2437
    %2942 = vmatprep.subr.bf16.mxu0 0
    %2943 = vmatpush1.bf16.msra.mxu0 0
    %2944 = vmatprep.subr.bf16.mxu0 0
    %2945 = vmatpush1.bf16.msra.mxu0 0
    %2946 = vmatprep.subr.bf16.mxu0 0
    %2947 = vmatpush1.bf16.msra.mxu0 0
    %2948 = vmatprep.subr.bf16.mxu0 0
    %2949 = vmatpush1.bf16.msra.mxu0 0
    %2950 = vmatprep.subr.bf16.mxu0 0
    %2951 = vmatpush1.bf16.msra.mxu0 0
    %2952 = vmatprep.subr.bf16.mxu0 0
    %2953 = vmatpush1.bf16.msra.mxu0 0
    %2954 = vmatprep.subr.bf16.mxu0 0
    %2955 = vmatpush1.bf16.msra.mxu0 0
    %2956 = vmatprep.subr.bf16.mxu0 0
    %2957 = vmatpush1.bf16.msra.mxu0 0
    %2958 = vmatprep.subr.bf16.mxu0 0
    %2959 = vmatpush1.bf16.msra.mxu0 0
    %2960 = vmatprep.subr.bf16.mxu0 0
    %2961 = vmatpush1.bf16.msra.mxu0 0
    %2962 = vmatprep.subr.bf16.mxu0 0
    %2963 = vmatpush1.bf16.msra.mxu0 0
    %2964 = vmatprep.subr.bf16.mxu0 0
    %2965 = vmatpush1.bf16.msra.mxu0 0
    %2966 = vmatprep.mubr.bf16.mxu0 0
    %2967 = vmatmul.mubr.bf16.gmra.mrb[0].mxu0 %v2932
    %v2968 = vpop.f32.mrb[0].mxu0
    %v2969 = vadd.f32 0.0, %v2968
    %v2970 = vpop.f32.mrb[0].mxu0
    %v2971 = vadd.f32 0.0, %v2970
    %v2972 = vpop.f32.mrb[0].mxu0
    %v2973 = vpop.f32.mrb[0].mxu0
    %2974 = vdwg.mxu0
    %v2977 = vrot.slane %v2969, 2
    %v2978 = vrot.slane %v2971, 2
    %v2981 = vadd.f32 %v2403, %v2977
    %v2982 = vadd.f32 %v2405, %v2978
    %v2983 = vxor.u32 %v2981, 2147483648
    %v2984 = vxor.u32 %v2982, 2147483648
    %v2985 = vmul.f32 %v2983, 1.442695
    %v2986 = vpow.pop %v2985
    %v2987 = vmul.f32 %v2984, 1.442695
    %v2988 = vpow.pop %v2987
    %v2989 = vadd.f32 %v2986, 1.0
    %v2990 = vadd.f32 %v2988, 1.0
    %v2991 = vrcp.pop %v2989
    %v2992 = vmul.f32 1.0, %v2991
    %v2993 = vrcp.pop %v2990
    %v2994 = vmul.f32 1.0, %v2993
    %v2995 = vtanh.pop %v2982
    %v2997 = vrot.slane %v2921, 7
    %v2999 = vmul.f32 %v2992, %v2997
    %v3000 = vmul.f32 %v2992, %v2995
    %3002 = vrot.lane.b32.xlu0 %v3000, 64
    %v3003 = vpop.permute.xlu0 %3002
    %v3005 = vadd.f32 %v2999, %v3003
    %v3006 = vtanh.pop %v3005
    %v3007 = vmul.f32 %v2994, %v3006
    %v3008 = vpack.c.bf16 %v3007, %v3007
    %v3010 = vrot.slane %v3008, 3
    %3011 = vrot.lane.b32.xlu0 %v3010, 64
    %v3012 = vpop.permute.xlu0 %3011
    %v3014 = vsel %vm217, %v3012, 0
    %3016 = vmatprep.subr.bf16.mxu0 %v2432
    %3017 = vmatpush1.bf16.msra.mxu0 %v2431
    %3018 = vmatprep.subr.bf16.mxu0 %v2434
    %3019 = vmatpush1.bf16.msra.mxu0 %v2433
    %3020 = vmatprep.subr.bf16.mxu0 %v2436
    %3021 = vmatpush1.bf16.msra.mxu0 %v2435
    %3022 = vmatprep.subr.bf16.mxu0 %v2438
    %3023 = vmatpush1.bf16.msra.mxu0 %v2437
    %3024 = vmatprep.subr.bf16.mxu0 0
    %3025 = vmatpush1.bf16.msra.mxu0 0
    %3026 = vmatprep.subr.bf16.mxu0 0
    %3027 = vmatpush1.bf16.msra.mxu0 0
    %3028 = vmatprep.subr.bf16.mxu0 0
    %3029 = vmatpush1.bf16.msra.mxu0 0
    %3030 = vmatprep.subr.bf16.mxu0 0
    %3031 = vmatpush1.bf16.msra.mxu0 0
    %3032 = vmatprep.subr.bf16.mxu0 0
    %3033 = vmatpush1.bf16.msra.mxu0 0
    %3034 = vmatprep.subr.bf16.mxu0 0
    %3035 = vmatpush1.bf16.msra.mxu0 0
    %3036 = vmatprep.subr.bf16.mxu0 0
    %3037 = vmatpush1.bf16.msra.mxu0 0
    %3038 = vmatprep.subr.bf16.mxu0 0
    %3039 = vmatpush1.bf16.msra.mxu0 0
    %3040 = vmatprep.subr.bf16.mxu0 0
    %3041 = vmatpush1.bf16.msra.mxu0 0
    %3042 = vmatprep.subr.bf16.mxu0 0
    %3043 = vmatpush1.bf16.msra.mxu0 0
    %3044 = vmatprep.subr.bf16.mxu0 0
    %3045 = vmatpush1.bf16.msra.mxu0 0
    %3046 = vmatprep.subr.bf16.mxu0 0
    %3047 = vmatpush1.bf16.msra.mxu0 0
    %3048 = vmatprep.mubr.bf16.mxu0 0
    %3049 = vmatmul.mubr.bf16.gmra.mrb[0].mxu0 %v3014
    %v3050 = vpop.f32.mrb[0].mxu0
    %v3051 = vadd.f32 0.0, %v3050
    %v3052 = vpop.f32.mrb[0].mxu0
    %v3053 = vadd.f32 0.0, %v3052
    %v3054 = vpop.f32.mrb[0].mxu0
    %v3055 = vpop.f32.mrb[0].mxu0
    %3056 = vdwg.mxu0
    %v3059 = vrot.slane %v3051, 1
    %v3060 = vrot.slane %v3053, 1
    %v3063 = vadd.f32 %v2403, %v3059
    %v3064 = vadd.f32 %v2405, %v3060
    %v3065 = vxor.u32 %v3063, 2147483648
    %v3066 = vxor.u32 %v3064, 2147483648
    %v3067 = vmul.f32 %v3065, 1.442695
    %v3068 = vpow.pop %v3067
    %v3069 = vmul.f32 %v3066, 1.442695
    %v3070 = vpow.pop %v3069
    %v3071 = vadd.f32 %v3068, 1.0
    %v3072 = vadd.f32 %v3070, 1.0
    %v3073 = vrcp.pop %v3071
    %v3074 = vmul.f32 1.0, %v3073
    %v3075 = vrcp.pop %v3072
    %v3076 = vmul.f32 1.0, %v3075
    %v3077 = vtanh.pop %v3064
    %v3079 = vrot.slane %v3005, 7
    %v3081 = vmul.f32 %v3074, %v3079
    %v3082 = vmul.f32 %v3074, %v3077
    %3084 = vrot.lane.b32.xlu0 %v3082, 64
    %v3085 = vpop.permute.xlu0 %3084
    %v3087 = vadd.f32 %v3081, %v3085
    %v3088 = vtanh.pop %v3087
    %v3089 = vmul.f32 %v3076, %v3088
    %v3090 = vsel %vm864, %v2511, %v2592
    %v3091 = vsel %vm866, %v3090, %v2675
    %v3092 = vsel %vm868, %v3091, %v2757
    %v3093 = vsel %vm870, %v3092, %v2841
    %v3094 = vsel %vm872, %v3093, %v2923
    %v3095 = vsel %vm874, %v3094, %v3007
    %v3096 = vsel %vm876, %v3095, %v3089
    %v3097 = vld [vmem:[%s13] sm:$0x1]
    %v3099 = vlaneseq
    %v3100 = vshrl.u32 %v3099, 7
    %v3101 = vsub.s32 0, %v3100
    %v3102 = vrot.slane %v3097, %v3101
    %3103 = vrot.lane.b32.xlu0 %v3102, 64
    %v3104 = vpop.permute.xlu0 %3103
    %v3106 = vmul.f32 %v3096, %v3104
    %3108 = vrot.lane.b32.xlu0 %v3106, 64
    %v3109 = vpop.permute.xlu0 %3108
    %v3111 = vsel %vm217, %v3109, 0.0
    %3112 = vadd.xlane.f32.xlu0 %v3111
    %v3113 = vpop.xlane.xlu0 %3112
    %v3114 = vld [vmem:[#allocation2] sm:$0x1]
    %v3116 = vlaneseq
    %v3117 = vshrl.u32 %v3116, 7
    %v3118 = vsub.s32 0, %v3117
    %v3119 = vrot.slane %v3114, %v3118
    %v3121 = vadd.f32 %v3113, %v3119
    %vm3122 = vcmask 7168
    %3123 = vst.msk [vmem:[%s15] sm:$0xff] %vm3122, %v3121
    // Predicated region
    $region86: #{tpu_custom_call.1} parent=1 // pred_check
      _
    $region87: #{tpu_custom_call.1} parent=1 // pred_check_branch
      %3125 = sbr.rel (0) target = $region89
    $region88: #{tpu_custom_call.1} parent=1 // pred_region
      _
    $region89: #{tpu_custom_call.1} parent=1 // pred_fallthru
      _
    // Predicated region
    $region90: #{tpu_custom_call.1} parent=1 // pred_check
      _
    $region91: #{tpu_custom_call.1} parent=1 // pred_check_branch
      %3127 = sbr.rel (0) target = $region93
    $region92: #{tpu_custom_call.1} parent=1 // pred_region
      _
    $region93: #{tpu_custom_call.1} parent=1 // pred_fallthru
      _
    %3128 = vsyncpa [#allocation4], 1
    %3129 = vsyncpa [#allocation6], 1
    %3130 = vsyncpa [#allocation9], 1
    %3131 = vsyncpa [#allocation12], 1

</llo_original>
